<compile_context>
chip_gen: v5e
topology: v5e:2x2
jax: 0.10.0
libtpu: 0.0.40
codegen_flags: <defaults>
</compile_context>

<pallas_src>
import jax
import jax.numpy as jnp
from jax import lax
from jax.experimental import pallas as pl
from jax.experimental.pallas import tpu as pltpu

BN_EPS = 1e-5

# Matmul input dtype.  Kept f32 to match PyTorch f32 numerics at tiny channel
# counts; for realistic Cin/Cout on v6e/v7x set this to jnp.bfloat16
# (accumulation stays f32 via preferred_element_type).
MATMUL_DTYPE = jnp.float32


# ----------------------------------------------------------------------------
# Kernels
# ----------------------------------------------------------------------------
def _conv3x3_and_stats(x, w_ref, o_ref, stats_ref, xpad_ref, patch_ref):
    """Shared body: 3x3 conv (pad=1) on one NHWC image + partial BN statistics.

    x:         (H, W, Cin)    activation value (already BN+ReLU'd when fused)
    w_ref:     (9*Cin, Cout)  3x3 taps flattened as (kh, kw, cin) along K
    o_ref:     (1, H, W, Cout)   pre-BN conv output for this image
    stats_ref: (1, 2, Cout)      per-image [sum, sum-of-squares] over H*W
    xpad_ref:  VMEM (H+2, W+2, Cin)  zero-padded image scratch
    patch_ref: VMEM (H*W, 9*Cin)     im2col slab scratch
    """
    H, W, Cin = x.shape
    Cout = o_ref.shape[-1]

    # In-kernel zero padding (no wrapper-side jnp.pad HBM bounce).  The scratch
    # is fully rewritten each grid step, so this is safe under "parallel".
    xpad_ref[...] = jnp.zeros_like(xpad_ref)
    xpad_ref[1:H + 1, 1:W + 1, :] = x

    # Build the im2col slab once, then a single fat-K MXU matmul (K = 9*Cin)
    # instead of 9 skinny per-tap matmuls.
    for kh in range(3):
        for kw in range(3):
            t = kh * 3 + kw
            patch_ref[:, t * Cin:(t + 1) * Cin] = (
                xpad_ref[kh:kh + H, kw:kw + W, :].reshape(H * W, Cin))

    acc = jnp.dot(patch_ref[...].astype(w_ref.dtype), w_ref[...],
                  preferred_element_type=jnp.float32)             # (H*W, Cout)

    # NOTE: the Conv2d bias is intentionally NOT added — train-mode BN
    # subtracts the per-channel batch mean, which cancels it exactly.
    o_ref[...] = acc.reshape(1, H, W, Cout)

    # Per-image partial BN statistics (folded across the batch in the wrapper,
    # so the grid axis stays "parallel" — no cross-step accumulator).
    stats_ref[...] = jnp.concatenate(
        [jnp.sum(acc, axis=0, keepdims=True),
         jnp.sum(acc * acc, axis=0, keepdims=True)],
        axis=0).reshape(1, 2, Cout)


def conv_first_kernel(x_ref, w_ref, o_ref, stats_ref, xpad_ref, patch_ref):
    """Stage 0: conv + stats on the raw input (no preceding BN/ReLU)."""
    _conv3x3_and_stats(x_ref[0], w_ref, o_ref, stats_ref, xpad_ref, patch_ref)


def bn_relu_conv_kernel(y_ref, scale_ref, shift_ref, w_ref,
                        o_ref, stats_ref, xpad_ref, patch_ref):
    """Fused stage boundary: BN+ReLU of the PREVIOUS stage's pre-BN conv output
    (y*scale + shift, ReLU), then THIS stage's conv + stats — one HBM read and
    one HBM write of the activation per stage boundary."""
    a = jnp.maximum(y_ref[0] * scale_ref[...] + shift_ref[...], 0.0)
    _conv3x3_and_stats(a, w_ref, o_ref, stats_ref, xpad_ref, patch_ref)


def bn_relu_kernel(y_ref, scale_ref, shift_ref, o_ref):
    """Final BN+ReLU: y*scale + shift, ReLU; in place via input_output_aliases."""
    n, H, W, C = y_ref.shape
    y = y_ref[...].reshape(H * W, C)
    o_ref[...] = jnp.maximum(y * scale_ref[...] + shift_ref[...],
                             0.0).reshape(n, H, W, C)


# ----------------------------------------------------------------------------
# Wrapper
# ----------------------------------------------------------------------------
def _run_conv_stage(kernel, inputs, in_specs, N, H, W, Cin, Cout):
    """One pipelined pallas_call over the batch: conv (+ fused prev BN/ReLU)."""
    # TODO(synk): for very large H*W, additionally tile H with a manual halo
    # DMA (memory_space=pl.ANY + pltpu.make_async_copy) instead of whole-image
    # blocks.
    return pl.pallas_call(
        kernel,
        out_shape=(
            jax.ShapeDtypeStruct((N, H, W, Cout), jnp.float32),
            jax.ShapeDtypeStruct((N, 2, Cout), jnp.float32),
        ),
        grid=(N,),
        in_specs=in_specs,
        out_specs=(
            pl.BlockSpec((1, H, W, Cout), lambda n: (n, 0, 0, 0)),
            pl.BlockSpec((1, 2, Cout), lambda n: (n, 0, 0)),
        ),
        scratch_shapes=[
            pltpu.VMEM((H + 2, W + 2, Cin), jnp.float32),
            pltpu.VMEM((H * W, 9 * Cin), jnp.float32),
        ],
        compiler_params=pltpu.CompilerParams(
            dimension_semantics=("parallel",)),   # megacore sharding on v7x
    )(*inputs)


def _fold_bn_stats(part, gamma, beta, count):
    """Fold per-image partial stats into per-channel (scale, shift) — tiny XLA ops."""
    s = jnp.sum(part[:, 0, :], axis=0)
    ss = jnp.sum(part[:, 1, :], axis=0)
    mean = s / count
    var = jnp.maximum(ss / count - mean * mean, 0.0)   # biased var, as PyTorch fwd
    inv_std = lax.rsqrt(var + BN_EPS)
    scale = (gamma * inv_std).reshape(1, -1).astype(jnp.float32)
    shift = (beta - mean * gamma * inv_std).reshape(1, -1).astype(jnp.float32)
    return scale, shift


@jax.jit
def conv_block_forward(x_nchw, params):
    """ConvBlock forward: NCHW in, NCHW out (matches the PyTorch module)."""
    x = jnp.transpose(x_nchw, (0, 2, 3, 1)).astype(jnp.float32)   # NCHW -> NHWC
    N, H, W, _ = x.shape
    cnt = float(N * H * W)

    prev_conv = None
    scale = shift = None
    for idx, (w, _b, gamma, beta) in enumerate(params):   # conv bias folded by BN
        Cin, Cout = w.shape[2], w.shape[3]
        # (kh, kw, cin, cout) row-major -> K index = (kh*3 + kw)*Cin + cin,
        # matching the im2col slab layout built in the kernel.
        w_flat = w.reshape(9 * Cin, Cout).astype(MATMUL_DTYPE)

        if idx == 0:
            in_specs = [
                pl.BlockSpec((1, H, W, Cin), lambda n: (n, 0, 0, 0)),
                pl.BlockSpec((9 * Cin, Cout), lambda n: (0, 0)),
            ]
            conv, part = _run_conv_stage(conv_first_kernel, (x, w_flat),
                                         in_specs, N, H, W, Cin, Cout)
        else:
            in_specs = [
                pl.BlockSpec((1, H, W, Cin), lambda n: (n, 0, 0, 0)),
                pl.BlockSpec((1, Cin), lambda n: (0, 0)),
                pl.BlockSpec((1, Cin), lambda n: (0, 0)),
                pl.BlockSpec((9 * Cin, Cout), lambda n: (0, 0)),
            ]
            conv, part = _run_conv_stage(
                bn_relu_conv_kernel, (prev_conv, scale, shift, w_flat),
                in_specs, N, H, W, Cin, Cout)

        scale, shift = _fold_bn_stats(part, gamma, beta, cnt)
        prev_conv = conv

    # Final BN+ReLU, in place over the last conv buffer.
    Cout = params[-1][0].shape[3]
    out = pl.pallas_call(
        bn_relu_kernel,
        out_shape=jax.ShapeDtypeStruct((N, H, W, Cout), jnp.float32),
        grid=(N,),
        in_specs=[
            pl.BlockSpec((1, H, W, Cout), lambda n: (n, 0, 0, 0)),
            pl.BlockSpec((1, Cout), lambda n: (0, 0)),
            pl.BlockSpec((1, Cout), lambda n: (0, 0)),
        ],
        out_specs=pl.BlockSpec((1, H, W, Cout), lambda n: (n, 0, 0, 0)),
        input_output_aliases={0: 0},
        compiler_params=pltpu.CompilerParams(
            dimension_semantics=("parallel",)),
    )(prev_conv, scale, shift)

    return jnp.transpose(out, (0, 3, 1, 2))               # NHWC -> NCHW


# ----------------------------------------------------------------------------
# Pure-JAX reference + synthetic params
# ----------------------------------------------------------------------------
def reference_forward(x_nchw, params):
    """Pure-JAX reference (lax.conv + bias + batch-stat BN + ReLU), NCHW."""
    x = x_nchw
    for (w, b, gamma, beta) in params:
        y = lax.conv_general_dilated(
            x, w, window_strides=(1, 1), padding=((1, 1), (1, 1)),
            dimension_numbers=("NCHW", "HWIO", "NCHW"))
        y = y + b.reshape(1, -1, 1, 1)
        mean = jnp.mean(y, axis=(0, 2, 3), keepdims=True)
        var = jnp.mean((y - mean) ** 2, axis=(0, 2, 3), keepdims=True)
        y = (y - mean) * lax.rsqrt(var + BN_EPS)
        y = y * gamma.reshape(1, -1, 1, 1) + beta.reshape(1, -1, 1, 1)
        x = jnp.maximum(y, 0.0)
    return x


def init_params(key, n_stages, n_filters_in, n_filters_out):
    """Deterministic synthetic parameters matching ConvBlock.__init__ shapes.

    NOTE: the PyTorch module uses Conv2d(n_filters_in, n_filters_out) at EVERY
    stage, so stages > 1 only type-check when n_filters_in == n_filters_out —
    we reproduce that shape convention faithfully.
    """
    params = []
    for _s in range(n_stages):
        k_w, k_b, key = jax.random.split(key, 3)
        w = 0.1 * jax.random.normal(
            k_w, (3, 3, n_filters_in, n_filters_out), jnp.float32)   # HWIO
        b = 0.05 * jax.random.normal(k_b, (n_filters_out,), jnp.float32)
        gamma = jnp.ones((n_filters_out,), jnp.float32)   # BN init: weight=1
        beta = jnp.zeros((n_filters_out,), jnp.float32)   # BN init: bias=0
        params.append((w, b, gamma, beta))
    return params


if __name__ == "__main__":
    n_stages, n_filters_in, n_filters_out = 2, 4, 4
    N, H, W = 2, 16, 16

    key = jax.random.PRNGKey(0)
    k_x, k_p = jax.random.split(key)
    x = jax.random.normal(k_x, (N, n_filters_in, H, W), jnp.float32)  # NCHW
    params = init_params(k_p, n_stages, n_filters_in, n_filters_out)

    out = jax.block_until_ready(conv_block_forward(x, params))
    ref = reference_forward(x, params)

    assert out.shape == (N, n_filters_out, H, W), out.shape
    assert jnp.allclose(out, ref, rtol=1e-3, atol=1e-3), float(
        jnp.max(jnp.abs(out - ref)))

    print("KERNEL_OK")
</pallas_src>

<mosaic_0001>
module attributes {stable_mosaic.version = 11 : i64} {
  func.func @conv_first_kernel(%arg0: i32, %arg1: memref<1x16x16x4xf32, #tpu.memory_space<vmem>>, %arg2: memref<36x4xf32, #tpu.memory_space<vmem>>, %arg3: memref<1x16x16x4xf32, #tpu.memory_space<vmem>>, %arg4: memref<1x2x4xf32, #tpu.memory_space<vmem>>, %arg5: memref<18x18x4xf32, #tpu.memory_space<vmem>>, %arg6: memref<256x36xf32, #tpu.memory_space<vmem>>) attributes {dimension_semantics = [#tpu.dimension_semantics<parallel>], iteration_bounds = array<i64: 2>, scalar_prefetch = 0 : i64, scratch_operands = 2 : i64, tpu.core_type = #tpu.core_type<tc>, window_params = [{transform_indices = @transform_0, window_bounds = array<i64: 1, 16, 16, 4>}, {pipeline_mode = #tpu.pipeline_mode<synchronous>, transform_indices = @transform_1, window_bounds = array<i64: 36, 4>}, {transform_indices = @transform_2, window_bounds = array<i64: 1, 16, 16, 4>}, {transform_indices = @transform_3, window_bounds = array<i64: 1, 2, 4>}]} {
    %c0 = arith.constant 0 : index
    %c0_0 = arith.constant 0 : index
    %c0_1 = arith.constant 0 : index
    %c0_2 = arith.constant 0 : index
    %0 = vector.load %arg1[%c0, %c0_0, %c0_1, %c0_2] : memref<1x16x16x4xf32, #tpu.memory_space<vmem>>, vector<1x16x16x4xf32>
    %1 = vector.shape_cast %0 : vector<1x16x16x4xf32> to vector<16x16x4xf32>
    %cst = arith.constant 0.000000e+00 : f32
    %2 = vector.broadcast %cst : f32 to vector<18x18x4xf32>
    %c0_3 = arith.constant 0 : index
    %c0_4 = arith.constant 0 : index
    %c0_5 = arith.constant 0 : index
    %3 = vector.load %arg5[%c0_3, %c0_4, %c0_5] : memref<18x18x4xf32, #tpu.memory_space<vmem>>, vector<18x18x4xf32>
    tpu.vector_store %arg5[%c0_3, %c0_4, %c0_5], %2 {strides = array<i32>} : memref<18x18x4xf32, #tpu.memory_space<vmem>>, vector<18x18x4xf32>,
    %c1 = arith.constant 1 : index
    %c1_6 = arith.constant 1 : index
    %c0_7 = arith.constant 0 : index
    %4 = vector.load %arg5[%c1, %c1_6, %c0_7] : memref<18x18x4xf32, #tpu.memory_space<vmem>>, vector<16x16x4xf32>
    tpu.vector_store %arg5[%c1, %c1_6, %c0_7], %1 {strides = array<i32>} : memref<18x18x4xf32, #tpu.memory_space<vmem>>, vector<16x16x4xf32>,
    %c0_8 = arith.constant 0 : index
    %c0_9 = arith.constant 0 : index
    %c0_10 = arith.constant 0 : index
    %5 = vector.load %arg5[%c0_8, %c0_9, %c0_10] : memref<18x18x4xf32, #tpu.memory_space<vmem>>, vector<16x16x4xf32>
    %6 = vector.shape_cast %5 : vector<16x16x4xf32> to vector<256x4xf32>
    %c0_11 = arith.constant 0 : index
    %c0_12 = arith.constant 0 : index
    %7 = vector.load %arg6[%c0_11, %c0_12] : memref<256x36xf32, #tpu.memory_space<vmem>>, vector<256x4xf32>
    tpu.vector_store %arg6[%c0_11, %c0_12], %6 {strides = array<i32>} : memref<256x36xf32, #tpu.memory_space<vmem>>, vector<256x4xf32>,
    %c0_13 = arith.constant 0 : index
    %c1_14 = arith.constant 1 : index
    %c0_15 = arith.constant 0 : index
    %8 = vector.load %arg5[%c0_13, %c1_14, %c0_15] : memref<18x18x4xf32, #tpu.memory_space<vmem>>, vector<16x16x4xf32>
    %9 = vector.shape_cast %8 : vector<16x16x4xf32> to vector<256x4xf32>
    %c0_16 = arith.constant 0 : index
    %c4 = arith.constant 4 : index
    %10 = vector.load %arg6[%c0_16, %c4] : memref<256x36xf32, #tpu.memory_space<vmem>>, vector<256x4xf32>
    tpu.vector_store %arg6[%c0_16, %c4], %9 {strides = array<i32>} : memref<256x36xf32, #tpu.memory_space<vmem>>, vector<256x4xf32>,
    %c0_17 = arith.constant 0 : index
    %c2 = arith.constant 2 : index
    %c0_18 = arith.constant 0 : index
    %11 = vector.load %arg5[%c0_17, %c2, %c0_18] : memref<18x18x4xf32, #tpu.memory_space<vmem>>, vector<16x16x4xf32>
    %12 = vector.shape_cast %11 : vector<16x16x4xf32> to vector<256x4xf32>
    %c0_19 = arith.constant 0 : index
    %c8 = arith.constant 8 : index
    %13 = vector.load %arg6[%c0_19, %c8] : memref<256x36xf32, #tpu.memory_space<vmem>>, vector<256x4xf32>
    tpu.vector_store %arg6[%c0_19, %c8], %12 {strides = array<i32>} : memref<256x36xf32, #tpu.memory_space<vmem>>, vector<256x4xf32>,
    %c1_20 = arith.constant 1 : index
    %c0_21 = arith.constant 0 : index
    %c0_22 = arith.constant 0 : index
    %14 = vector.load %arg5[%c1_20, %c0_21, %c0_22] : memref<18x18x4xf32, #tpu.memory_space<vmem>>, vector<16x16x4xf32>
    %15 = vector.shape_cast %14 : vector<16x16x4xf32> to vector<256x4xf32>
    %c0_23 = arith.constant 0 : index
    %c12 = arith.constant 12 : index
    %16 = vector.load %arg6[%c0_23, %c12] : memref<256x36xf32, #tpu.memory_space<vmem>>, vector<256x4xf32>
    tpu.vector_store %arg6[%c0_23, %c12], %15 {strides = array<i32>} : memref<256x36xf32, #tpu.memory_space<vmem>>, vector<256x4xf32>,
    %c1_24 = arith.constant 1 : index
    %c1_25 = arith.constant 1 : index
    %c0_26 = arith.constant 0 : index
    %17 = vector.load %arg5[%c1_24, %c1_25, %c0_26] : memref<18x18x4xf32, #tpu.memory_space<vmem>>, vector<16x16x4xf32>
    %18 = vector.shape_cast %17 : vector<16x16x4xf32> to vector<256x4xf32>
    %c0_27 = arith.constant 0 : index
    %c16 = arith.constant 16 : index
    %19 = vector.load %arg6[%c0_27, %c16] : memref<256x36xf32, #tpu.memory_space<vmem>>, vector<256x4xf32>
    tpu.vector_store %arg6[%c0_27, %c16], %18 {strides = array<i32>} : memref<256x36xf32, #tpu.memory_space<vmem>>, vector<256x4xf32>,
    %c1_28 = arith.constant 1 : index
    %c2_29 = arith.constant 2 : index
    %c0_30 = arith.constant 0 : index
    %20 = vector.load %arg5[%c1_28, %c2_29, %c0_30] : memref<18x18x4xf32, #tpu.memory_space<vmem>>, vector<16x16x4xf32>
    %21 = vector.shape_cast %20 : vector<16x16x4xf32> to vector<256x4xf32>
    %c0_31 = arith.constant 0 : index
    %c20 = arith.constant 20 : index
    %22 = vector.load %arg6[%c0_31, %c20] : memref<256x36xf32, #tpu.memory_space<vmem>>, vector<256x4xf32>
    tpu.vector_store %arg6[%c0_31, %c20], %21 {strides = array<i32>} : memref<256x36xf32, #tpu.memory_space<vmem>>, vector<256x4xf32>,
    %c2_32 = arith.constant 2 : index
    %c0_33 = arith.constant 0 : index
    %c0_34 = arith.constant 0 : index
    %23 = vector.load %arg5[%c2_32, %c0_33, %c0_34] : memref<18x18x4xf32, #tpu.memory_space<vmem>>, vector<16x16x4xf32>
    %24 = vector.shape_cast %23 : vector<16x16x4xf32> to vector<256x4xf32>
    %c0_35 = arith.constant 0 : index
    %c24 = arith.constant 24 : index
    %25 = vector.load %arg6[%c0_35, %c24] : memref<256x36xf32, #tpu.memory_space<vmem>>, vector<256x4xf32>
    tpu.vector_store %arg6[%c0_35, %c24], %24 {strides = array<i32>} : memref<256x36xf32, #tpu.memory_space<vmem>>, vector<256x4xf32>,
    %c2_36 = arith.constant 2 : index
    %c1_37 = arith.constant 1 : index
    %c0_38 = arith.constant 0 : index
    %26 = vector.load %arg5[%c2_36, %c1_37, %c0_38] : memref<18x18x4xf32, #tpu.memory_space<vmem>>, vector<16x16x4xf32>
    %27 = vector.shape_cast %26 : vector<16x16x4xf32> to vector<256x4xf32>
    %c0_39 = arith.constant 0 : index
    %c28 = arith.constant 28 : index
    %28 = vector.load %arg6[%c0_39, %c28] : memref<256x36xf32, #tpu.memory_space<vmem>>, vector<256x4xf32>
    tpu.vector_store %arg6[%c0_39, %c28], %27 {strides = array<i32>} : memref<256x36xf32, #tpu.memory_space<vmem>>, vector<256x4xf32>,
    %c2_40 = arith.constant 2 : index
    %c2_41 = arith.constant 2 : index
    %c0_42 = arith.constant 0 : index
    %29 = vector.load %arg5[%c2_40, %c2_41, %c0_42] : memref<18x18x4xf32, #tpu.memory_space<vmem>>, vector<16x16x4xf32>
    %30 = vector.shape_cast %29 : vector<16x16x4xf32> to vector<256x4xf32>
    %c0_43 = arith.constant 0 : index
    %c32 = arith.constant 32 : index
    %31 = vector.load %arg6[%c0_43, %c32] : memref<256x36xf32, #tpu.memory_space<vmem>>, vector<256x4xf32>
    tpu.vector_store %arg6[%c0_43, %c32], %30 {strides = array<i32>} : memref<256x36xf32, #tpu.memory_space<vmem>>, vector<256x4xf32>,
    %c0_44 = arith.constant 0 : index
    %c0_45 = arith.constant 0 : index
    %32 = vector.load %arg6[%c0_44, %c0_45] : memref<256x36xf32, #tpu.memory_space<vmem>>, vector<256x36xf32>
    %c0_46 = arith.constant 0 : index
    %c0_47 = arith.constant 0 : index
    %33 = vector.load %arg2[%c0_46, %c0_47] : memref<36x4xf32, #tpu.memory_space<vmem>>, vector<36x4xf32>
    %cst_48 = arith.constant dense<0.000000e+00> : vector<256x4xf32>
    %34 = tpu.matmul %32, %33, %cst_48 {dimension_numbers = #tpu.dot_dimension_numbers<[1], [0], [0], [1], [0, 0, 1, 1], [], []>} : vector<256x36xf32>, vector<36x4xf32>, vector<256x4xf32> -> vector<256x4xf32>
    %35 = vector.shape_cast %34 : vector<256x4xf32> to vector<1x16x16x4xf32>
    %c0_49 = arith.constant 0 : index
    %c0_50 = arith.constant 0 : index
    %c0_51 = arith.constant 0 : index
    %c0_52 = arith.constant 0 : index
    %36 = vector.load %arg3[%c0_49, %c0_50, %c0_51, %c0_52] : memref<1x16x16x4xf32, #tpu.memory_space<vmem>>, vector<1x16x16x4xf32>
    tpu.vector_store %arg3[%c0_49, %c0_50, %c0_51, %c0_52], %35 {strides = array<i32>} : memref<1x16x16x4xf32, #tpu.memory_space<vmem>>, vector<1x16x16x4xf32>,
    %cst_53 = arith.constant dense<0.000000e+00> : vector<4xf32>
    %37 = vector.multi_reduction <add>, %34, %cst_53 [0] : vector<256x4xf32> to vector<4xf32>
    %38 = vector.shape_cast %37 : vector<4xf32> to vector<1x4xf32>
    %39 = arith.mulf %34, %34 : vector<256x4xf32>
    %cst_54 = arith.constant dense<0.000000e+00> : vector<4xf32>
    %40 = vector.multi_reduction <add>, %39, %cst_54 [0] : vector<256x4xf32> to vector<4xf32>
    %41 = vector.shape_cast %40 : vector<4xf32> to vector<1x4xf32>
    %42 = tpu.concatenate %38, %41 in 0 : vector<1x4xf32>, vector<1x4xf32> -> vector<2x4xf32>
    %43 = vector.shape_cast %42 : vector<2x4xf32> to vector<1x2x4xf32>
    %c0_55 = arith.constant 0 : index
    %c0_56 = arith.constant 0 : index
    %c0_57 = arith.constant 0 : index
    %44 = vector.load %arg4[%c0_55, %c0_56, %c0_57] : memref<1x2x4xf32, #tpu.memory_space<vmem>>, vector<1x2x4xf32>
    tpu.vector_store %arg4[%c0_55, %c0_56, %c0_57], %43 {strides = array<i32>} : memref<1x2x4xf32, #tpu.memory_space<vmem>>, vector<1x2x4xf32>,
    return
  }
  func.func @transform_0(%arg0: i32) -> (i32, i32, i32, i32) {
    %c0_i32 = arith.constant 0 : i32
    %c0_i32_0 = arith.constant 0 : i32
    %c0_i32_1 = arith.constant 0 : i32
    %c0_i32_2 = arith.constant 0 : i32
    return %arg0, %c0_i32, %c0_i32_0, %c0_i32_1 : i32, i32, i32, i32
  }
  func.func @transform_1(%arg0: i32) -> (i32, i32) {
    %c0_i32 = arith.constant 0 : i32
    %c0_i32_0 = arith.constant 0 : i32
    %c0_i32_1 = arith.constant 0 : i32
    return %c0_i32, %c0_i32_0 : i32, i32
  }
  func.func @transform_2(%arg0: i32) -> (i32, i32, i32, i32) {
    %c0_i32 = arith.constant 0 : i32
    %c0_i32_0 = arith.constant 0 : i32
    %c0_i32_1 = arith.constant 0 : i32
    %c0_i32_2 = arith.constant 0 : i32
    return %arg0, %c0_i32, %c0_i32_0, %c0_i32_1 : i32, i32, i32, i32
  }
  func.func @transform_3(%arg0: i32) -> (i32, i32, i32) {
    %c0_i32 = arith.constant 0 : i32
    %c0_i32_0 = arith.constant 0 : i32
    %c0_i32_1 = arith.constant 0 : i32
    return %arg0, %c0_i32, %c0_i32_0 : i32, i32, i32
  }
}

module attributes {stable_mosaic.version = 11 : i64} {
  func.func @bn_relu_kernel(%arg0: i32, %arg1: memref<1x16x16x4xf32, #tpu.memory_space<vmem>>, %arg2: memref<1x4xf32, #tpu.memory_space<vmem>>, %arg3: memref<1x4xf32, #tpu.memory_space<vmem>>, %arg4: memref<1x16x16x4xf32, #tpu.memory_space<vmem>>) attributes {dimension_semantics = [#tpu.dimension_semantics<parallel>], iteration_bounds = array<i64: 2>, scalar_prefetch = 0 : i64, scratch_operands = 0 : i64, tpu.core_type = #tpu.core_type<tc>, window_params = [{transform_indices = @transform_0, window_bounds = array<i64: 1, 16, 16, 4>}, {pipeline_mode = #tpu.pipeline_mode<synchronous>, transform_indices = @transform_1, window_bounds = array<i64: 1, 4>}, {pipeline_mode = #tpu.pipeline_mode<synchronous>, transform_indices = @transform_2, window_bounds = array<i64: 1, 4>}, {transform_indices = @transform_3, window_bounds = array<i64: 1, 16, 16, 4>}]} {
    %c0 = arith.constant 0 : index
    %c0_0 = arith.constant 0 : index
    %c0_1 = arith.constant 0 : index
    %c0_2 = arith.constant 0 : index
    %0 = vector.load %arg1[%c0, %c0_0, %c0_1, %c0_2] : memref<1x16x16x4xf32, #tpu.memory_space<vmem>>, vector<1x16x16x4xf32>
    %1 = vector.shape_cast %0 : vector<1x16x16x4xf32> to vector<256x4xf32>
    %c0_3 = arith.constant 0 : index
    %c0_4 = arith.constant 0 : index
    %2 = vector.load %arg2[%c0_3, %c0_4] : memref<1x4xf32, #tpu.memory_space<vmem>>, vector<1x4xf32>
    %3 = vector.broadcast %2 : vector<1x4xf32> to vector<256x4xf32>
    %4 = arith.mulf %1, %3 : vector<256x4xf32>
    %c0_5 = arith.constant 0 : index
    %c0_6 = arith.constant 0 : index
    %5 = vector.load %arg3[%c0_5, %c0_6] : memref<1x4xf32, #tpu.memory_space<vmem>>, vector<1x4xf32>
    %6 = vector.broadcast %5 : vector<1x4xf32> to vector<256x4xf32>
    %7 = arith.addf %4, %6 : vector<256x4xf32>
    %cst = arith.constant 0.000000e+00 : f32
    %8 = vector.broadcast %cst : f32 to vector<256x4xf32>
    %9 = arith.maximumf %7, %8 : vector<256x4xf32>
    %10 = vector.shape_cast %9 : vector<256x4xf32> to vector<1x16x16x4xf32>
    %c0_7 = arith.constant 0 : index
    %c0_8 = arith.constant 0 : index
    %c0_9 = arith.constant 0 : index
    %c0_10 = arith.constant 0 : index
    %11 = vector.load %arg4[%c0_7, %c0_8, %c0_9, %c0_10] : memref<1x16x16x4xf32, #tpu.memory_space<vmem>>, vector<1x16x16x4xf32>
    tpu.vector_store %arg4[%c0_7, %c0_8, %c0_9, %c0_10], %10 {strides = array<i32>} : memref<1x16x16x4xf32, #tpu.memory_space<vmem>>, vector<1x16x16x4xf32>,
    return
  }
  func.func @transform_0(%arg0: i32) -> (i32, i32, i32, i32) {
    %c0_i32 = arith.constant 0 : i32
    %c0_i32_0 = arith.constant 0 : i32
    %c0_i32_1 = arith.constant 0 : i32
    %c0_i32_2 = arith.constant 0 : i32
    return %arg0, %c0_i32, %c0_i32_0, %c0_i32_1 : i32, i32, i32, i32
  }
  func.func @transform_1(%arg0: i32) -> (i32, i32) {
    %c0_i32 = arith.constant 0 : i32
    %c0_i32_0 = arith.constant 0 : i32
    %c0_i32_1 = arith.constant 0 : i32
    return %c0_i32, %c0_i32_0 : i32, i32
  }
  func.func @transform_2(%arg0: i32) -> (i32, i32) {
    %c0_i32 = arith.constant 0 : i32
    %c0_i32_0 = arith.constant 0 : i32
    %c0_i32_1 = arith.constant 0 : i32
    return %c0_i32, %c0_i32_0 : i32, i32
  }
  func.func @transform_3(%arg0: i32) -> (i32, i32, i32, i32) {
    %c0_i32 = arith.constant 0 : i32
    %c0_i32_0 = arith.constant 0 : i32
    %c0_i32_1 = arith.constant 0 : i32
    %c0_i32_2 = arith.constant 0 : i32
    return %arg0, %c0_i32, %c0_i32_0, %c0_i32_1 : i32, i32, i32, i32
  }
}

module attributes {stable_mosaic.version = 11 : i64} {
  func.func @bn_relu_conv_kernel(%arg0: i32, %arg1: memref<1x16x16x4xf32, #tpu.memory_space<vmem>>, %arg2: memref<1x4xf32, #tpu.memory_space<vmem>>, %arg3: memref<1x4xf32, #tpu.memory_space<vmem>>, %arg4: memref<36x4xf32, #tpu.memory_space<vmem>>, %arg5: memref<1x16x16x4xf32, #tpu.memory_space<vmem>>, %arg6: memref<1x2x4xf32, #tpu.memory_space<vmem>>, %arg7: memref<18x18x4xf32, #tpu.memory_space<vmem>>, %arg8: memref<256x36xf32, #tpu.memory_space<vmem>>) attributes {dimension_semantics = [#tpu.dimension_semantics<parallel>], iteration_bounds = array<i64: 2>, scalar_prefetch = 0 : i64, scratch_operands = 2 : i64, tpu.core_type = #tpu.core_type<tc>, window_params = [{transform_indices = @transform_0, window_bounds = array<i64: 1, 16, 16, 4>}, {pipeline_mode = #tpu.pipeline_mode<synchronous>, transform_indices = @transform_1, window_bounds = array<i64: 1, 4>}, {pipeline_mode = #tpu.pipeline_mode<synchronous>, transform_indices = @transform_2, window_bounds = array<i64: 1, 4>}, {pipeline_mode = #tpu.pipeline_mode<synchronous>, transform_indices = @transform_3, window_bounds = array<i64: 36, 4>}, {transform_indices = @transform_4, window_bounds = array<i64: 1, 16, 16, 4>}, {transform_indices = @transform_5, window_bounds = array<i64: 1, 2, 4>}]} {
    %c0 = arith.constant 0 : index
    %c0_0 = arith.constant 0 : index
    %c0_1 = arith.constant 0 : index
    %c0_2 = arith.constant 0 : index
    %0 = vector.load %arg1[%c0, %c0_0, %c0_1, %c0_2] : memref<1x16x16x4xf32, #tpu.memory_space<vmem>>, vector<1x16x16x4xf32>
    %1 = vector.shape_cast %0 : vector<1x16x16x4xf32> to vector<16x16x4xf32>
    %c0_3 = arith.constant 0 : index
    %c0_4 = arith.constant 0 : index
    %2 = vector.load %arg2[%c0_3, %c0_4] : memref<1x4xf32, #tpu.memory_space<vmem>>, vector<1x4xf32>
    %3 = vector.shape_cast %2 : vector<1x4xf32> to vector<1x1x4xf32>
    %4 = vector.broadcast %3 : vector<1x1x4xf32> to vector<16x16x4xf32>
    %5 = arith.mulf %1, %4 : vector<16x16x4xf32>
    %c0_5 = arith.constant 0 : index
    %c0_6 = arith.constant 0 : index
    %6 = vector.load %arg3[%c0_5, %c0_6] : memref<1x4xf32, #tpu.memory_space<vmem>>, vector<1x4xf32>
    %7 = vector.shape_cast %6 : vector<1x4xf32> to vector<1x1x4xf32>
    %8 = vector.broadcast %7 : vector<1x1x4xf32> to vector<16x16x4xf32>
    %9 = arith.addf %5, %8 : vector<16x16x4xf32>
    %cst = arith.constant 0.000000e+00 : f32
    %10 = vector.broadcast %cst : f32 to vector<16x16x4xf32>
    %11 = arith.maximumf %9, %10 : vector<16x16x4xf32>
    %cst_7 = arith.constant 0.000000e+00 : f32
    %12 = vector.broadcast %cst_7 : f32 to vector<18x18x4xf32>
    %c0_8 = arith.constant 0 : index
    %c0_9 = arith.constant 0 : index
    %c0_10 = arith.constant 0 : index
    %13 = vector.load %arg7[%c0_8, %c0_9, %c0_10] : memref<18x18x4xf32, #tpu.memory_space<vmem>>, vector<18x18x4xf32>
    tpu.vector_store %arg7[%c0_8, %c0_9, %c0_10], %12 {strides = array<i32>} : memref<18x18x4xf32, #tpu.memory_space<vmem>>, vector<18x18x4xf32>,
    %c1 = arith.constant 1 : index
    %c1_11 = arith.constant 1 : index
    %c0_12 = arith.constant 0 : index
    %14 = vector.load %arg7[%c1, %c1_11, %c0_12] : memref<18x18x4xf32, #tpu.memory_space<vmem>>, vector<16x16x4xf32>
    tpu.vector_store %arg7[%c1, %c1_11, %c0_12], %11 {strides = array<i32>} : memref<18x18x4xf32, #tpu.memory_space<vmem>>, vector<16x16x4xf32>,
    %c0_13 = arith.constant 0 : index
    %c0_14 = arith.constant 0 : index
    %c0_15 = arith.constant 0 : index
    %15 = vector.load %arg7[%c0_13, %c0_14, %c0_15] : memref<18x18x4xf32, #tpu.memory_space<vmem>>, vector<16x16x4xf32>
    %16 = vector.shape_cast %15 : vector<16x16x4xf32> to vector<256x4xf32>
    %c0_16 = arith.constant 0 : index
    %c0_17 = arith.constant 0 : index
    %17 = vector.load %arg8[%c0_16, %c0_17] : memref<256x36xf32, #tpu.memory_space<vmem>>, vector<256x4xf32>
    tpu.vector_store %arg8[%c0_16, %c0_17], %16 {strides = array<i32>} : memref<256x36xf32, #tpu.memory_space<vmem>>, vector<256x4xf32>,
    %c0_18 = arith.constant 0 : index
    %c1_19 = arith.constant 1 : index
    %c0_20 = arith.constant 0 : index
    %18 = vector.load %arg7[%c0_18, %c1_19, %c0_20] : memref<18x18x4xf32, #tpu.memory_space<vmem>>, vector<16x16x4xf32>
    %19 = vector.shape_cast %18 : vector<16x16x4xf32> to vector<256x4xf32>
    %c0_21 = arith.constant 0 : index
    %c4 = arith.constant 4 : index
    %20 = vector.load %arg8[%c0_21, %c4] : memref<256x36xf32, #tpu.memory_space<vmem>>, vector<256x4xf32>
    tpu.vector_store %arg8[%c0_21, %c4], %19 {strides = array<i32>} : memref<256x36xf32, #tpu.memory_space<vmem>>, vector<256x4xf32>,
    %c0_22 = arith.constant 0 : index
    %c2 = arith.constant 2 : index
    %c0_23 = arith.constant 0 : index
    %21 = vector.load %arg7[%c0_22, %c2, %c0_23] : memref<18x18x4xf32, #tpu.memory_space<vmem>>, vector<16x16x4xf32>
    %22 = vector.shape_cast %21 : vector<16x16x4xf32> to vector<256x4xf32>
    %c0_24 = arith.constant 0 : index
    %c8 = arith.constant 8 : index
    %23 = vector.load %arg8[%c0_24, %c8] : memref<256x36xf32, #tpu.memory_space<vmem>>, vector<256x4xf32>
    tpu.vector_store %arg8[%c0_24, %c8], %22 {strides = array<i32>} : memref<256x36xf32, #tpu.memory_space<vmem>>, vector<256x4xf32>,
    %c1_25 = arith.constant 1 : index
    %c0_26 = arith.constant 0 : index
    %c0_27 = arith.constant 0 : index
    %24 = vector.load %arg7[%c1_25, %c0_26, %c0_27] : memref<18x18x4xf32, #tpu.memory_space<vmem>>, vector<16x16x4xf32>
    %25 = vector.shape_cast %24 : vector<16x16x4xf32> to vector<256x4xf32>
    %c0_28 = arith.constant 0 : index
    %c12 = arith.constant 12 : index
    %26 = vector.load %arg8[%c0_28, %c12] : memref<256x36xf32, #tpu.memory_space<vmem>>, vector<256x4xf32>
    tpu.vector_store %arg8[%c0_28, %c12], %25 {strides = array<i32>} : memref<256x36xf32, #tpu.memory_space<vmem>>, vector<256x4xf32>,
    %c1_29 = arith.constant 1 : index
    %c1_30 = arith.constant 1 : index
    %c0_31 = arith.constant 0 : index
    %27 = vector.load %arg7[%c1_29, %c1_30, %c0_31] : memref<18x18x4xf32, #tpu.memory_space<vmem>>, vector<16x16x4xf32>
    %28 = vector.shape_cast %27 : vector<16x16x4xf32> to vector<256x4xf32>
    %c0_32 = arith.constant 0 : index
    %c16 = arith.constant 16 : index
    %29 = vector.load %arg8[%c0_32, %c16] : memref<256x36xf32, #tpu.memory_space<vmem>>, vector<256x4xf32>
    tpu.vector_store %arg8[%c0_32, %c16], %28 {strides = array<i32>} : memref<256x36xf32, #tpu.memory_space<vmem>>, vector<256x4xf32>,
    %c1_33 = arith.constant 1 : index
    %c2_34 = arith.constant 2 : index
    %c0_35 = arith.constant 0 : index
    %30 = vector.load %arg7[%c1_33, %c2_34, %c0_35] : memref<18x18x4xf32, #tpu.memory_space<vmem>>, vector<16x16x4xf32>
    %31 = vector.shape_cast %30 : vector<16x16x4xf32> to vector<256x4xf32>
    %c0_36 = arith.constant 0 : index
    %c20 = arith.constant 20 : index
    %32 = vector.load %arg8[%c0_36, %c20] : memref<256x36xf32, #tpu.memory_space<vmem>>, vector<256x4xf32>
    tpu.vector_store %arg8[%c0_36, %c20], %31 {strides = array<i32>} : memref<256x36xf32, #tpu.memory_space<vmem>>, vector<256x4xf32>,
    %c2_37 = arith.constant 2 : index
    %c0_38 = arith.constant 0 : index
    %c0_39 = arith.constant 0 : index
    %33 = vector.load %arg7[%c2_37, %c0_38, %c0_39] : memref<18x18x4xf32, #tpu.memory_space<vmem>>, vector<16x16x4xf32>
    %34 = vector.shape_cast %33 : vector<16x16x4xf32> to vector<256x4xf32>
    %c0_40 = arith.constant 0 : index
    %c24 = arith.constant 24 : index
    %35 = vector.load %arg8[%c0_40, %c24] : memref<256x36xf32, #tpu.memory_space<vmem>>, vector<256x4xf32>
    tpu.vector_store %arg8[%c0_40, %c24], %34 {strides = array<i32>} : memref<256x36xf32, #tpu.memory_space<vmem>>, vector<256x4xf32>,
    %c2_41 = arith.constant 2 : index
    %c1_42 = arith.constant 1 : index
    %c0_43 = arith.constant 0 : index
    %36 = vector.load %arg7[%c2_41, %c1_42, %c0_43] : memref<18x18x4xf32, #tpu.memory_space<vmem>>, vector<16x16x4xf32>
    %37 = vector.shape_cast %36 : vector<16x16x4xf32> to vector<256x4xf32>
    %c0_44 = arith.constant 0 : index
    %c28 = arith.constant 28 : index
    %38 = vector.load %arg8[%c0_44, %c28] : memref<256x36xf32, #tpu.memory_space<vmem>>, vector<256x4xf32>
    tpu.vector_store %arg8[%c0_44, %c28], %37 {strides = array<i32>} : memref<256x36xf32, #tpu.memory_space<vmem>>, vector<256x4xf32>,
    %c2_45 = arith.constant 2 : index
    %c2_46 = arith.constant 2 : index
    %c0_47 = arith.constant 0 : index
    %39 = vector.load %arg7[%c2_45, %c2_46, %c0_47] : memref<18x18x4xf32, #tpu.memory_space<vmem>>, vector<16x16x4xf32>
    %40 = vector.shape_cast %39 : vector<16x16x4xf32> to vector<256x4xf32>
    %c0_48 = arith.constant 0 : index
    %c32 = arith.constant 32 : index
    %41 = vector.load %arg8[%c0_48, %c32] : memref<256x36xf32, #tpu.memory_space<vmem>>, vector<256x4xf32>
    tpu.vector_store %arg8[%c0_48, %c32], %40 {strides = array<i32>} : memref<256x36xf32, #tpu.memory_space<vmem>>, vector<256x4xf32>,
    %c0_49 = arith.constant 0 : index
    %c0_50 = arith.constant 0 : index
    %42 = vector.load %arg8[%c0_49, %c0_50] : memref<256x36xf32, #tpu.memory_space<vmem>>, vector<256x36xf32>
    %c0_51 = arith.constant 0 : index
    %c0_52 = arith.constant 0 : index
    %43 = vector.load %arg4[%c0_51, %c0_52] : memref<36x4xf32, #tpu.memory_space<vmem>>, vector<36x4xf32>
    %cst_53 = arith.constant dense<0.000000e+00> : vector<256x4xf32>
    %44 = tpu.matmul %42, %43, %cst_53 {dimension_numbers = #tpu.dot_dimension_numbers<[1], [0], [0], [1], [0, 0, 1, 1], [], []>} : vector<256x36xf32>, vector<36x4xf32>, vector<256x4xf32> -> vector<256x4xf32>
    %45 = vector.shape_cast %44 : vector<256x4xf32> to vector<1x16x16x4xf32>
    %c0_54 = arith.constant 0 : index
    %c0_55 = arith.constant 0 : index
    %c0_56 = arith.constant 0 : index
    %c0_57 = arith.constant 0 : index
    %46 = vector.load %arg5[%c0_54, %c0_55, %c0_56, %c0_57] : memref<1x16x16x4xf32, #tpu.memory_space<vmem>>, vector<1x16x16x4xf32>
    tpu.vector_store %arg5[%c0_54, %c0_55, %c0_56, %c0_57], %45 {strides = array<i32>} : memref<1x16x16x4xf32, #tpu.memory_space<vmem>>, vector<1x16x16x4xf32>,
    %cst_58 = arith.constant dense<0.000000e+00> : vector<4xf32>
    %47 = vector.multi_reduction <add>, %44, %cst_58 [0] : vector<256x4xf32> to vector<4xf32>
    %48 = vector.shape_cast %47 : vector<4xf32> to vector<1x4xf32>
    %49 = arith.mulf %44, %44 : vector<256x4xf32>
    %cst_59 = arith.constant dense<0.000000e+00> : vector<4xf32>
    %50 = vector.multi_reduction <add>, %49, %cst_59 [0] : vector<256x4xf32> to vector<4xf32>
    %51 = vector.shape_cast %50 : vector<4xf32> to vector<1x4xf32>
    %52 = tpu.concatenate %48, %51 in 0 : vector<1x4xf32>, vector<1x4xf32> -> vector<2x4xf32>
    %53 = vector.shape_cast %52 : vector<2x4xf32> to vector<1x2x4xf32>
    %c0_60 = arith.constant 0 : index
    %c0_61 = arith.constant 0 : index
    %c0_62 = arith.constant 0 : index
    %54 = vector.load %arg6[%c0_60, %c0_61, %c0_62] : memref<1x2x4xf32, #tpu.memory_space<vmem>>, vector<1x2x4xf32>
    tpu.vector_store %arg6[%c0_60, %c0_61, %c0_62], %53 {strides = array<i32>} : memref<1x2x4xf32, #tpu.memory_space<vmem>>, vector<1x2x4xf32>,
    return
  }
  func.func @transform_0(%arg0: i32) -> (i32, i32, i32, i32) {
    %c0_i32 = arith.constant 0 : i32
    %c0_i32_0 = arith.constant 0 : i32
    %c0_i32_1 = arith.constant 0 : i32
    %c0_i32_2 = arith.constant 0 : i32
    return %arg0, %c0_i32, %c0_i32_0, %c0_i32_1 : i32, i32, i32, i32
  }
  func.func @transform_1(%arg0: i32) -> (i32, i32) {
    %c0_i32 = arith.constant 0 : i32
    %c0_i32_0 = arith.constant 0 : i32
    %c0_i32_1 = arith.constant 0 : i32
    return %c0_i32, %c0_i32_0 : i32, i32
  }
  func.func @transform_2(%arg0: i32) -> (i32, i32) {
    %c0_i32 = arith.constant 0 : i32
    %c0_i32_0 = arith.constant 0 : i32
    %c0_i32_1 = arith.constant 0 : i32
    return %c0_i32, %c0_i32_0 : i32, i32
  }
  func.func @transform_3(%arg0: i32) -> (i32, i32) {
    %c0_i32 = arith.constant 0 : i32
    %c0_i32_0 = arith.constant 0 : i32
    %c0_i32_1 = arith.constant 0 : i32
    return %c0_i32, %c0_i32_0 : i32, i32
  }
  func.func @transform_4(%arg0: i32) -> (i32, i32, i32, i32) {
    %c0_i32 = arith.constant 0 : i32
    %c0_i32_0 = arith.constant 0 : i32
    %c0_i32_1 = arith.constant 0 : i32
    %c0_i32_2 = arith.constant 0 : i32
    return %arg0, %c0_i32, %c0_i32_0, %c0_i32_1 : i32, i32, i32, i32
  }
  func.func @transform_5(%arg0: i32) -> (i32, i32, i32) {
    %c0_i32 = arith.constant 0 : i32
    %c0_i32_0 = arith.constant 0 : i32
    %c0_i32_1 = arith.constant 0 : i32
    return %arg0, %c0_i32, %c0_i32_0 : i32, i32, i32
  }
}

</mosaic_0001>

<llo_original>
// kernel: conv_block_forward.5
$region0: #{conv_block_forward.5}
  #allocation0 [shape = 'u32[]', space=smem, size = 0x4, offset = 0x4, fixed_abs, tag = 'smem constant byte address 0x4 - core index']
  #allocation1 [shape = 'u32[72,128]{1,0:T(1,128)}', space=vmem, size = 0x9000, scoped, tag = 'internal scratch']
  %s0 = inlined_call_operand.vmem [shape: f32[2,16,16,4], index: 0, kind: input, shape index: {}, may-alias: {0,3}]
  %s1 = inlined_call_operand.vmem [shape: f32[1,4], index: 1, kind: input, shape index: {}]
  %s2 = inlined_call_operand.vmem [shape: f32[1,4], index: 2, kind: input, shape index: {}]
  %s3 = inlined_call_operand.vmem [shape: f32[2,16,16,4], index: 3, kind: output, shape index: {}, may-alias: {0,3}]
  %s4 = sld [smem:[#allocation0]]
  $region45: #{conv_block_forward.5} parent=0
    _
  %s6 = ssub.s32 1, %s4
  %s7 = scalar_select 0, %s6, %s4
  loop: start=0, step=1, limit=4
  $region2: #{conv_block_forward.5} parent=0 // loop_pre_header
    _
  $region3: #{conv_block_forward.5} parent=0 // loop_header
    %s9 = sphi 0, %s13
    %p10 = scmp.ge.s32.totalorder %s9, 4
    %s19 = sphi 0, %s21
    %s22 = sphi 0, %s19
    %s23 = sphi 0, %s22
    %s39 = sphi 0, %s23
    %s43 = sphi 0, %s43
    %s45 = sphi 0, %s43
    %s46 = sphi 0, %s45
    %s60 = sphi 0, %s46
    %s64 = sphi 0, %s64
    %s66 = sphi 0, %s64
    %s67 = sphi 0, %s66
    %s81 = sphi 0, %s67
    %s87 = sphi 0, %s89
    %s90 = sphi 0, %s87
    %s91 = sphi 0, %s90
    %s107 = sphi 0, %s91
  $region4: #{conv_block_forward.5} parent=0 // loop_header_branch
    %12 = sbr.rel (%p10) target = $region8
  $region5: #{conv_block_forward.5} parent=0 // loop_body
    %s14 = ssub.s32 %s9, 1
    %s15 = ssub.s32 %s9, 2
    %s16 = sadd.s32 %s9, 1
    %s17 = ssub.s32 %s9, %s16
    %p18 = scmp.eq.s32.totalorder %s17, 0
    %s20 = sadd.s32 %s19, 1
    %s21 = scalar_select %p18, %s19, %s20
    %p24 = pneg %p18
    %p25 = scmp.eq.s32.totalorder %s9, 1
    %p26 = por %p24, %p25
    %p27 = scmp.ne.s32.totalorder %s19, %s22
    %p28 = scmp.eq.s32.totalorder %s9, 0
    %p29 = por %p27, %p28
    %p30 = scmp.ne.s32.totalorder %s19, %s22
    %p31 = scmp.eq.s32.totalorder %s14, 1
    %p32 = por %p30, %p31
    %p33 = scmp.ne.s32.totalorder %s22, %s23
    %p34 = scmp.eq.s32.totalorder %s14, 0
    %p35 = por %p33, %p34
    %p36 = scmp.ne.s32.totalorder %s22, %s23
    %p37 = scmp.eq.s32.totalorder %s15, 1
    %p38 = por %p36, %p37
    %p40 = scmp.ne.s32.totalorder %s23, %s39
    %p41 = scmp.eq.s32.totalorder %s15, 0
    %p42 = por %p40, %p41
    %s44 = sadd.s32 %s43, 1
    %p47 = scmp.eq.s32.totalorder %s9, 1
    %p48 = scmp.ne.s32.totalorder %s43, %s45
    %p49 = scmp.eq.s32.totalorder %s9, 0
    %p50 = por %p48, %p49
    %p51 = scmp.ne.s32.totalorder %s43, %s45
    %p52 = scmp.eq.s32.totalorder %s14, 1
    %p53 = por %p51, %p52
    %p54 = scmp.ne.s32.totalorder %s45, %s46
    %p55 = scmp.eq.s32.totalorder %s14, 0
    %p56 = por %p54, %p55
    %p57 = scmp.ne.s32.totalorder %s45, %s46
    %p58 = scmp.eq.s32.totalorder %s15, 1
    %p59 = por %p57, %p58
    %p61 = scmp.ne.s32.totalorder %s46, %s60
    %p62 = scmp.eq.s32.totalorder %s15, 0
    %p63 = por %p61, %p62
    %s65 = sadd.s32 %s64, 1
    %p68 = scmp.eq.s32.totalorder %s9, 1
    %p69 = scmp.ne.s32.totalorder %s64, %s66
    %p70 = scmp.eq.s32.totalorder %s9, 0
    %p71 = por %p69, %p70
    %p72 = scmp.ne.s32.totalorder %s64, %s66
    %p73 = scmp.eq.s32.totalorder %s14, 1
    %p74 = por %p72, %p73
    %p75 = scmp.ne.s32.totalorder %s66, %s67
    %p76 = scmp.eq.s32.totalorder %s14, 0
    %p77 = por %p75, %p76
    %p78 = scmp.ne.s32.totalorder %s66, %s67
    %p79 = scmp.eq.s32.totalorder %s15, 1
    %p80 = por %p78, %p79
    %p82 = scmp.ne.s32.totalorder %s67, %s81
    %p83 = scmp.eq.s32.totalorder %s15, 0
    %p84 = por %p82, %p83
    %s85 = ssub.s32 %s9, %s16
    %p86 = scmp.eq.s32.totalorder %s85, 0
    %s88 = sadd.s32 %s87, 1
    %s89 = scalar_select %p86, %s87, %s88
    %p92 = pneg %p86
    %p93 = scmp.eq.s32.totalorder %s9, 1
    %p94 = por %p92, %p93
    %p95 = scmp.ne.s32.totalorder %s87, %s90
    %p96 = scmp.eq.s32.totalorder %s9, 0
    %p97 = por %p95, %p96
    %p98 = scmp.ne.s32.totalorder %s87, %s90
    %p99 = scmp.eq.s32.totalorder %s14, 1
    %p100 = por %p98, %p99
    %p101 = scmp.ne.s32.totalorder %s90, %s91
    %p102 = scmp.eq.s32.totalorder %s14, 0
    %p103 = por %p101, %p102
    %p104 = scmp.ne.s32.totalorder %s90, %s91
    %p105 = scmp.eq.s32.totalorder %s15, 1
    %p106 = por %p104, %p105
    %p108 = scmp.ne.s32.totalorder %s91, %s107
    %p109 = scmp.eq.s32.totalorder %s15, 0
    %p110 = por %p108, %p109
    %p111 = scmp.le.s32.totalorder 1, %s9
    %p112 = scmp.lt.s32.totalorder %s9, 3
    %p113 = pnand %p111, %p112
    %p114 = pneg %p113
    // Predicated region
    $region9: #{conv_block_forward.5} parent=5 // pred_check
      _
    $region10: #{conv_block_forward.5} parent=5 // pred_check_branch
      %116 = sbr.rel (%p113) target = $region12
    $region11: #{conv_block_forward.5} parent=5 // pred_region
      %s117 = ssub.s32 %s9, 1
      // Predicated region
      $region13: #{conv_block_forward.5} parent=11 // pred_check
        %p118 = pneg %p56
      $region14: #{conv_block_forward.5} parent=11 // pred_check_branch
        %120 = sbr.rel (%p118) target = $region16
      $region15: #{conv_block_forward.5} parent=11 // pred_region
        _
      $region16: #{conv_block_forward.5} parent=11 // pred_fallthru
        _
      // Predicated region
      $region17: #{conv_block_forward.5} parent=11 // pred_check
        %p121 = pneg %p77
      $region18: #{conv_block_forward.5} parent=11 // pred_check_branch
        %123 = sbr.rel (%p121) target = $region20
      $region19: #{conv_block_forward.5} parent=11 // pred_region
        _
      $region20: #{conv_block_forward.5} parent=11 // pred_fallthru
        _
    $region12: #{conv_block_forward.5} parent=5 // pred_fallthru
      _
    %p124 = scmp.lt.s32.totalorder %s9, 2
    // Predicated region
    $region21: #{conv_block_forward.5} parent=5 // pred_check
      %p125 = pneg %p124
    $region22: #{conv_block_forward.5} parent=5 // pred_check_branch
      %127 = sbr.rel (%p125) target = $region24
    $region23: #{conv_block_forward.5} parent=5 // pred_region
      // Predicated region
      $region25: #{conv_block_forward.5} parent=23 // pred_check
        %p128 = pneg %p29
      $region26: #{conv_block_forward.5} parent=23 // pred_check_branch
        %130 = sbr.rel (%p128) target = $region28
      $region27: #{conv_block_forward.5} parent=23 // pred_region
        %p131 = scmp.lt.s32.totalorder %s9, 1
        %s132 = scalar_select %p131, %s9, 1
        %s133 = smul.addr %s132, 32
        %s134 = smul.addr %s133, 8
        %s135 = scalar_lea.vmem %s0, %s134
      $region28: #{conv_block_forward.5} parent=23 // pred_fallthru
        _
    $region24: #{conv_block_forward.5} parent=5 // pred_fallthru
      _
    %p136 = scmp.le.s32.totalorder 1, %s9
    %p137 = scmp.lt.s32.totalorder %s9, 3
    %p138 = pnand %p136, %p137
    %p139 = pneg %p138
    // Predicated region
    $region29: #{conv_block_forward.5} parent=5 // pred_check
      _
    $region30: #{conv_block_forward.5} parent=5 // pred_check_branch
      %141 = sbr.rel (%p138) target = $region32
    $region31: #{conv_block_forward.5} parent=5 // pred_region
      %s142 = ssub.s32 %s9, 1
      %p143 = scmp.lt.s32.totalorder %s14, 1
      %s144 = scalar_select %p143, %s14, 1
      %s145 = smul.addr %s144, 32
      %s146 = smul.addr %s145, 8
      %s147 = scalar_lea.vmem %s0, %s146
      %p148 = pneg %p35
      %p149 = pneg %p32
      %p150 = pneg %p56
      %p151 = pneg %p53
      %p152 = pneg %p77
      %p153 = pneg %p74
      %p154 = pneg %p103
      %p155 = pneg %p100
      %p156 = scmp.lt.s32.totalorder %s14, 1
      %s157 = scalar_select %p156, %s14, 1
      %s158 = smul.addr %s157, 32
      %s159 = smul.addr %s158, 8
      %s160 = scalar_lea.vmem %s3, %s159
      %p161 = scmp.lt.s32.totalorder %s14, 1
      %s162 = scalar_select %p161, %s14, 1
      %s163 = smul.addr %s162, 32
      %s164 = smul.addr %s163, 8
      %s165 = scalar_lea.vmem %s0, %s164
      %p166 = scmp.lt.s32.totalorder %s14, 1
      %s167 = scalar_select %p166, %s14, 1
      %s168 = smul.addr %s167, 32
      %s169 = smul.addr %s168, 8
      %s170 = scalar_lea.vmem %s3, %s169
      %v171 = vld [vmem:[%s165] sm:$0xff]
      %v172 = vld [vmem:[%s165 + $0x8] sm:$0xff]
      %v173 = vld [vmem:[%s165 + $0x10] sm:$0xff]
      %v174 = vld [vmem:[%s165 + $0x18] sm:$0xff]
      %v175 = vld [vmem:[%s165 + $0x20] sm:$0xff]
      %v176 = vld [vmem:[%s165 + $0x28] sm:$0xff]
      %v177 = vld [vmem:[%s165 + $0x30] sm:$0xff]
      %v178 = vld [vmem:[%s165 + $0x38] sm:$0xff]
      %v179 = vld [vmem:[%s165 + $0x40] sm:$0xff]
      %v180 = vld [vmem:[%s165 + $0x48] sm:$0xff]
      %v181 = vld [vmem:[%s165 + $0x50] sm:$0xff]
      %v182 = vld [vmem:[%s165 + $0x58] sm:$0xff]
      %v183 = vld [vmem:[%s165 + $0x60] sm:$0xff]
      %v184 = vld [vmem:[%s165 + $0x68] sm:$0xff]
      %v185 = vld [vmem:[%s165 + $0x70] sm:$0xff]
      %v186 = vld [vmem:[%s165 + $0x78] sm:$0xff]
      %v187 = vld [vmem:[%s165 + $0x80] sm:$0xff]
      %v188 = vld [vmem:[%s165 + $0x88] sm:$0xff]
      %v189 = vld [vmem:[%s165 + $0x90] sm:$0xff]
      %v190 = vld [vmem:[%s165 + $0x98] sm:$0xff]
      %v191 = vld [vmem:[%s165 + $0xa0] sm:$0xff]
      %v192 = vld [vmem:[%s165 + $0xa8] sm:$0xff]
      %v193 = vld [vmem:[%s165 + $0xb0] sm:$0xff]
      %v194 = vld [vmem:[%s165 + $0xb8] sm:$0xff]
      %v195 = vld [vmem:[%s165 + $0xc0] sm:$0xff]
      %v196 = vld [vmem:[%s165 + $0xc8] sm:$0xff]
      %v197 = vld [vmem:[%s165 + $0xd0] sm:$0xff]
      %v198 = vld [vmem:[%s165 + $0xd8] sm:$0xff]
      %v199 = vld [vmem:[%s165 + $0xe0] sm:$0xff]
      %v200 = vld [vmem:[%s165 + $0xe8] sm:$0xff]
      %v201 = vld [vmem:[%s165 + $0xf0] sm:$0xff]
      %v202 = vld [vmem:[%s165 + $0xf8] sm:$0xff]
      %v203 = vld [vmem:[%s1] sm:$0x1]
      %v205 = vperm.slane %v203, 0
      %v207 = vmul.f32 %v171, %v205
      %v208 = vmul.f32 %v172, %v205
      %v209 = vmul.f32 %v173, %v205
      %v210 = vmul.f32 %v174, %v205
      %v211 = vmul.f32 %v175, %v205
      %v212 = vmul.f32 %v176, %v205
      %v213 = vmul.f32 %v177, %v205
      %v214 = vmul.f32 %v178, %v205
      %v215 = vmul.f32 %v179, %v205
      %v216 = vmul.f32 %v180, %v205
      %v217 = vmul.f32 %v181, %v205
      %v218 = vmul.f32 %v182, %v205
      %v219 = vmul.f32 %v183, %v205
      %v220 = vmul.f32 %v184, %v205
      %v221 = vmul.f32 %v185, %v205
      %v222 = vmul.f32 %v186, %v205
      %v223 = vmul.f32 %v187, %v205
      %v224 = vmul.f32 %v188, %v205
      %v225 = vmul.f32 %v189, %v205
      %v226 = vmul.f32 %v190, %v205
      %v227 = vmul.f32 %v191, %v205
      %v228 = vmul.f32 %v192, %v205
      %v229 = vmul.f32 %v193, %v205
      %v230 = vmul.f32 %v194, %v205
      %v231 = vmul.f32 %v195, %v205
      %v232 = vmul.f32 %v196, %v205
      %v233 = vmul.f32 %v197, %v205
      %v234 = vmul.f32 %v198, %v205
      %v235 = vmul.f32 %v199, %v205
      %v236 = vmul.f32 %v200, %v205
      %v237 = vmul.f32 %v201, %v205
      %v238 = vmul.f32 %v202, %v205
      %v239 = vld [vmem:[%s2] sm:$0x1]
      %v241 = vperm.slane %v239, 0
      %v243 = vadd.f32 %v207, %v241
      %v244 = vadd.f32 %v208, %v241
      %v245 = vadd.f32 %v209, %v241
      %v246 = vadd.f32 %v210, %v241
      %v247 = vadd.f32 %v211, %v241
      %v248 = vadd.f32 %v212, %v241
      %v249 = vadd.f32 %v213, %v241
      %v250 = vadd.f32 %v214, %v241
      %v251 = vadd.f32 %v215, %v241
      %v252 = vadd.f32 %v216, %v241
      %v253 = vadd.f32 %v217, %v241
      %v254 = vadd.f32 %v218, %v241
      %v255 = vadd.f32 %v219, %v241
      %v256 = vadd.f32 %v220, %v241
      %v257 = vadd.f32 %v221, %v241
      %v258 = vadd.f32 %v222, %v241
      %v259 = vadd.f32 %v223, %v241
      %v260 = vadd.f32 %v224, %v241
      %v261 = vadd.f32 %v225, %v241
      %v262 = vadd.f32 %v226, %v241
      %v263 = vadd.f32 %v227, %v241
      %v264 = vadd.f32 %v228, %v241
      %v265 = vadd.f32 %v229, %v241
      %v266 = vadd.f32 %v230, %v241
      %v267 = vadd.f32 %v231, %v241
      %v268 = vadd.f32 %v232, %v241
      %v269 = vadd.f32 %v233, %v241
      %v270 = vadd.f32 %v234, %v241
      %v271 = vadd.f32 %v235, %v241
      %v272 = vadd.f32 %v236, %v241
      %v273 = vadd.f32 %v237, %v241
      %v274 = vadd.f32 %v238, %v241
      %v275 = vmax.f32 %v243, 0.0
      %v276 = vmax.f32 %v244, 0.0
      %v277 = vmax.f32 %v245, 0.0
      %v278 = vmax.f32 %v246, 0.0
      %v279 = vmax.f32 %v247, 0.0
      %v280 = vmax.f32 %v248, 0.0
      %v281 = vmax.f32 %v249, 0.0
      %v282 = vmax.f32 %v250, 0.0
      %v283 = vmax.f32 %v251, 0.0
      %v284 = vmax.f32 %v252, 0.0
      %v285 = vmax.f32 %v253, 0.0
      %v286 = vmax.f32 %v254, 0.0
      %v287 = vmax.f32 %v255, 0.0
      %v288 = vmax.f32 %v256, 0.0
      %v289 = vmax.f32 %v257, 0.0
      %v290 = vmax.f32 %v258, 0.0
      %v291 = vmax.f32 %v259, 0.0
      %v292 = vmax.f32 %v260, 0.0
      %v293 = vmax.f32 %v261, 0.0
      %v294 = vmax.f32 %v262, 0.0
      %v295 = vmax.f32 %v263, 0.0
      %v296 = vmax.f32 %v264, 0.0
      %v297 = vmax.f32 %v265, 0.0
      %v298 = vmax.f32 %v266, 0.0
      %v299 = vmax.f32 %v267, 0.0
      %v300 = vmax.f32 %v268, 0.0
      %v301 = vmax.f32 %v269, 0.0
      %v302 = vmax.f32 %v270, 0.0
      %v303 = vmax.f32 %v271, 0.0
      %v304 = vmax.f32 %v272, 0.0
      %v305 = vmax.f32 %v273, 0.0
      %v306 = vmax.f32 %v274, 0.0
      %vm307 = vcmask 31744
      %308 = vst.msk [vmem:[%s170] sm:$0xff] %vm307, %v275
      %309 = vst.msk [vmem:[%s170 + $0x8] sm:$0xff] %vm307, %v276
      %310 = vst.msk [vmem:[%s170 + $0x10] sm:$0xff] %vm307, %v277
      %311 = vst.msk [vmem:[%s170 + $0x18] sm:$0xff] %vm307, %v278
      %312 = vst.msk [vmem:[%s170 + $0x20] sm:$0xff] %vm307, %v279
      %313 = vst.msk [vmem:[%s170 + $0x28] sm:$0xff] %vm307, %v280
      %314 = vst.msk [vmem:[%s170 + $0x30] sm:$0xff] %vm307, %v281
      %315 = vst.msk [vmem:[%s170 + $0x38] sm:$0xff] %vm307, %v282
      %316 = vst.msk [vmem:[%s170 + $0x40] sm:$0xff] %vm307, %v283
      %317 = vst.msk [vmem:[%s170 + $0x48] sm:$0xff] %vm307, %v284
      %318 = vst.msk [vmem:[%s170 + $0x50] sm:$0xff] %vm307, %v285
      %319 = vst.msk [vmem:[%s170 + $0x58] sm:$0xff] %vm307, %v286
      %320 = vst.msk [vmem:[%s170 + $0x60] sm:$0xff] %vm307, %v287
      %321 = vst.msk [vmem:[%s170 + $0x68] sm:$0xff] %vm307, %v288
      %322 = vst.msk [vmem:[%s170 + $0x70] sm:$0xff] %vm307, %v289
      %323 = vst.msk [vmem:[%s170 + $0x78] sm:$0xff] %vm307, %v290
      %324 = vst.msk [vmem:[%s170 + $0x80] sm:$0xff] %vm307, %v291
      %325 = vst.msk [vmem:[%s170 + $0x88] sm:$0xff] %vm307, %v292
      %326 = vst.msk [vmem:[%s170 + $0x90] sm:$0xff] %vm307, %v293
      %327 = vst.msk [vmem:[%s170 + $0x98] sm:$0xff] %vm307, %v294
      %328 = vst.msk [vmem:[%s170 + $0xa0] sm:$0xff] %vm307, %v295
      %329 = vst.msk [vmem:[%s170 + $0xa8] sm:$0xff] %vm307, %v296
      %330 = vst.msk [vmem:[%s170 + $0xb0] sm:$0xff] %vm307, %v297
      %331 = vst.msk [vmem:[%s170 + $0xb8] sm:$0xff] %vm307, %v298
      %332 = vst.msk [vmem:[%s170 + $0xc0] sm:$0xff] %vm307, %v299
      %333 = vst.msk [vmem:[%s170 + $0xc8] sm:$0xff] %vm307, %v300
      %334 = vst.msk [vmem:[%s170 + $0xd0] sm:$0xff] %vm307, %v301
      %335 = vst.msk [vmem:[%s170 + $0xd8] sm:$0xff] %vm307, %v302
      %336 = vst.msk [vmem:[%s170 + $0xe0] sm:$0xff] %vm307, %v303
      %337 = vst.msk [vmem:[%s170 + $0xe8] sm:$0xff] %vm307, %v304
      %338 = vst.msk [vmem:[%s170 + $0xf0] sm:$0xff] %vm307, %v305
      %339 = vst.msk [vmem:[%s170 + $0xf8] sm:$0xff] %vm307, %v306
      %p340 = scmp.lt.s32.totalorder %s14, 1
      %s341 = scalar_select %p340, %s14, 1
      %s342 = smul.addr %s341, 32
      %s343 = smul.addr %s342, 8
      %s344 = scalar_lea.vmem %s3, %s343
      // Predicated region
      $region33: #{conv_block_forward.5} parent=31 // pred_check
        %p345 = pneg %p100
      $region34: #{conv_block_forward.5} parent=31 // pred_check_branch
        %347 = sbr.rel (%p345) target = $region36
      $region35: #{conv_block_forward.5} parent=31 // pred_region
        _
      $region36: #{conv_block_forward.5} parent=31 // pred_fallthru
        _
    $region32: #{conv_block_forward.5} parent=5 // pred_fallthru
      _
    %p348 = scmp.le.s32.totalorder 2, %s9
    // Predicated region
    $region37: #{conv_block_forward.5} parent=5 // pred_check
      %p349 = pneg %p348
    $region38: #{conv_block_forward.5} parent=5 // pred_check_branch
      %351 = sbr.rel (%p349) target = $region40
    $region39: #{conv_block_forward.5} parent=5 // pred_region
      %s352 = ssub.s32 %s9, 2
      // Predicated region
      $region41: #{conv_block_forward.5} parent=39 // pred_check
        %p353 = pneg %p106
      $region42: #{conv_block_forward.5} parent=39 // pred_check_branch
        %355 = sbr.rel (%p353) target = $region44
      $region43: #{conv_block_forward.5} parent=39 // pred_region
        %p356 = scmp.lt.s32.totalorder %s15, 1
        %s357 = scalar_select %p356, %s15, 1
        %s358 = smul.addr %s357, 32
        %s359 = smul.addr %s358, 8
        %s360 = scalar_lea.vmem %s3, %s359
      $region44: #{conv_block_forward.5} parent=39 // pred_fallthru
        _
    $region40: #{conv_block_forward.5} parent=5 // pred_fallthru
      _
  $region6: #{conv_block_forward.5} parent=0 // loop_footer
    %s13 = sadd.s32 1, %s9
  $region7: #{conv_block_forward.5} parent=0 // loop_footer_branch
    %8 = sbr.rel target = $region3
  $region8: #{conv_block_forward.5} parent=0 // loop_exit
    _

// kernel: conv_block_forward.3
$region0: #{conv_block_forward.3}
  #allocation0 [shape = 'u32[]', space=smem, size = 0x4, offset = 0x4, fixed_abs, tag = 'smem constant byte address 0x4 - core index']
  #allocation1 [shape = 'u32[72,128]{1,0:T(1,128)}', space=vmem, size = 0x9000, scoped, tag = 'internal scratch']
  #allocation2 [shape = 'f32[18,18,4]{2,1,0:T(8,128)}', space=vmem, size = 0x36000, scoped, tag = 'scratch operand']
  #allocation3 [shape = 'f32[256,36]{1,0:T(8,128)}', space=vmem, size = 0x20000, scoped, tag = 'scratch operand']
  %s0 = inlined_call_operand.vmem [shape: f32[2,16,16,4], index: 0, kind: input, shape index: {}]
  %s1 = inlined_call_operand.vmem [shape: f32[36,4], index: 1, kind: input, shape index: {}]
  %s2 = inlined_call_operand.vmem [shape: f32[2,16,16,4], index: 2, kind: output, shape index: {0}]
  %s3 = inlined_call_operand.vmem [shape: f32[2,2,4], index: 3, kind: output, shape index: {1}]
  %4 = xla_tuple %s2, %s3
  %s5 = sld [smem:[#allocation0]]
  $region49: #{conv_block_forward.3} parent=0
    _
  %s7 = ssub.s32 1, %s5
  %s8 = scalar_select 0, %s7, %s5
  loop: start=0, step=1, limit=4
  $region2: #{conv_block_forward.3} parent=0 // loop_pre_header
    _
  $region3: #{conv_block_forward.3} parent=0 // loop_header
    %s10 = sphi 0, %s14
    %p11 = scmp.ge.s32.totalorder %s10, 4
    %s20 = sphi 0, %s22
    %s23 = sphi 0, %s20
    %s24 = sphi 0, %s23
    %s40 = sphi 0, %s24
    %s44 = sphi 0, %s44
    %s46 = sphi 0, %s44
    %s47 = sphi 0, %s46
    %s61 = sphi 0, %s47
    %s67 = sphi 0, %s69
    %s70 = sphi 0, %s67
    %s71 = sphi 0, %s70
    %s87 = sphi 0, %s71
    %s93 = sphi 0, %s95
    %s96 = sphi 0, %s93
    %s97 = sphi 0, %s96
    %s113 = sphi 0, %s97
  $region4: #{conv_block_forward.3} parent=0 // loop_header_branch
    %13 = sbr.rel (%p11) target = $region8
  $region5: #{conv_block_forward.3} parent=0 // loop_body
    %s15 = ssub.s32 %s10, 1
    %s16 = ssub.s32 %s10, 2
    %s17 = sadd.s32 %s10, 1
    %s18 = ssub.s32 %s10, %s17
    %p19 = scmp.eq.s32.totalorder %s18, 0
    %s21 = sadd.s32 %s20, 1
    %s22 = scalar_select %p19, %s20, %s21
    %p25 = pneg %p19
    %p26 = scmp.eq.s32.totalorder %s10, 1
    %p27 = por %p25, %p26
    %p28 = scmp.ne.s32.totalorder %s20, %s23
    %p29 = scmp.eq.s32.totalorder %s10, 0
    %p30 = por %p28, %p29
    %p31 = scmp.ne.s32.totalorder %s20, %s23
    %p32 = scmp.eq.s32.totalorder %s15, 1
    %p33 = por %p31, %p32
    %p34 = scmp.ne.s32.totalorder %s23, %s24
    %p35 = scmp.eq.s32.totalorder %s15, 0
    %p36 = por %p34, %p35
    %p37 = scmp.ne.s32.totalorder %s23, %s24
    %p38 = scmp.eq.s32.totalorder %s16, 1
    %p39 = por %p37, %p38
    %p41 = scmp.ne.s32.totalorder %s24, %s40
    %p42 = scmp.eq.s32.totalorder %s16, 0
    %p43 = por %p41, %p42
    %s45 = sadd.s32 %s44, 1
    %p48 = scmp.eq.s32.totalorder %s10, 1
    %p49 = scmp.ne.s32.totalorder %s44, %s46
    %p50 = scmp.eq.s32.totalorder %s10, 0
    %p51 = por %p49, %p50
    %p52 = scmp.ne.s32.totalorder %s44, %s46
    %p53 = scmp.eq.s32.totalorder %s15, 1
    %p54 = por %p52, %p53
    %p55 = scmp.ne.s32.totalorder %s46, %s47
    %p56 = scmp.eq.s32.totalorder %s15, 0
    %p57 = por %p55, %p56
    %p58 = scmp.ne.s32.totalorder %s46, %s47
    %p59 = scmp.eq.s32.totalorder %s16, 1
    %p60 = por %p58, %p59
    %p62 = scmp.ne.s32.totalorder %s47, %s61
    %p63 = scmp.eq.s32.totalorder %s16, 0
    %p64 = por %p62, %p63
    %s65 = ssub.s32 %s10, %s17
    %p66 = scmp.eq.s32.totalorder %s65, 0
    %s68 = sadd.s32 %s67, 1
    %s69 = scalar_select %p66, %s67, %s68
    %p72 = pneg %p66
    %p73 = scmp.eq.s32.totalorder %s10, 1
    %p74 = por %p72, %p73
    %p75 = scmp.ne.s32.totalorder %s67, %s70
    %p76 = scmp.eq.s32.totalorder %s10, 0
    %p77 = por %p75, %p76
    %p78 = scmp.ne.s32.totalorder %s67, %s70
    %p79 = scmp.eq.s32.totalorder %s15, 1
    %p80 = por %p78, %p79
    %p81 = scmp.ne.s32.totalorder %s70, %s71
    %p82 = scmp.eq.s32.totalorder %s15, 0
    %p83 = por %p81, %p82
    %p84 = scmp.ne.s32.totalorder %s70, %s71
    %p85 = scmp.eq.s32.totalorder %s16, 1
    %p86 = por %p84, %p85
    %p88 = scmp.ne.s32.totalorder %s71, %s87
    %p89 = scmp.eq.s32.totalorder %s16, 0
    %p90 = por %p88, %p89
    %s91 = ssub.s32 %s10, %s17
    %p92 = scmp.eq.s32.totalorder %s91, 0
    %s94 = sadd.s32 %s93, 1
    %s95 = scalar_select %p92, %s93, %s94
    %p98 = pneg %p92
    %p99 = scmp.eq.s32.totalorder %s10, 1
    %p100 = por %p98, %p99
    %p101 = scmp.ne.s32.totalorder %s93, %s96
    %p102 = scmp.eq.s32.totalorder %s10, 0
    %p103 = por %p101, %p102
    %p104 = scmp.ne.s32.totalorder %s93, %s96
    %p105 = scmp.eq.s32.totalorder %s15, 1
    %p106 = por %p104, %p105
    %p107 = scmp.ne.s32.totalorder %s96, %s97
    %p108 = scmp.eq.s32.totalorder %s15, 0
    %p109 = por %p107, %p108
    %p110 = scmp.ne.s32.totalorder %s96, %s97
    %p111 = scmp.eq.s32.totalorder %s16, 1
    %p112 = por %p110, %p111
    %p114 = scmp.ne.s32.totalorder %s97, %s113
    %p115 = scmp.eq.s32.totalorder %s16, 0
    %p116 = por %p114, %p115
    %p117 = scmp.le.s32.totalorder 1, %s10
    %p118 = scmp.lt.s32.totalorder %s10, 3
    %p119 = pnand %p117, %p118
    %p120 = pneg %p119
    // Predicated region
    $region9: #{conv_block_forward.3} parent=5 // pred_check
      _
    $region10: #{conv_block_forward.3} parent=5 // pred_check_branch
      %122 = sbr.rel (%p119) target = $region12
    $region11: #{conv_block_forward.3} parent=5 // pred_region
      %s123 = ssub.s32 %s10, 1
      // Predicated region
      $region13: #{conv_block_forward.3} parent=11 // pred_check
        %p124 = pneg %p57
      $region14: #{conv_block_forward.3} parent=11 // pred_check_branch
        %126 = sbr.rel (%p124) target = $region16
      $region15: #{conv_block_forward.3} parent=11 // pred_region
        _
      $region16: #{conv_block_forward.3} parent=11 // pred_fallthru
        _
    $region12: #{conv_block_forward.3} parent=5 // pred_fallthru
      _
    %p127 = scmp.lt.s32.totalorder %s10, 2
    // Predicated region
    $region17: #{conv_block_forward.3} parent=5 // pred_check
      %p128 = pneg %p127
    $region18: #{conv_block_forward.3} parent=5 // pred_check_branch
      %130 = sbr.rel (%p128) target = $region20
    $region19: #{conv_block_forward.3} parent=5 // pred_region
      // Predicated region
      $region21: #{conv_block_forward.3} parent=19 // pred_check
        %p131 = pneg %p30
      $region22: #{conv_block_forward.3} parent=19 // pred_check_branch
        %133 = sbr.rel (%p131) target = $region24
      $region23: #{conv_block_forward.3} parent=19 // pred_region
        %p134 = scmp.lt.s32.totalorder %s10, 1
        %s135 = scalar_select %p134, %s10, 1
        %s136 = smul.addr %s135, 32
        %s137 = smul.addr %s136, 8
        %s138 = scalar_lea.vmem %s0, %s137
      $region24: #{conv_block_forward.3} parent=19 // pred_fallthru
        _
    $region20: #{conv_block_forward.3} parent=5 // pred_fallthru
      _
    %p139 = scmp.le.s32.totalorder 1, %s10
    %p140 = scmp.lt.s32.totalorder %s10, 3
    %p141 = pnand %p139, %p140
    %p142 = pneg %p141
    // Predicated region
    $region25: #{conv_block_forward.3} parent=5 // pred_check
      _
    $region26: #{conv_block_forward.3} parent=5 // pred_check_branch
      %144 = sbr.rel (%p141) target = $region28
    $region27: #{conv_block_forward.3} parent=5 // pred_region
      %s145 = ssub.s32 %s10, 1
      %p146 = scmp.lt.s32.totalorder %s15, 1
      %s147 = scalar_select %p146, %s15, 1
      %s148 = smul.addr %s147, 32
      %s149 = smul.addr %s148, 8
      %s150 = scalar_lea.vmem %s0, %s149
      %p151 = pneg %p36
      %p152 = pneg %p33
      %p153 = pneg %p57
      %p154 = pneg %p54
      %p155 = pneg %p83
      %p156 = pneg %p80
      %p157 = scmp.lt.s32.totalorder %s15, 1
      %s158 = scalar_select %p157, %s15, 1
      %s159 = smul.addr %s158, 32
      %s160 = smul.addr %s159, 8
      %s161 = scalar_lea.vmem %s2, %s160
      %p162 = pneg %p109
      %p163 = pneg %p106
      %p164 = scmp.lt.s32.totalorder %s15, 1
      %s165 = scalar_select %p164, %s15, 1
      %s166 = smul.addr %s165, 2
      %s167 = scalar_lea.vmem %s3, %s166
      %p168 = scmp.lt.s32.totalorder %s15, 1
      %s169 = scalar_select %p168, %s15, 1
      %s170 = smul.addr %s169, 32
      %s171 = smul.addr %s170, 8
      %s172 = scalar_lea.vmem %s0, %s171
      %p173 = scmp.lt.s32.totalorder %s15, 1
      %s174 = scalar_select %p173, %s15, 1
      %s175 = smul.addr %s174, 32
      %s176 = smul.addr %s175, 8
      %s177 = scalar_lea.vmem %s2, %s176
      %p178 = scmp.lt.s32.totalorder %s15, 1
      %s179 = scalar_select %p178, %s15, 1
      %s180 = smul.addr %s179, 2
      %s181 = scalar_lea.vmem %s3, %s180
      %v182 = vld [vmem:[%s172] sm:$0xff]
      %v183 = vld [vmem:[%s172 + $0x8] sm:$0xff]
      %v184 = vld [vmem:[%s172 + $0x10] sm:$0xff]
      %v185 = vld [vmem:[%s172 + $0x18] sm:$0xff]
      %v186 = vld [vmem:[%s172 + $0x20] sm:$0xff]
      %v187 = vld [vmem:[%s172 + $0x28] sm:$0xff]
      %v188 = vld [vmem:[%s172 + $0x30] sm:$0xff]
      %v189 = vld [vmem:[%s172 + $0x38] sm:$0xff]
      %v190 = vld [vmem:[%s172 + $0x40] sm:$0xff]
      %v191 = vld [vmem:[%s172 + $0x48] sm:$0xff]
      %v192 = vld [vmem:[%s172 + $0x50] sm:$0xff]
      %v193 = vld [vmem:[%s172 + $0x58] sm:$0xff]
      %v194 = vld [vmem:[%s172 + $0x60] sm:$0xff]
      %v195 = vld [vmem:[%s172 + $0x68] sm:$0xff]
      %v196 = vld [vmem:[%s172 + $0x70] sm:$0xff]
      %v197 = vld [vmem:[%s172 + $0x78] sm:$0xff]
      %v198 = vld [vmem:[%s172 + $0x80] sm:$0xff]
      %v199 = vld [vmem:[%s172 + $0x88] sm:$0xff]
      %v200 = vld [vmem:[%s172 + $0x90] sm:$0xff]
      %v201 = vld [vmem:[%s172 + $0x98] sm:$0xff]
      %v202 = vld [vmem:[%s172 + $0xa0] sm:$0xff]
      %v203 = vld [vmem:[%s172 + $0xa8] sm:$0xff]
      %v204 = vld [vmem:[%s172 + $0xb0] sm:$0xff]
      %v205 = vld [vmem:[%s172 + $0xb8] sm:$0xff]
      %v206 = vld [vmem:[%s172 + $0xc0] sm:$0xff]
      %v207 = vld [vmem:[%s172 + $0xc8] sm:$0xff]
      %v208 = vld [vmem:[%s172 + $0xd0] sm:$0xff]
      %v209 = vld [vmem:[%s172 + $0xd8] sm:$0xff]
      %v210 = vld [vmem:[%s172 + $0xe0] sm:$0xff]
      %v211 = vld [vmem:[%s172 + $0xe8] sm:$0xff]
      %v212 = vld [vmem:[%s172 + $0xf0] sm:$0xff]
      %v213 = vld [vmem:[%s172 + $0xf8] sm:$0xff]
      %vm214 = vcmask 31744
      %215 = vst.msk [vmem:[#allocation2] sm:$0xff] %vm214, 0.0
      %216 = vst.msk [vmem:[#allocation2 + $0x8] sm:$0xff] %vm214, 0.0
      %vm217 = vcmask 25600
      %218 = vst.msk [vmem:[#allocation2 + $0x10] sm:$0x3] %vm217, 0.0
      %219 = vst.msk [vmem:[#allocation2 + $0x18] sm:$0xff] %vm214, 0.0
      %220 = vst.msk [vmem:[#allocation2 + $0x20] sm:$0xff] %vm214, 0.0
      %221 = vst.msk [vmem:[#allocation2 + $0x28] sm:$0x3] %vm217, 0.0
      %222 = vst.msk [vmem:[#allocation2 + $0x30] sm:$0xff] %vm214, 0.0
      %223 = vst.msk [vmem:[#allocation2 + $0x38] sm:$0xff] %vm214, 0.0
      %224 = vst.msk [vmem:[#allocation2 + $0x40] sm:$0x3] %vm217, 0.0
      %225 = vst.msk [vmem:[#allocation2 + $0x48] sm:$0xff] %vm214, 0.0
      %226 = vst.msk [vmem:[#allocation2 + $0x50] sm:$0xff] %vm214, 0.0
      %227 = vst.msk [vmem:[#allocation2 + $0x58] sm:$0x3] %vm217, 0.0
      %228 = vst.msk [vmem:[#allocation2 + $0x60] sm:$0xff] %vm214, 0.0
      %229 = vst.msk [vmem:[#allocation2 + $0x68] sm:$0xff] %vm214, 0.0
      %230 = vst.msk [vmem:[#allocation2 + $0x70] sm:$0x3] %vm217, 0.0
      %231 = vst.msk [vmem:[#allocation2 + $0x78] sm:$0xff] %vm214, 0.0
      %232 = vst.msk [vmem:[#allocation2 + $0x80] sm:$0xff] %vm214, 0.0
      %233 = vst.msk [vmem:[#allocation2 + $0x88] sm:$0x3] %vm217, 0.0
      %234 = vst.msk [vmem:[#allocation2 + $0x90] sm:$0xff] %vm214, 0.0
      %235 = vst.msk [vmem:[#allocation2 + $0x98] sm:$0xff] %vm214, 0.0
      %236 = vst.msk [vmem:[#allocation2 + $0xa0] sm:$0x3] %vm217, 0.0
      %237 = vst.msk [vmem:[#allocation2 + $0xa8] sm:$0xff] %vm214, 0.0
      %238 = vst.msk [vmem:[#allocation2 + $0xb0] sm:$0xff] %vm214, 0.0
      %239 = vst.msk [vmem:[#allocation2 + $0xb8] sm:$0x3] %vm217, 0.0
      %240 = vst.msk [vmem:[#allocation2 + $0xc0] sm:$0xff] %vm214, 0.0
      %241 = vst.msk [vmem:[#allocation2 + $0xc8] sm:$0xff] %vm214, 0.0
      %242 = vst.msk [vmem:[#allocation2 + $0xd0] sm:$0x3] %vm217, 0.0
      %243 = vst.msk [vmem:[#allocation2 + $0xd8] sm:$0xff] %vm214, 0.0
      %244 = vst.msk [vmem:[#allocation2 + $0xe0] sm:$0xff] %vm214, 0.0
      %245 = vst.msk [vmem:[#allocation2 + $0xe8] sm:$0x3] %vm217, 0.0
      %246 = vst.msk [vmem:[#allocation2 + $0xf0] sm:$0xff] %vm214, 0.0
      %247 = vst.msk [vmem:[#allocation2 + $0xf8] sm:$0xff] %vm214, 0.0
      %248 = vst.msk [vmem:[#allocation2 + $0x100] sm:$0x3] %vm217, 0.0
      %249 = vst.msk [vmem:[#allocation2 + $0x108] sm:$0xff] %vm214, 0.0
      %250 = vst.msk [vmem:[#allocation2 + $0x110] sm:$0xff] %vm214, 0.0
      %251 = vst.msk [vmem:[#allocation2 + $0x118] sm:$0x3] %vm217, 0.0
      %252 = vst.msk [vmem:[#allocation2 + $0x120] sm:$0xff] %vm214, 0.0
      %253 = vst.msk [vmem:[#allocation2 + $0x128] sm:$0xff] %vm214, 0.0
      %254 = vst.msk [vmem:[#allocation2 + $0x130] sm:$0x3] %vm217, 0.0
      %255 = vst.msk [vmem:[#allocation2 + $0x138] sm:$0xff] %vm214, 0.0
      %256 = vst.msk [vmem:[#allocation2 + $0x140] sm:$0xff] %vm214, 0.0
      %257 = vst.msk [vmem:[#allocation2 + $0x148] sm:$0x3] %vm217, 0.0
      %258 = vst.msk [vmem:[#allocation2 + $0x150] sm:$0xff] %vm214, 0.0
      %259 = vst.msk [vmem:[#allocation2 + $0x158] sm:$0xff] %vm214, 0.0
      %260 = vst.msk [vmem:[#allocation2 + $0x160] sm:$0x3] %vm217, 0.0
      %261 = vst.msk [vmem:[#allocation2 + $0x168] sm:$0xff] %vm214, 0.0
      %262 = vst.msk [vmem:[#allocation2 + $0x170] sm:$0xff] %vm214, 0.0
      %263 = vst.msk [vmem:[#allocation2 + $0x178] sm:$0x3] %vm217, 0.0
      %264 = vst.msk [vmem:[#allocation2 + $0x180] sm:$0xff] %vm214, 0.0
      %265 = vst.msk [vmem:[#allocation2 + $0x188] sm:$0xff] %vm214, 0.0
      %266 = vst.msk [vmem:[#allocation2 + $0x190] sm:$0x3] %vm217, 0.0
      %267 = vst.msk [vmem:[#allocation2 + $0x198] sm:$0xff] %vm214, 0.0
      %268 = vst.msk [vmem:[#allocation2 + $0x1a0] sm:$0xff] %vm214, 0.0
      %269 = vst.msk [vmem:[#allocation2 + $0x1a8] sm:$0x3] %vm217, 0.0
      %s270 = scalar_lea.vmem [#allocation2], 24
      %271 = vst.msk [vmem:[%s270 + $0x1] sm:$0xff] %vm214, %v182
      %272 = vst.msk [vmem:[%s270 + $0x9] sm:$0xff] %vm214, %v183
      %273 = vst.msk [vmem:[%s270 + $0x19] sm:$0xff] %vm214, %v184
      %274 = vst.msk [vmem:[%s270 + $0x21] sm:$0xff] %vm214, %v185
      %275 = vst.msk [vmem:[%s270 + $0x31] sm:$0xff] %vm214, %v186
      %276 = vst.msk [vmem:[%s270 + $0x39] sm:$0xff] %vm214, %v187
      %277 = vst.msk [vmem:[%s270 + $0x49] sm:$0xff] %vm214, %v188
      %278 = vst.msk [vmem:[%s270 + $0x51] sm:$0xff] %vm214, %v189
      %279 = vst.msk [vmem:[%s270 + $0x61] sm:$0xff] %vm214, %v190
      %280 = vst.msk [vmem:[%s270 + $0x69] sm:$0xff] %vm214, %v191
      %281 = vst.msk [vmem:[%s270 + $0x79] sm:$0xff] %vm214, %v192
      %282 = vst.msk [vmem:[%s270 + $0x81] sm:$0xff] %vm214, %v193
      %283 = vst.msk [vmem:[%s270 + $0x91] sm:$0xff] %vm214, %v194
      %284 = vst.msk [vmem:[%s270 + $0x99] sm:$0xff] %vm214, %v195
      %285 = vst.msk [vmem:[%s270 + $0xa9] sm:$0xff] %vm214, %v196
      %286 = vst.msk [vmem:[%s270 + $0xb1] sm:$0xff] %vm214, %v197
      %287 = vst.msk [vmem:[%s270 + $0xc1] sm:$0xff] %vm214, %v198
      %288 = vst.msk [vmem:[%s270 + $0xc9] sm:$0xff] %vm214, %v199
      %289 = vst.msk [vmem:[%s270 + $0xd9] sm:$0xff] %vm214, %v200
      %290 = vst.msk [vmem:[%s270 + $0xe1] sm:$0xff] %vm214, %v201
      %291 = vst.msk [vmem:[%s270 + $0xf1] sm:$0xff] %vm214, %v202
      %292 = vst.msk [vmem:[%s270 + $0xf9] sm:$0xff] %vm214, %v203
      %293 = vst.msk [vmem:[%s270 + $0x109] sm:$0xff] %vm214, %v204
      %294 = vst.msk [vmem:[%s270 + $0x111] sm:$0xff] %vm214, %v205
      %295 = vst.msk [vmem:[%s270 + $0x121] sm:$0xff] %vm214, %v206
      %296 = vst.msk [vmem:[%s270 + $0x129] sm:$0xff] %vm214, %v207
      %297 = vst.msk [vmem:[%s270 + $0x139] sm:$0xff] %vm214, %v208
      %298 = vst.msk [vmem:[%s270 + $0x141] sm:$0xff] %vm214, %v209
      %299 = vst.msk [vmem:[%s270 + $0x151] sm:$0xff] %vm214, %v210
      %300 = vst.msk [vmem:[%s270 + $0x159] sm:$0xff] %vm214, %v211
      %301 = vst.msk [vmem:[%s270 + $0x169] sm:$0xff] %vm214, %v212
      %302 = vst.msk [vmem:[%s270 + $0x171] sm:$0xff] %vm214, %v213
      %v303 = vld [vmem:[#allocation2] sm:$0xff]
      %v304 = vld [vmem:[#allocation2 + $0x8] sm:$0xff]
      %v305 = vld [vmem:[#allocation2 + $0x18] sm:$0xff]
      %v306 = vld [vmem:[#allocation2 + $0x20] sm:$0xff]
      %v307 = vld [vmem:[#allocation2 + $0x30] sm:$0xff]
      %v308 = vld [vmem:[#allocation2 + $0x38] sm:$0xff]
      %v309 = vld [vmem:[#allocation2 + $0x48] sm:$0xff]
      %v310 = vld [vmem:[#allocation2 + $0x50] sm:$0xff]
      %v311 = vld [vmem:[#allocation2 + $0x60] sm:$0xff]
      %v312 = vld [vmem:[#allocation2 + $0x68] sm:$0xff]
      %v313 = vld [vmem:[#allocation2 + $0x78] sm:$0xff]
      %v314 = vld [vmem:[#allocation2 + $0x80] sm:$0xff]
      %v315 = vld [vmem:[#allocation2 + $0x90] sm:$0xff]
      %v316 = vld [vmem:[#allocation2 + $0x98] sm:$0xff]
      %v317 = vld [vmem:[#allocation2 + $0xa8] sm:$0xff]
      %v318 = vld [vmem:[#allocation2 + $0xb0] sm:$0xff]
      %v319 = vld [vmem:[#allocation2 + $0xc0] sm:$0xff]
      %v320 = vld [vmem:[#allocation2 + $0xc8] sm:$0xff]
      %v321 = vld [vmem:[#allocation2 + $0xd8] sm:$0xff]
      %v322 = vld [vmem:[#allocation2 + $0xe0] sm:$0xff]
      %v323 = vld [vmem:[#allocation2 + $0xf0] sm:$0xff]
      %v324 = vld [vmem:[#allocation2 + $0xf8] sm:$0xff]
      %v325 = vld [vmem:[#allocation2 + $0x108] sm:$0xff]
      %v326 = vld [vmem:[#allocation2 + $0x110] sm:$0xff]
      %v327 = vld [vmem:[#allocation2 + $0x120] sm:$0xff]
      %v328 = vld [vmem:[#allocation2 + $0x128] sm:$0xff]
      %v329 = vld [vmem:[#allocation2 + $0x138] sm:$0xff]
      %v330 = vld [vmem:[#allocation2 + $0x140] sm:$0xff]
      %v331 = vld [vmem:[#allocation2 + $0x150] sm:$0xff]
      %v332 = vld [vmem:[#allocation2 + $0x158] sm:$0xff]
      %v333 = vld [vmem:[#allocation2 + $0x168] sm:$0xff]
      %v334 = vld [vmem:[#allocation2 + $0x170] sm:$0xff]
      %335 = vst.msk [vmem:[#allocation3] sm:$0xff] %vm214, %v303
      %336 = vst.msk [vmem:[#allocation3 + $0x8] sm:$0xff] %vm214, %v304
      %337 = vst.msk [vmem:[#allocation3 + $0x10] sm:$0xff] %vm214, %v305
      %338 = vst.msk [vmem:[#allocation3 + $0x18] sm:$0xff] %vm214, %v306
      %339 = vst.msk [vmem:[#allocation3 + $0x20] sm:$0xff] %vm214, %v307
      %340 = vst.msk [vmem:[#allocation3 + $0x28] sm:$0xff] %vm214, %v308
      %341 = vst.msk [vmem:[#allocation3 + $0x30] sm:$0xff] %vm214, %v309
      %342 = vst.msk [vmem:[#allocation3 + $0x38] sm:$0xff] %vm214, %v310
      %343 = vst.msk [vmem:[#allocation3 + $0x40] sm:$0xff] %vm214, %v311
      %344 = vst.msk [vmem:[#allocation3 + $0x48] sm:$0xff] %vm214, %v312
      %345 = vst.msk [vmem:[#allocation3 + $0x50] sm:$0xff] %vm214, %v313
      %346 = vst.msk [vmem:[#allocation3 + $0x58] sm:$0xff] %vm214, %v314
      %347 = vst.msk [vmem:[#allocation3 + $0x60] sm:$0xff] %vm214, %v315
      %348 = vst.msk [vmem:[#allocation3 + $0x68] sm:$0xff] %vm214, %v316
      %349 = vst.msk [vmem:[#allocation3 + $0x70] sm:$0xff] %vm214, %v317
      %350 = vst.msk [vmem:[#allocation3 + $0x78] sm:$0xff] %vm214, %v318
      %351 = vst.msk [vmem:[#allocation3 + $0x80] sm:$0xff] %vm214, %v319
      %352 = vst.msk [vmem:[#allocation3 + $0x88] sm:$0xff] %vm214, %v320
      %353 = vst.msk [vmem:[#allocation3 + $0x90] sm:$0xff] %vm214, %v321
      %354 = vst.msk [vmem:[#allocation3 + $0x98] sm:$0xff] %vm214, %v322
      %355 = vst.msk [vmem:[#allocation3 + $0xa0] sm:$0xff] %vm214, %v323
      %356 = vst.msk [vmem:[#allocation3 + $0xa8] sm:$0xff] %vm214, %v324
      %357 = vst.msk [vmem:[#allocation3 + $0xb0] sm:$0xff] %vm214, %v325
      %358 = vst.msk [vmem:[#allocation3 + $0xb8] sm:$0xff] %vm214, %v326
      %359 = vst.msk [vmem:[#allocation3 + $0xc0] sm:$0xff] %vm214, %v327
      %360 = vst.msk [vmem:[#allocation3 + $0xc8] sm:$0xff] %vm214, %v328
      %361 = vst.msk [vmem:[#allocation3 + $0xd0] sm:$0xff] %vm214, %v329
      %362 = vst.msk [vmem:[#allocation3 + $0xd8] sm:$0xff] %vm214, %v330
      %363 = vst.msk [vmem:[#allocation3 + $0xe0] sm:$0xff] %vm214, %v331
      %364 = vst.msk [vmem:[#allocation3 + $0xe8] sm:$0xff] %vm214, %v332
      %365 = vst.msk [vmem:[#allocation3 + $0xf0] sm:$0xff] %vm214, %v333
      %366 = vst.msk [vmem:[#allocation3 + $0xf8] sm:$0xff] %vm214, %v334
      %v367 = vld [vmem:[#allocation2 + $0x1] sm:$0xff]
      %v368 = vld [vmem:[#allocation2 + $0x9] sm:$0xff]
      %v369 = vld [vmem:[#allocation2 + $0x19] sm:$0xff]
      %v370 = vld [vmem:[#allocation2 + $0x21] sm:$0xff]
      %v371 = vld [vmem:[#allocation2 + $0x31] sm:$0xff]
      %v372 = vld [vmem:[#allocation2 + $0x39] sm:$0xff]
      %v373 = vld [vmem:[#allocation2 + $0x49] sm:$0xff]
      %v374 = vld [vmem:[#allocation2 + $0x51] sm:$0xff]
      %v375 = vld [vmem:[#allocation2 + $0x61] sm:$0xff]
      %v376 = vld [vmem:[#allocation2 + $0x69] sm:$0xff]
      %v377 = vld [vmem:[#allocation2 + $0x79] sm:$0xff]
      %v378 = vld [vmem:[#allocation2 + $0x81] sm:$0xff]
      %v379 = vld [vmem:[#allocation2 + $0x91] sm:$0xff]
      %v380 = vld [vmem:[#allocation2 + $0x99] sm:$0xff]
      %v381 = vld [vmem:[#allocation2 + $0xa9] sm:$0xff]
      %v382 = vld [vmem:[#allocation2 + $0xb1] sm:$0xff]
      %v383 = vld [vmem:[#allocation2 + $0xc1] sm:$0xff]
      %v384 = vld [vmem:[#allocation2 + $0xc9] sm:$0xff]
      %v385 = vld [vmem:[#allocation2 + $0xd9] sm:$0xff]
      %v386 = vld [vmem:[#allocation2 + $0xe1] sm:$0xff]
      %v387 = vld [vmem:[#allocation2 + $0xf1] sm:$0xff]
      %v388 = vld [vmem:[#allocation2 + $0xf9] sm:$0xff]
      %v389 = vld [vmem:[#allocation2 + $0x109] sm:$0xff]
      %v390 = vld [vmem:[#allocation2 + $0x111] sm:$0xff]
      %v391 = vld [vmem:[#allocation2 + $0x121] sm:$0xff]
      %v392 = vld [vmem:[#allocation2 + $0x129] sm:$0xff]
      %v393 = vld [vmem:[#allocation2 + $0x139] sm:$0xff]
      %v394 = vld [vmem:[#allocation2 + $0x141] sm:$0xff]
      %v395 = vld [vmem:[#allocation2 + $0x151] sm:$0xff]
      %v396 = vld [vmem:[#allocation2 + $0x159] sm:$0xff]
      %v397 = vld [vmem:[#allocation2 + $0x169] sm:$0xff]
      %v398 = vld [vmem:[#allocation2 + $0x171] sm:$0xff]
      %431 = vrot.lane.b32.xlu0 %v367, 4
      %v432 = vpop.permute.xlu0 %431
      %433 = vrot.lane.b32.xlu0 %v368, 4
      %v434 = vpop.permute.xlu0 %433
      %435 = vrot.lane.b32.xlu0 %v369, 4
      %v436 = vpop.permute.xlu0 %435
      %437 = vrot.lane.b32.xlu0 %v370, 4
      %v438 = vpop.permute.xlu0 %437
      %439 = vrot.lane.b32.xlu0 %v371, 4
      %v440 = vpop.permute.xlu0 %439
      %441 = vrot.lane.b32.xlu0 %v372, 4
      %v442 = vpop.permute.xlu0 %441
      %443 = vrot.lane.b32.xlu0 %v373, 4
      %v444 = vpop.permute.xlu0 %443
      %445 = vrot.lane.b32.xlu0 %v374, 4
      %v446 = vpop.permute.xlu0 %445
      %447 = vrot.lane.b32.xlu0 %v375, 4
      %v448 = vpop.permute.xlu0 %447
      %449 = vrot.lane.b32.xlu0 %v376, 4
      %v450 = vpop.permute.xlu0 %449
      %451 = vrot.lane.b32.xlu0 %v377, 4
      %v452 = vpop.permute.xlu0 %451
      %453 = vrot.lane.b32.xlu0 %v378, 4
      %v454 = vpop.permute.xlu0 %453
      %455 = vrot.lane.b32.xlu0 %v379, 4
      %v456 = vpop.permute.xlu0 %455
      %457 = vrot.lane.b32.xlu0 %v380, 4
      %v458 = vpop.permute.xlu0 %457
      %459 = vrot.lane.b32.xlu0 %v381, 4
      %v460 = vpop.permute.xlu0 %459
      %461 = vrot.lane.b32.xlu0 %v382, 4
      %v462 = vpop.permute.xlu0 %461
      %463 = vrot.lane.b32.xlu0 %v383, 4
      %v464 = vpop.permute.xlu0 %463
      %465 = vrot.lane.b32.xlu0 %v384, 4
      %v466 = vpop.permute.xlu0 %465
      %467 = vrot.lane.b32.xlu0 %v385, 4
      %v468 = vpop.permute.xlu0 %467
      %469 = vrot.lane.b32.xlu0 %v386, 4
      %v470 = vpop.permute.xlu0 %469
      %471 = vrot.lane.b32.xlu0 %v387, 4
      %v472 = vpop.permute.xlu0 %471
      %473 = vrot.lane.b32.xlu0 %v388, 4
      %v474 = vpop.permute.xlu0 %473
      %475 = vrot.lane.b32.xlu0 %v389, 4
      %v476 = vpop.permute.xlu0 %475
      %477 = vrot.lane.b32.xlu0 %v390, 4
      %v478 = vpop.permute.xlu0 %477
      %479 = vrot.lane.b32.xlu0 %v391, 4
      %v480 = vpop.permute.xlu0 %479
      %481 = vrot.lane.b32.xlu0 %v392, 4
      %v482 = vpop.permute.xlu0 %481
      %483 = vrot.lane.b32.xlu0 %v393, 4
      %v484 = vpop.permute.xlu0 %483
      %485 = vrot.lane.b32.xlu0 %v394, 4
      %v486 = vpop.permute.xlu0 %485
      %487 = vrot.lane.b32.xlu0 %v395, 4
      %v488 = vpop.permute.xlu0 %487
      %489 = vrot.lane.b32.xlu0 %v396, 4
      %v490 = vpop.permute.xlu0 %489
      %491 = vrot.lane.b32.xlu0 %v397, 4
      %v492 = vpop.permute.xlu0 %491
      %493 = vrot.lane.b32.xlu0 %v398, 4
      %v494 = vpop.permute.xlu0 %493
      %vm527 = vcmask 64544
      %528 = vst.msk [vmem:[#allocation3] sm:$0xff] %vm527, %v432
      %529 = vst.msk [vmem:[#allocation3 + $0x8] sm:$0xff] %vm527, %v434
      %530 = vst.msk [vmem:[#allocation3 + $0x10] sm:$0xff] %vm527, %v436
      %531 = vst.msk [vmem:[#allocation3 + $0x18] sm:$0xff] %vm527, %v438
      %532 = vst.msk [vmem:[#allocation3 + $0x20] sm:$0xff] %vm527, %v440
      %533 = vst.msk [vmem:[#allocation3 + $0x28] sm:$0xff] %vm527, %v442
      %534 = vst.msk [vmem:[#allocation3 + $0x30] sm:$0xff] %vm527, %v444
      %535 = vst.msk [vmem:[#allocation3 + $0x38] sm:$0xff] %vm527, %v446
      %536 = vst.msk [vmem:[#allocation3 + $0x40] sm:$0xff] %vm527, %v448
      %537 = vst.msk [vmem:[#allocation3 + $0x48] sm:$0xff] %vm527, %v450
      %538 = vst.msk [vmem:[#allocation3 + $0x50] sm:$0xff] %vm527, %v452
      %539 = vst.msk [vmem:[#allocation3 + $0x58] sm:$0xff] %vm527, %v454
      %540 = vst.msk [vmem:[#allocation3 + $0x60] sm:$0xff] %vm527, %v456
      %541 = vst.msk [vmem:[#allocation3 + $0x68] sm:$0xff] %vm527, %v458
      %542 = vst.msk [vmem:[#allocation3 + $0x70] sm:$0xff] %vm527, %v460
      %543 = vst.msk [vmem:[#allocation3 + $0x78] sm:$0xff] %vm527, %v462
      %544 = vst.msk [vmem:[#allocation3 + $0x80] sm:$0xff] %vm527, %v464
      %545 = vst.msk [vmem:[#allocation3 + $0x88] sm:$0xff] %vm527, %v466
      %546 = vst.msk [vmem:[#allocation3 + $0x90] sm:$0xff] %vm527, %v468
      %547 = vst.msk [vmem:[#allocation3 + $0x98] sm:$0xff] %vm527, %v470
      %548 = vst.msk [vmem:[#allocation3 + $0xa0] sm:$0xff] %vm527, %v472
      %549 = vst.msk [vmem:[#allocation3 + $0xa8] sm:$0xff] %vm527, %v474
      %550 = vst.msk [vmem:[#allocation3 + $0xb0] sm:$0xff] %vm527, %v476
      %551 = vst.msk [vmem:[#allocation3 + $0xb8] sm:$0xff] %vm527, %v478
      %552 = vst.msk [vmem:[#allocation3 + $0xc0] sm:$0xff] %vm527, %v480
      %553 = vst.msk [vmem:[#allocation3 + $0xc8] sm:$0xff] %vm527, %v482
      %554 = vst.msk [vmem:[#allocation3 + $0xd0] sm:$0xff] %vm527, %v484
      %555 = vst.msk [vmem:[#allocation3 + $0xd8] sm:$0xff] %vm527, %v486
      %556 = vst.msk [vmem:[#allocation3 + $0xe0] sm:$0xff] %vm527, %v488
      %557 = vst.msk [vmem:[#allocation3 + $0xe8] sm:$0xff] %vm527, %v490
      %558 = vst.msk [vmem:[#allocation3 + $0xf0] sm:$0xff] %vm527, %v492
      %559 = vst.msk [vmem:[#allocation3 + $0xf8] sm:$0xff] %vm527, %v494
      %v560 = vld [vmem:[#allocation2 + $0x2] sm:$0xff]
      %v561 = vld [vmem:[#allocation2 + $0xa] sm:$0xff]
      %v562 = vld [vmem:[#allocation2 + $0x1a] sm:$0xff]
      %v563 = vld [vmem:[#allocation2 + $0x22] sm:$0xff]
      %v564 = vld [vmem:[#allocation2 + $0x32] sm:$0xff]
      %v565 = vld [vmem:[#allocation2 + $0x3a] sm:$0xff]
      %v566 = vld [vmem:[#allocation2 + $0x4a] sm:$0xff]
      %v567 = vld [vmem:[#allocation2 + $0x52] sm:$0xff]
      %v568 = vld [vmem:[#allocation2 + $0x62] sm:$0xff]
      %v569 = vld [vmem:[#allocation2 + $0x6a] sm:$0xff]
      %v570 = vld [vmem:[#allocation2 + $0x7a] sm:$0xff]
      %v571 = vld [vmem:[#allocation2 + $0x82] sm:$0xff]
      %v572 = vld [vmem:[#allocation2 + $0x92] sm:$0xff]
      %v573 = vld [vmem:[#allocation2 + $0x9a] sm:$0xff]
      %v574 = vld [vmem:[#allocation2 + $0xaa] sm:$0xff]
      %v575 = vld [vmem:[#allocation2 + $0xb2] sm:$0xff]
      %v576 = vld [vmem:[#allocation2 + $0xc2] sm:$0xff]
      %v577 = vld [vmem:[#allocation2 + $0xca] sm:$0xff]
      %v578 = vld [vmem:[#allocation2 + $0xda] sm:$0xff]
      %v579 = vld [vmem:[#allocation2 + $0xe2] sm:$0xff]
      %v580 = vld [vmem:[#allocation2 + $0xf2] sm:$0xff]
      %v581 = vld [vmem:[#allocation2 + $0xfa] sm:$0xff]
      %v582 = vld [vmem:[#allocation2 + $0x10a] sm:$0xff]
      %v583 = vld [vmem:[#allocation2 + $0x112] sm:$0xff]
      %v584 = vld [vmem:[#allocation2 + $0x122] sm:$0xff]
      %v585 = vld [vmem:[#allocation2 + $0x12a] sm:$0xff]
      %v586 = vld [vmem:[#allocation2 + $0x13a] sm:$0xff]
      %v587 = vld [vmem:[#allocation2 + $0x142] sm:$0xff]
      %v588 = vld [vmem:[#allocation2 + $0x152] sm:$0xff]
      %v589 = vld [vmem:[#allocation2 + $0x15a] sm:$0xff]
      %v590 = vld [vmem:[#allocation2 + $0x16a] sm:$0xff]
      %v591 = vld [vmem:[#allocation2 + $0x172] sm:$0xff]
      %624 = vrot.lane.b32.xlu0 %v560, 8
      %v625 = vpop.permute.xlu0 %624
      %626 = vrot.lane.b32.xlu0 %v561, 8
      %v627 = vpop.permute.xlu0 %626
      %628 = vrot.lane.b32.xlu0 %v562, 8
      %v629 = vpop.permute.xlu0 %628
      %630 = vrot.lane.b32.xlu0 %v563, 8
      %v631 = vpop.permute.xlu0 %630
      %632 = vrot.lane.b32.xlu0 %v564, 8
      %v633 = vpop.permute.xlu0 %632
      %634 = vrot.lane.b32.xlu0 %v565, 8
      %v635 = vpop.permute.xlu0 %634
      %636 = vrot.lane.b32.xlu0 %v566, 8
      %v637 = vpop.permute.xlu0 %636
      %638 = vrot.lane.b32.xlu0 %v567, 8
      %v639 = vpop.permute.xlu0 %638
      %640 = vrot.lane.b32.xlu0 %v568, 8
      %v641 = vpop.permute.xlu0 %640
      %642 = vrot.lane.b32.xlu0 %v569, 8
      %v643 = vpop.permute.xlu0 %642
      %644 = vrot.lane.b32.xlu0 %v570, 8
      %v645 = vpop.permute.xlu0 %644
      %646 = vrot.lane.b32.xlu0 %v571, 8
      %v647 = vpop.permute.xlu0 %646
      %648 = vrot.lane.b32.xlu0 %v572, 8
      %v649 = vpop.permute.xlu0 %648
      %650 = vrot.lane.b32.xlu0 %v573, 8
      %v651 = vpop.permute.xlu0 %650
      %652 = vrot.lane.b32.xlu0 %v574, 8
      %v653 = vpop.permute.xlu0 %652
      %654 = vrot.lane.b32.xlu0 %v575, 8
      %v655 = vpop.permute.xlu0 %654
      %656 = vrot.lane.b32.xlu0 %v576, 8
      %v657 = vpop.permute.xlu0 %656
      %658 = vrot.lane.b32.xlu0 %v577, 8
      %v659 = vpop.permute.xlu0 %658
      %660 = vrot.lane.b32.xlu0 %v578, 8
      %v661 = vpop.permute.xlu0 %660
      %662 = vrot.lane.b32.xlu0 %v579, 8
      %v663 = vpop.permute.xlu0 %662
      %664 = vrot.lane.b32.xlu0 %v580, 8
      %v665 = vpop.permute.xlu0 %664
      %666 = vrot.lane.b32.xlu0 %v581, 8
      %v667 = vpop.permute.xlu0 %666
      %668 = vrot.lane.b32.xlu0 %v582, 8
      %v669 = vpop.permute.xlu0 %668
      %670 = vrot.lane.b32.xlu0 %v583, 8
      %v671 = vpop.permute.xlu0 %670
      %672 = vrot.lane.b32.xlu0 %v584, 8
      %v673 = vpop.permute.xlu0 %672
      %674 = vrot.lane.b32.xlu0 %v585, 8
      %v675 = vpop.permute.xlu0 %674
      %676 = vrot.lane.b32.xlu0 %v586, 8
      %v677 = vpop.permute.xlu0 %676
      %678 = vrot.lane.b32.xlu0 %v587, 8
      %v679 = vpop.permute.xlu0 %678
      %680 = vrot.lane.b32.xlu0 %v588, 8
      %v681 = vpop.permute.xlu0 %680
      %682 = vrot.lane.b32.xlu0 %v589, 8
      %v683 = vpop.permute.xlu0 %682
      %684 = vrot.lane.b32.xlu0 %v590, 8
      %v685 = vpop.permute.xlu0 %684
      %686 = vrot.lane.b32.xlu0 %v591, 8
      %v687 = vpop.permute.xlu0 %686
      %vm720 = vcmask 97344
      %721 = vst.msk [vmem:[#allocation3] sm:$0xff] %vm720, %v625
      %722 = vst.msk [vmem:[#allocation3 + $0x8] sm:$0xff] %vm720, %v627
      %723 = vst.msk [vmem:[#allocation3 + $0x10] sm:$0xff] %vm720, %v629
      %724 = vst.msk [vmem:[#allocation3 + $0x18] sm:$0xff] %vm720, %v631
      %725 = vst.msk [vmem:[#allocation3 + $0x20] sm:$0xff] %vm720, %v633
      %726 = vst.msk [vmem:[#allocation3 + $0x28] sm:$0xff] %vm720, %v635
      %727 = vst.msk [vmem:[#allocation3 + $0x30] sm:$0xff] %vm720, %v637
      %728 = vst.msk [vmem:[#allocation3 + $0x38] sm:$0xff] %vm720, %v639
      %729 = vst.msk [vmem:[#allocation3 + $0x40] sm:$0xff] %vm720, %v641
      %730 = vst.msk [vmem:[#allocation3 + $0x48] sm:$0xff] %vm720, %v643
      %731 = vst.msk [vmem:[#allocation3 + $0x50] sm:$0xff] %vm720, %v645
      %732 = vst.msk [vmem:[#allocation3 + $0x58] sm:$0xff] %vm720, %v647
      %733 = vst.msk [vmem:[#allocation3 + $0x60] sm:$0xff] %vm720, %v649
      %734 = vst.msk [vmem:[#allocation3 + $0x68] sm:$0xff] %vm720, %v651
      %735 = vst.msk [vmem:[#allocation3 + $0x70] sm:$0xff] %vm720, %v653
      %736 = vst.msk [vmem:[#allocation3 + $0x78] sm:$0xff] %vm720, %v655
      %737 = vst.msk [vmem:[#allocation3 + $0x80] sm:$0xff] %vm720, %v657
      %738 = vst.msk [vmem:[#allocation3 + $0x88] sm:$0xff] %vm720, %v659
      %739 = vst.msk [vmem:[#allocation3 + $0x90] sm:$0xff] %vm720, %v661
      %740 = vst.msk [vmem:[#allocation3 + $0x98] sm:$0xff] %vm720, %v663
      %741 = vst.msk [vmem:[#allocation3 + $0xa0] sm:$0xff] %vm720, %v665
      %742 = vst.msk [vmem:[#allocation3 + $0xa8] sm:$0xff] %vm720, %v667
      %743 = vst.msk [vmem:[#allocation3 + $0xb0] sm:$0xff] %vm720, %v669
      %744 = vst.msk [vmem:[#allocation3 + $0xb8] sm:$0xff] %vm720, %v671
      %745 = vst.msk [vmem:[#allocation3 + $0xc0] sm:$0xff] %vm720, %v673
      %746 = vst.msk [vmem:[#allocation3 + $0xc8] sm:$0xff] %vm720, %v675
      %747 = vst.msk [vmem:[#allocation3 + $0xd0] sm:$0xff] %vm720, %v677
      %748 = vst.msk [vmem:[#allocation3 + $0xd8] sm:$0xff] %vm720, %v679
      %749 = vst.msk [vmem:[#allocation3 + $0xe0] sm:$0xff] %vm720, %v681
      %750 = vst.msk [vmem:[#allocation3 + $0xe8] sm:$0xff] %vm720, %v683
      %751 = vst.msk [vmem:[#allocation3 + $0xf0] sm:$0xff] %vm720, %v685
      %752 = vst.msk [vmem:[#allocation3 + $0xf8] sm:$0xff] %vm720, %v687
      %v753 = vld [vmem:[%s270] sm:$0xff]
      %v754 = vld [vmem:[%s270 + $0x8] sm:$0xff]
      %v755 = vld [vmem:[%s270 + $0x18] sm:$0xff]
      %v756 = vld [vmem:[%s270 + $0x20] sm:$0xff]
      %v757 = vld [vmem:[%s270 + $0x30] sm:$0xff]
      %v758 = vld [vmem:[%s270 + $0x38] sm:$0xff]
      %v759 = vld [vmem:[%s270 + $0x48] sm:$0xff]
      %v760 = vld [vmem:[%s270 + $0x50] sm:$0xff]
      %v761 = vld [vmem:[%s270 + $0x60] sm:$0xff]
      %v762 = vld [vmem:[%s270 + $0x68] sm:$0xff]
      %v763 = vld [vmem:[%s270 + $0x78] sm:$0xff]
      %v764 = vld [vmem:[%s270 + $0x80] sm:$0xff]
      %v765 = vld [vmem:[%s270 + $0x90] sm:$0xff]
      %v766 = vld [vmem:[%s270 + $0x98] sm:$0xff]
      %v767 = vld [vmem:[%s270 + $0xa8] sm:$0xff]
      %v768 = vld [vmem:[%s270 + $0xb0] sm:$0xff]
      %v769 = vld [vmem:[%s270 + $0xc0] sm:$0xff]
      %v770 = vld [vmem:[%s270 + $0xc8] sm:$0xff]
      %v771 = vld [vmem:[%s270 + $0xd8] sm:$0xff]
      %v772 = vld [vmem:[%s270 + $0xe0] sm:$0xff]
      %v773 = vld [vmem:[%s270 + $0xf0] sm:$0xff]
      %v774 = vld [vmem:[%s270 + $0xf8] sm:$0xff]
      %v775 = vld [vmem:[%s270 + $0x108] sm:$0xff]
      %v776 = vld [vmem:[%s270 + $0x110] sm:$0xff]
      %v777 = vld [vmem:[%s270 + $0x120] sm:$0xff]
      %v778 = vld [vmem:[%s270 + $0x128] sm:$0xff]
      %v779 = vld [vmem:[%s270 + $0x138] sm:$0xff]
      %v780 = vld [vmem:[%s270 + $0x140] sm:$0xff]
      %v781 = vld [vmem:[%s270 + $0x150] sm:$0xff]
      %v782 = vld [vmem:[%s270 + $0x158] sm:$0xff]
      %v783 = vld [vmem:[%s270 + $0x168] sm:$0xff]
      %v784 = vld [vmem:[%s270 + $0x170] sm:$0xff]
      %817 = vrot.lane.b32.xlu0 %v753, 12
      %v818 = vpop.permute.xlu0 %817
      %819 = vrot.lane.b32.xlu0 %v754, 12
      %v820 = vpop.permute.xlu0 %819
      %821 = vrot.lane.b32.xlu0 %v755, 12
      %v822 = vpop.permute.xlu0 %821
      %823 = vrot.lane.b32.xlu0 %v756, 12
      %v824 = vpop.permute.xlu0 %823
      %825 = vrot.lane.b32.xlu0 %v757, 12
      %v826 = vpop.permute.xlu0 %825
      %827 = vrot.lane.b32.xlu0 %v758, 12
      %v828 = vpop.permute.xlu0 %827
      %829 = vrot.lane.b32.xlu0 %v759, 12
      %v830 = vpop.permute.xlu0 %829
      %831 = vrot.lane.b32.xlu0 %v760, 12
      %v832 = vpop.permute.xlu0 %831
      %833 = vrot.lane.b32.xlu0 %v761, 12
      %v834 = vpop.permute.xlu0 %833
      %835 = vrot.lane.b32.xlu0 %v762, 12
      %v836 = vpop.permute.xlu0 %835
      %837 = vrot.lane.b32.xlu0 %v763, 12
      %v838 = vpop.permute.xlu0 %837
      %839 = vrot.lane.b32.xlu0 %v764, 12
      %v840 = vpop.permute.xlu0 %839
      %841 = vrot.lane.b32.xlu0 %v765, 12
      %v842 = vpop.permute.xlu0 %841
      %843 = vrot.lane.b32.xlu0 %v766, 12
      %v844 = vpop.permute.xlu0 %843
      %845 = vrot.lane.b32.xlu0 %v767, 12
      %v846 = vpop.permute.xlu0 %845
      %847 = vrot.lane.b32.xlu0 %v768, 12
      %v848 = vpop.permute.xlu0 %847
      %849 = vrot.lane.b32.xlu0 %v769, 12
      %v850 = vpop.permute.xlu0 %849
      %851 = vrot.lane.b32.xlu0 %v770, 12
      %v852 = vpop.permute.xlu0 %851
      %853 = vrot.lane.b32.xlu0 %v771, 12
      %v854 = vpop.permute.xlu0 %853
      %855 = vrot.lane.b32.xlu0 %v772, 12
      %v856 = vpop.permute.xlu0 %855
      %857 = vrot.lane.b32.xlu0 %v773, 12
      %v858 = vpop.permute.xlu0 %857
      %859 = vrot.lane.b32.xlu0 %v774, 12
      %v860 = vpop.permute.xlu0 %859
      %861 = vrot.lane.b32.xlu0 %v775, 12
      %v862 = vpop.permute.xlu0 %861
      %863 = vrot.lane.b32.xlu0 %v776, 12
      %v864 = vpop.permute.xlu0 %863
      %865 = vrot.lane.b32.xlu0 %v777, 12
      %v866 = vpop.permute.xlu0 %865
      %867 = vrot.lane.b32.xlu0 %v778, 12
      %v868 = vpop.permute.xlu0 %867
      %869 = vrot.lane.b32.xlu0 %v779, 12
      %v870 = vpop.permute.xlu0 %869
      %871 = vrot.lane.b32.xlu0 %v780, 12
      %v872 = vpop.permute.xlu0 %871
      %873 = vrot.lane.b32.xlu0 %v781, 12
      %v874 = vpop.permute.xlu0 %873
      %875 = vrot.lane.b32.xlu0 %v782, 12
      %v876 = vpop.permute.xlu0 %875
      %877 = vrot.lane.b32.xlu0 %v783, 12
      %v878 = vpop.permute.xlu0 %877
      %879 = vrot.lane.b32.xlu0 %v784, 12
      %v880 = vpop.permute.xlu0 %879
      %vm913 = vcmask 130144
      %914 = vst.msk [vmem:[#allocation3] sm:$0xff] %vm913, %v818
      %915 = vst.msk [vmem:[#allocation3 + $0x8] sm:$0xff] %vm913, %v820
      %916 = vst.msk [vmem:[#allocation3 + $0x10] sm:$0xff] %vm913, %v822
      %917 = vst.msk [vmem:[#allocation3 + $0x18] sm:$0xff] %vm913, %v824
      %918 = vst.msk [vmem:[#allocation3 + $0x20] sm:$0xff] %vm913, %v826
      %919 = vst.msk [vmem:[#allocation3 + $0x28] sm:$0xff] %vm913, %v828
      %920 = vst.msk [vmem:[#allocation3 + $0x30] sm:$0xff] %vm913, %v830
      %921 = vst.msk [vmem:[#allocation3 + $0x38] sm:$0xff] %vm913, %v832
      %922 = vst.msk [vmem:[#allocation3 + $0x40] sm:$0xff] %vm913, %v834
      %923 = vst.msk [vmem:[#allocation3 + $0x48] sm:$0xff] %vm913, %v836
      %924 = vst.msk [vmem:[#allocation3 + $0x50] sm:$0xff] %vm913, %v838
      %925 = vst.msk [vmem:[#allocation3 + $0x58] sm:$0xff] %vm913, %v840
      %926 = vst.msk [vmem:[#allocation3 + $0x60] sm:$0xff] %vm913, %v842
      %927 = vst.msk [vmem:[#allocation3 + $0x68] sm:$0xff] %vm913, %v844
      %928 = vst.msk [vmem:[#allocation3 + $0x70] sm:$0xff] %vm913, %v846
      %929 = vst.msk [vmem:[#allocation3 + $0x78] sm:$0xff] %vm913, %v848
      %930 = vst.msk [vmem:[#allocation3 + $0x80] sm:$0xff] %vm913, %v850
      %931 = vst.msk [vmem:[#allocation3 + $0x88] sm:$0xff] %vm913, %v852
      %932 = vst.msk [vmem:[#allocation3 + $0x90] sm:$0xff] %vm913, %v854
      %933 = vst.msk [vmem:[#allocation3 + $0x98] sm:$0xff] %vm913, %v856
      %934 = vst.msk [vmem:[#allocation3 + $0xa0] sm:$0xff] %vm913, %v858
      %935 = vst.msk [vmem:[#allocation3 + $0xa8] sm:$0xff] %vm913, %v860
      %936 = vst.msk [vmem:[#allocation3 + $0xb0] sm:$0xff] %vm913, %v862
      %937 = vst.msk [vmem:[#allocation3 + $0xb8] sm:$0xff] %vm913, %v864
      %938 = vst.msk [vmem:[#allocation3 + $0xc0] sm:$0xff] %vm913, %v866
      %939 = vst.msk [vmem:[#allocation3 + $0xc8] sm:$0xff] %vm913, %v868
      %940 = vst.msk [vmem:[#allocation3 + $0xd0] sm:$0xff] %vm913, %v870
      %941 = vst.msk [vmem:[#allocation3 + $0xd8] sm:$0xff] %vm913, %v872
      %942 = vst.msk [vmem:[#allocation3 + $0xe0] sm:$0xff] %vm913, %v874
      %943 = vst.msk [vmem:[#allocation3 + $0xe8] sm:$0xff] %vm913, %v876
      %944 = vst.msk [vmem:[#allocation3 + $0xf0] sm:$0xff] %vm913, %v878
      %945 = vst.msk [vmem:[#allocation3 + $0xf8] sm:$0xff] %vm913, %v880
      %v946 = vld [vmem:[%s270 + $0x1] sm:$0xff]
      %v947 = vld [vmem:[%s270 + $0x9] sm:$0xff]
      %v948 = vld [vmem:[%s270 + $0x19] sm:$0xff]
      %v949 = vld [vmem:[%s270 + $0x21] sm:$0xff]
      %v950 = vld [vmem:[%s270 + $0x31] sm:$0xff]
      %v951 = vld [vmem:[%s270 + $0x39] sm:$0xff]
      %v952 = vld [vmem:[%s270 + $0x49] sm:$0xff]
      %v953 = vld [vmem:[%s270 + $0x51] sm:$0xff]
      %v954 = vld [vmem:[%s270 + $0x61] sm:$0xff]
      %v955 = vld [vmem:[%s270 + $0x69] sm:$0xff]
      %v956 = vld [vmem:[%s270 + $0x79] sm:$0xff]
      %v957 = vld [vmem:[%s270 + $0x81] sm:$0xff]
      %v958 = vld [vmem:[%s270 + $0x91] sm:$0xff]
      %v959 = vld [vmem:[%s270 + $0x99] sm:$0xff]
      %v960 = vld [vmem:[%s270 + $0xa9] sm:$0xff]
      %v961 = vld [vmem:[%s270 + $0xb1] sm:$0xff]
      %v962 = vld [vmem:[%s270 + $0xc1] sm:$0xff]
      %v963 = vld [vmem:[%s270 + $0xc9] sm:$0xff]
      %v964 = vld [vmem:[%s270 + $0xd9] sm:$0xff]
      %v965 = vld [vmem:[%s270 + $0xe1] sm:$0xff]
      %v966 = vld [vmem:[%s270 + $0xf1] sm:$0xff]
      %v967 = vld [vmem:[%s270 + $0xf9] sm:$0xff]
      %v968 = vld [vmem:[%s270 + $0x109] sm:$0xff]
      %v969 = vld [vmem:[%s270 + $0x111] sm:$0xff]
      %v970 = vld [vmem:[%s270 + $0x121] sm:$0xff]
      %v971 = vld [vmem:[%s270 + $0x129] sm:$0xff]
      %v972 = vld [vmem:[%s270 + $0x139] sm:$0xff]
      %v973 = vld [vmem:[%s270 + $0x141] sm:$0xff]
      %v974 = vld [vmem:[%s270 + $0x151] sm:$0xff]
      %v975 = vld [vmem:[%s270 + $0x159] sm:$0xff]
      %v976 = vld [vmem:[%s270 + $0x169] sm:$0xff]
      %v977 = vld [vmem:[%s270 + $0x171] sm:$0xff]
      %1010 = vrot.lane.b32.xlu0 %v946, 16
      %v1011 = vpop.permute.xlu0 %1010
      %1012 = vrot.lane.b32.xlu0 %v947, 16
      %v1013 = vpop.permute.xlu0 %1012
      %1014 = vrot.lane.b32.xlu0 %v948, 16
      %v1015 = vpop.permute.xlu0 %1014
      %1016 = vrot.lane.b32.xlu0 %v949, 16
      %v1017 = vpop.permute.xlu0 %1016
      %1018 = vrot.lane.b32.xlu0 %v950, 16
      %v1019 = vpop.permute.xlu0 %1018
      %1020 = vrot.lane.b32.xlu0 %v951, 16
      %v1021 = vpop.permute.xlu0 %1020
      %1022 = vrot.lane.b32.xlu0 %v952, 16
      %v1023 = vpop.permute.xlu0 %1022
      %1024 = vrot.lane.b32.xlu0 %v953, 16
      %v1025 = vpop.permute.xlu0 %1024
      %1026 = vrot.lane.b32.xlu0 %v954, 16
      %v1027 = vpop.permute.xlu0 %1026
      %1028 = vrot.lane.b32.xlu0 %v955, 16
      %v1029 = vpop.permute.xlu0 %1028
      %1030 = vrot.lane.b32.xlu0 %v956, 16
      %v1031 = vpop.permute.xlu0 %1030
      %1032 = vrot.lane.b32.xlu0 %v957, 16
      %v1033 = vpop.permute.xlu0 %1032
      %1034 = vrot.lane.b32.xlu0 %v958, 16
      %v1035 = vpop.permute.xlu0 %1034
      %1036 = vrot.lane.b32.xlu0 %v959, 16
      %v1037 = vpop.permute.xlu0 %1036
      %1038 = vrot.lane.b32.xlu0 %v960, 16
      %v1039 = vpop.permute.xlu0 %1038
      %1040 = vrot.lane.b32.xlu0 %v961, 16
      %v1041 = vpop.permute.xlu0 %1040
      %1042 = vrot.lane.b32.xlu0 %v962, 16
      %v1043 = vpop.permute.xlu0 %1042
      %1044 = vrot.lane.b32.xlu0 %v963, 16
      %v1045 = vpop.permute.xlu0 %1044
      %1046 = vrot.lane.b32.xlu0 %v964, 16
      %v1047 = vpop.permute.xlu0 %1046
      %1048 = vrot.lane.b32.xlu0 %v965, 16
      %v1049 = vpop.permute.xlu0 %1048
      %1050 = vrot.lane.b32.xlu0 %v966, 16
      %v1051 = vpop.permute.xlu0 %1050
      %1052 = vrot.lane.b32.xlu0 %v967, 16
      %v1053 = vpop.permute.xlu0 %1052
      %1054 = vrot.lane.b32.xlu0 %v968, 16
      %v1055 = vpop.permute.xlu0 %1054
      %1056 = vrot.lane.b32.xlu0 %v969, 16
      %v1057 = vpop.permute.xlu0 %1056
      %1058 = vrot.lane.b32.xlu0 %v970, 16
      %v1059 = vpop.permute.xlu0 %1058
      %1060 = vrot.lane.b32.xlu0 %v971, 16
      %v1061 = vpop.permute.xlu0 %1060
      %1062 = vrot.lane.b32.xlu0 %v972, 16
      %v1063 = vpop.permute.xlu0 %1062
      %1064 = vrot.lane.b32.xlu0 %v973, 16
      %v1065 = vpop.permute.xlu0 %1064
      %1066 = vrot.lane.b32.xlu0 %v974, 16
      %v1067 = vpop.permute.xlu0 %1066
      %1068 = vrot.lane.b32.xlu0 %v975, 16
      %v1069 = vpop.permute.xlu0 %1068
      %1070 = vrot.lane.b32.xlu0 %v976, 16
      %v1071 = vpop.permute.xlu0 %1070
      %1072 = vrot.lane.b32.xlu0 %v977, 16
      %v1073 = vpop.permute.xlu0 %1072
      %vm1106 = vcmask 162944
      %1107 = vst.msk [vmem:[#allocation3] sm:$0xff] %vm1106, %v1011
      %1108 = vst.msk [vmem:[#allocation3 + $0x8] sm:$0xff] %vm1106, %v1013
      %1109 = vst.msk [vmem:[#allocation3 + $0x10] sm:$0xff] %vm1106, %v1015
      %1110 = vst.msk [vmem:[#allocation3 + $0x18] sm:$0xff] %vm1106, %v1017
      %1111 = vst.msk [vmem:[#allocation3 + $0x20] sm:$0xff] %vm1106, %v1019
      %1112 = vst.msk [vmem:[#allocation3 + $0x28] sm:$0xff] %vm1106, %v1021
      %1113 = vst.msk [vmem:[#allocation3 + $0x30] sm:$0xff] %vm1106, %v1023
      %1114 = vst.msk [vmem:[#allocation3 + $0x38] sm:$0xff] %vm1106, %v1025
      %1115 = vst.msk [vmem:[#allocation3 + $0x40] sm:$0xff] %vm1106, %v1027
      %1116 = vst.msk [vmem:[#allocation3 + $0x48] sm:$0xff] %vm1106, %v1029
      %1117 = vst.msk [vmem:[#allocation3 + $0x50] sm:$0xff] %vm1106, %v1031
      %1118 = vst.msk [vmem:[#allocation3 + $0x58] sm:$0xff] %vm1106, %v1033
      %1119 = vst.msk [vmem:[#allocation3 + $0x60] sm:$0xff] %vm1106, %v1035
      %1120 = vst.msk [vmem:[#allocation3 + $0x68] sm:$0xff] %vm1106, %v1037
      %1121 = vst.msk [vmem:[#allocation3 + $0x70] sm:$0xff] %vm1106, %v1039
      %1122 = vst.msk [vmem:[#allocation3 + $0x78] sm:$0xff] %vm1106, %v1041
      %1123 = vst.msk [vmem:[#allocation3 + $0x80] sm:$0xff] %vm1106, %v1043
      %1124 = vst.msk [vmem:[#allocation3 + $0x88] sm:$0xff] %vm1106, %v1045
      %1125 = vst.msk [vmem:[#allocation3 + $0x90] sm:$0xff] %vm1106, %v1047
      %1126 = vst.msk [vmem:[#allocation3 + $0x98] sm:$0xff] %vm1106, %v1049
      %1127 = vst.msk [vmem:[#allocation3 + $0xa0] sm:$0xff] %vm1106, %v1051
      %1128 = vst.msk [vmem:[#allocation3 + $0xa8] sm:$0xff] %vm1106, %v1053
      %1129 = vst.msk [vmem:[#allocation3 + $0xb0] sm:$0xff] %vm1106, %v1055
      %1130 = vst.msk [vmem:[#allocation3 + $0xb8] sm:$0xff] %vm1106, %v1057
      %1131 = vst.msk [vmem:[#allocation3 + $0xc0] sm:$0xff] %vm1106, %v1059
      %1132 = vst.msk [vmem:[#allocation3 + $0xc8] sm:$0xff] %vm1106, %v1061
      %1133 = vst.msk [vmem:[#allocation3 + $0xd0] sm:$0xff] %vm1106, %v1063
      %1134 = vst.msk [vmem:[#allocation3 + $0xd8] sm:$0xff] %vm1106, %v1065
      %1135 = vst.msk [vmem:[#allocation3 + $0xe0] sm:$0xff] %vm1106, %v1067
      %1136 = vst.msk [vmem:[#allocation3 + $0xe8] sm:$0xff] %vm1106, %v1069
      %1137 = vst.msk [vmem:[#allocation3 + $0xf0] sm:$0xff] %vm1106, %v1071
      %1138 = vst.msk [vmem:[#allocation3 + $0xf8] sm:$0xff] %vm1106, %v1073
      %v1139 = vld [vmem:[%s270 + $0x2] sm:$0xff]
      %v1140 = vld [vmem:[%s270 + $0xa] sm:$0xff]
      %v1141 = vld [vmem:[%s270 + $0x1a] sm:$0xff]
      %v1142 = vld [vmem:[%s270 + $0x22] sm:$0xff]
      %v1143 = vld [vmem:[%s270 + $0x32] sm:$0xff]
      %v1144 = vld [vmem:[%s270 + $0x3a] sm:$0xff]
      %v1145 = vld [vmem:[%s270 + $0x4a] sm:$0xff]
      %v1146 = vld [vmem:[%s270 + $0x52] sm:$0xff]
      %v1147 = vld [vmem:[%s270 + $0x62] sm:$0xff]
      %v1148 = vld [vmem:[%s270 + $0x6a] sm:$0xff]
      %v1149 = vld [vmem:[%s270 + $0x7a] sm:$0xff]
      %v1150 = vld [vmem:[%s270 + $0x82] sm:$0xff]
      %v1151 = vld [vmem:[%s270 + $0x92] sm:$0xff]
      %v1152 = vld [vmem:[%s270 + $0x9a] sm:$0xff]
      %v1153 = vld [vmem:[%s270 + $0xaa] sm:$0xff]
      %v1154 = vld [vmem:[%s270 + $0xb2] sm:$0xff]
      %v1155 = vld [vmem:[%s270 + $0xc2] sm:$0xff]
      %v1156 = vld [vmem:[%s270 + $0xca] sm:$0xff]
      %v1157 = vld [vmem:[%s270 + $0xda] sm:$0xff]
      %v1158 = vld [vmem:[%s270 + $0xe2] sm:$0xff]
      %v1159 = vld [vmem:[%s270 + $0xf2] sm:$0xff]
      %v1160 = vld [vmem:[%s270 + $0xfa] sm:$0xff]
      %v1161 = vld [vmem:[%s270 + $0x10a] sm:$0xff]
      %v1162 = vld [vmem:[%s270 + $0x112] sm:$0xff]
      %v1163 = vld [vmem:[%s270 + $0x122] sm:$0xff]
      %v1164 = vld [vmem:[%s270 + $0x12a] sm:$0xff]
      %v1165 = vld [vmem:[%s270 + $0x13a] sm:$0xff]
      %v1166 = vld [vmem:[%s270 + $0x142] sm:$0xff]
      %v1167 = vld [vmem:[%s270 + $0x152] sm:$0xff]
      %v1168 = vld [vmem:[%s270 + $0x15a] sm:$0xff]
      %v1169 = vld [vmem:[%s270 + $0x16a] sm:$0xff]
      %v1170 = vld [vmem:[%s270 + $0x172] sm:$0xff]
      %1203 = vrot.lane.b32.xlu0 %v1139, 20
      %v1204 = vpop.permute.xlu0 %1203
      %1205 = vrot.lane.b32.xlu0 %v1140, 20
      %v1206 = vpop.permute.xlu0 %1205
      %1207 = vrot.lane.b32.xlu0 %v1141, 20
      %v1208 = vpop.permute.xlu0 %1207
      %1209 = vrot.lane.b32.xlu0 %v1142, 20
      %v1210 = vpop.permute.xlu0 %1209
      %1211 = vrot.lane.b32.xlu0 %v1143, 20
      %v1212 = vpop.permute.xlu0 %1211
      %1213 = vrot.lane.b32.xlu0 %v1144, 20
      %v1214 = vpop.permute.xlu0 %1213
      %1215 = vrot.lane.b32.xlu0 %v1145, 20
      %v1216 = vpop.permute.xlu0 %1215
      %1217 = vrot.lane.b32.xlu0 %v1146, 20
      %v1218 = vpop.permute.xlu0 %1217
      %1219 = vrot.lane.b32.xlu0 %v1147, 20
      %v1220 = vpop.permute.xlu0 %1219
      %1221 = vrot.lane.b32.xlu0 %v1148, 20
      %v1222 = vpop.permute.xlu0 %1221
      %1223 = vrot.lane.b32.xlu0 %v1149, 20
      %v1224 = vpop.permute.xlu0 %1223
      %1225 = vrot.lane.b32.xlu0 %v1150, 20
      %v1226 = vpop.permute.xlu0 %1225
      %1227 = vrot.lane.b32.xlu0 %v1151, 20
      %v1228 = vpop.permute.xlu0 %1227
      %1229 = vrot.lane.b32.xlu0 %v1152, 20
      %v1230 = vpop.permute.xlu0 %1229
      %1231 = vrot.lane.b32.xlu0 %v1153, 20
      %v1232 = vpop.permute.xlu0 %1231
      %1233 = vrot.lane.b32.xlu0 %v1154, 20
      %v1234 = vpop.permute.xlu0 %1233
      %1235 = vrot.lane.b32.xlu0 %v1155, 20
      %v1236 = vpop.permute.xlu0 %1235
      %1237 = vrot.lane.b32.xlu0 %v1156, 20
      %v1238 = vpop.permute.xlu0 %1237
      %1239 = vrot.lane.b32.xlu0 %v1157, 20
      %v1240 = vpop.permute.xlu0 %1239
      %1241 = vrot.lane.b32.xlu0 %v1158, 20
      %v1242 = vpop.permute.xlu0 %1241
      %1243 = vrot.lane.b32.xlu0 %v1159, 20
      %v1244 = vpop.permute.xlu0 %1243
      %1245 = vrot.lane.b32.xlu0 %v1160, 20
      %v1246 = vpop.permute.xlu0 %1245
      %1247 = vrot.lane.b32.xlu0 %v1161, 20
      %v1248 = vpop.permute.xlu0 %1247
      %1249 = vrot.lane.b32.xlu0 %v1162, 20
      %v1250 = vpop.permute.xlu0 %1249
      %1251 = vrot.lane.b32.xlu0 %v1163, 20
      %v1252 = vpop.permute.xlu0 %1251
      %1253 = vrot.lane.b32.xlu0 %v1164, 20
      %v1254 = vpop.permute.xlu0 %1253
      %1255 = vrot.lane.b32.xlu0 %v1165, 20
      %v1256 = vpop.permute.xlu0 %1255
      %1257 = vrot.lane.b32.xlu0 %v1166, 20
      %v1258 = vpop.permute.xlu0 %1257
      %1259 = vrot.lane.b32.xlu0 %v1167, 20
      %v1260 = vpop.permute.xlu0 %1259
      %1261 = vrot.lane.b32.xlu0 %v1168, 20
      %v1262 = vpop.permute.xlu0 %1261
      %1263 = vrot.lane.b32.xlu0 %v1169, 20
      %v1264 = vpop.permute.xlu0 %1263
      %1265 = vrot.lane.b32.xlu0 %v1170, 20
      %v1266 = vpop.permute.xlu0 %1265
      %vm1299 = vcmask 195744
      %1300 = vst.msk [vmem:[#allocation3] sm:$0xff] %vm1299, %v1204
      %1301 = vst.msk [vmem:[#allocation3 + $0x8] sm:$0xff] %vm1299, %v1206
      %1302 = vst.msk [vmem:[#allocation3 + $0x10] sm:$0xff] %vm1299, %v1208
      %1303 = vst.msk [vmem:[#allocation3 + $0x18] sm:$0xff] %vm1299, %v1210
      %1304 = vst.msk [vmem:[#allocation3 + $0x20] sm:$0xff] %vm1299, %v1212
      %1305 = vst.msk [vmem:[#allocation3 + $0x28] sm:$0xff] %vm1299, %v1214
      %1306 = vst.msk [vmem:[#allocation3 + $0x30] sm:$0xff] %vm1299, %v1216
      %1307 = vst.msk [vmem:[#allocation3 + $0x38] sm:$0xff] %vm1299, %v1218
      %1308 = vst.msk [vmem:[#allocation3 + $0x40] sm:$0xff] %vm1299, %v1220
      %1309 = vst.msk [vmem:[#allocation3 + $0x48] sm:$0xff] %vm1299, %v1222
      %1310 = vst.msk [vmem:[#allocation3 + $0x50] sm:$0xff] %vm1299, %v1224
      %1311 = vst.msk [vmem:[#allocation3 + $0x58] sm:$0xff] %vm1299, %v1226
      %1312 = vst.msk [vmem:[#allocation3 + $0x60] sm:$0xff] %vm1299, %v1228
      %1313 = vst.msk [vmem:[#allocation3 + $0x68] sm:$0xff] %vm1299, %v1230
      %1314 = vst.msk [vmem:[#allocation3 + $0x70] sm:$0xff] %vm1299, %v1232
      %1315 = vst.msk [vmem:[#allocation3 + $0x78] sm:$0xff] %vm1299, %v1234
      %1316 = vst.msk [vmem:[#allocation3 + $0x80] sm:$0xff] %vm1299, %v1236
      %1317 = vst.msk [vmem:[#allocation3 + $0x88] sm:$0xff] %vm1299, %v1238
      %1318 = vst.msk [vmem:[#allocation3 + $0x90] sm:$0xff] %vm1299, %v1240
      %1319 = vst.msk [vmem:[#allocation3 + $0x98] sm:$0xff] %vm1299, %v1242
      %1320 = vst.msk [vmem:[#allocation3 + $0xa0] sm:$0xff] %vm1299, %v1244
      %1321 = vst.msk [vmem:[#allocation3 + $0xa8] sm:$0xff] %vm1299, %v1246
      %1322 = vst.msk [vmem:[#allocation3 + $0xb0] sm:$0xff] %vm1299, %v1248
      %1323 = vst.msk [vmem:[#allocation3 + $0xb8] sm:$0xff] %vm1299, %v1250
      %1324 = vst.msk [vmem:[#allocation3 + $0xc0] sm:$0xff] %vm1299, %v1252
      %1325 = vst.msk [vmem:[#allocation3 + $0xc8] sm:$0xff] %vm1299, %v1254
      %1326 = vst.msk [vmem:[#allocation3 + $0xd0] sm:$0xff] %vm1299, %v1256
      %1327 = vst.msk [vmem:[#allocation3 + $0xd8] sm:$0xff] %vm1299, %v1258
      %1328 = vst.msk [vmem:[#allocation3 + $0xe0] sm:$0xff] %vm1299, %v1260
      %1329 = vst.msk [vmem:[#allocation3 + $0xe8] sm:$0xff] %vm1299, %v1262
      %1330 = vst.msk [vmem:[#allocation3 + $0xf0] sm:$0xff] %vm1299, %v1264
      %1331 = vst.msk [vmem:[#allocation3 + $0xf8] sm:$0xff] %vm1299, %v1266
      %s1332 = scalar_lea.vmem [#allocation2], 48
      %v1333 = vld [vmem:[%s1332] sm:$0xff]
      %v1334 = vld [vmem:[%s1332 + $0x8] sm:$0xff]
      %v1335 = vld [vmem:[%s1332 + $0x18] sm:$0xff]
      %v1336 = vld [vmem:[%s1332 + $0x20] sm:$0xff]
      %v1337 = vld [vmem:[%s1332 + $0x30] sm:$0xff]
      %v1338 = vld [vmem:[%s1332 + $0x38] sm:$0xff]
      %v1339 = vld [vmem:[%s1332 + $0x48] sm:$0xff]
      %v1340 = vld [vmem:[%s1332 + $0x50] sm:$0xff]
      %v1341 = vld [vmem:[%s1332 + $0x60] sm:$0xff]
      %v1342 = vld [vmem:[%s1332 + $0x68] sm:$0xff]
      %v1343 = vld [vmem:[%s1332 + $0x78] sm:$0xff]
      %v1344 = vld [vmem:[%s1332 + $0x80] sm:$0xff]
      %v1345 = vld [vmem:[%s1332 + $0x90] sm:$0xff]
      %v1346 = vld [vmem:[%s1332 + $0x98] sm:$0xff]
      %v1347 = vld [vmem:[%s1332 + $0xa8] sm:$0xff]
      %v1348 = vld [vmem:[%s1332 + $0xb0] sm:$0xff]
      %v1349 = vld [vmem:[%s1332 + $0xc0] sm:$0xff]
      %v1350 = vld [vmem:[%s1332 + $0xc8] sm:$0xff]
      %v1351 = vld [vmem:[%s1332 + $0xd8] sm:$0xff]
      %v1352 = vld [vmem:[%s1332 + $0xe0] sm:$0xff]
      %v1353 = vld [vmem:[%s1332 + $0xf0] sm:$0xff]
      %v1354 = vld [vmem:[%s1332 + $0xf8] sm:$0xff]
      %v1355 = vld [vmem:[%s1332 + $0x108] sm:$0xff]
      %v1356 = vld [vmem:[%s1332 + $0x110] sm:$0xff]
      %v1357 = vld [vmem:[%s1332 + $0x120] sm:$0xff]
      %v1358 = vld [vmem:[%s1332 + $0x128] sm:$0xff]
      %v1359 = vld [vmem:[%s1332 + $0x138] sm:$0xff]
      %v1360 = vld [vmem:[%s1332 + $0x140] sm:$0xff]
      %v1361 = vld [vmem:[%s1332 + $0x150] sm:$0xff]
      %v1362 = vld [vmem:[%s1332 + $0x158] sm:$0xff]
      %v1363 = vld [vmem:[%s1332 + $0x168] sm:$0xff]
      %v1364 = vld [vmem:[%s1332 + $0x170] sm:$0xff]
      %1397 = vrot.lane.b32.xlu0 %v1333, 24
      %v1398 = vpop.permute.xlu0 %1397
      %1399 = vrot.lane.b32.xlu0 %v1334, 24
      %v1400 = vpop.permute.xlu0 %1399
      %1401 = vrot.lane.b32.xlu0 %v1335, 24
      %v1402 = vpop.permute.xlu0 %1401
      %1403 = vrot.lane.b32.xlu0 %v1336, 24
      %v1404 = vpop.permute.xlu0 %1403
      %1405 = vrot.lane.b32.xlu0 %v1337, 24
      %v1406 = vpop.permute.xlu0 %1405
      %1407 = vrot.lane.b32.xlu0 %v1338, 24
      %v1408 = vpop.permute.xlu0 %1407
      %1409 = vrot.lane.b32.xlu0 %v1339, 24
      %v1410 = vpop.permute.xlu0 %1409
      %1411 = vrot.lane.b32.xlu0 %v1340, 24
      %v1412 = vpop.permute.xlu0 %1411
      %1413 = vrot.lane.b32.xlu0 %v1341, 24
      %v1414 = vpop.permute.xlu0 %1413
      %1415 = vrot.lane.b32.xlu0 %v1342, 24
      %v1416 = vpop.permute.xlu0 %1415
      %1417 = vrot.lane.b32.xlu0 %v1343, 24
      %v1418 = vpop.permute.xlu0 %1417
      %1419 = vrot.lane.b32.xlu0 %v1344, 24
      %v1420 = vpop.permute.xlu0 %1419
      %1421 = vrot.lane.b32.xlu0 %v1345, 24
      %v1422 = vpop.permute.xlu0 %1421
      %1423 = vrot.lane.b32.xlu0 %v1346, 24
      %v1424 = vpop.permute.xlu0 %1423
      %1425 = vrot.lane.b32.xlu0 %v1347, 24
      %v1426 = vpop.permute.xlu0 %1425
      %1427 = vrot.lane.b32.xlu0 %v1348, 24
      %v1428 = vpop.permute.xlu0 %1427
      %1429 = vrot.lane.b32.xlu0 %v1349, 24
      %v1430 = vpop.permute.xlu0 %1429
      %1431 = vrot.lane.b32.xlu0 %v1350, 24
      %v1432 = vpop.permute.xlu0 %1431
      %1433 = vrot.lane.b32.xlu0 %v1351, 24
      %v1434 = vpop.permute.xlu0 %1433
      %1435 = vrot.lane.b32.xlu0 %v1352, 24
      %v1436 = vpop.permute.xlu0 %1435
      %1437 = vrot.lane.b32.xlu0 %v1353, 24
      %v1438 = vpop.permute.xlu0 %1437
      %1439 = vrot.lane.b32.xlu0 %v1354, 24
      %v1440 = vpop.permute.xlu0 %1439
      %1441 = vrot.lane.b32.xlu0 %v1355, 24
      %v1442 = vpop.permute.xlu0 %1441
      %1443 = vrot.lane.b32.xlu0 %v1356, 24
      %v1444 = vpop.permute.xlu0 %1443
      %1445 = vrot.lane.b32.xlu0 %v1357, 24
      %v1446 = vpop.permute.xlu0 %1445
      %1447 = vrot.lane.b32.xlu0 %v1358, 24
      %v1448 = vpop.permute.xlu0 %1447
      %1449 = vrot.lane.b32.xlu0 %v1359, 24
      %v1450 = vpop.permute.xlu0 %1449
      %1451 = vrot.lane.b32.xlu0 %v1360, 24
      %v1452 = vpop.permute.xlu0 %1451
      %1453 = vrot.lane.b32.xlu0 %v1361, 24
      %v1454 = vpop.permute.xlu0 %1453
      %1455 = vrot.lane.b32.xlu0 %v1362, 24
      %v1456 = vpop.permute.xlu0 %1455
      %1457 = vrot.lane.b32.xlu0 %v1363, 24
      %v1458 = vpop.permute.xlu0 %1457
      %1459 = vrot.lane.b32.xlu0 %v1364, 24
      %v1460 = vpop.permute.xlu0 %1459
      %vm1493 = vcmask 228544
      %1494 = vst.msk [vmem:[#allocation3] sm:$0xff] %vm1493, %v1398
      %1495 = vst.msk [vmem:[#allocation3 + $0x8] sm:$0xff] %vm1493, %v1400
      %1496 = vst.msk [vmem:[#allocation3 + $0x10] sm:$0xff] %vm1493, %v1402
      %1497 = vst.msk [vmem:[#allocation3 + $0x18] sm:$0xff] %vm1493, %v1404
      %1498 = vst.msk [vmem:[#allocation3 + $0x20] sm:$0xff] %vm1493, %v1406
      %1499 = vst.msk [vmem:[#allocation3 + $0x28] sm:$0xff] %vm1493, %v1408
      %1500 = vst.msk [vmem:[#allocation3 + $0x30] sm:$0xff] %vm1493, %v1410
      %1501 = vst.msk [vmem:[#allocation3 + $0x38] sm:$0xff] %vm1493, %v1412
      %1502 = vst.msk [vmem:[#allocation3 + $0x40] sm:$0xff] %vm1493, %v1414
      %1503 = vst.msk [vmem:[#allocation3 + $0x48] sm:$0xff] %vm1493, %v1416
      %1504 = vst.msk [vmem:[#allocation3 + $0x50] sm:$0xff] %vm1493, %v1418
      %1505 = vst.msk [vmem:[#allocation3 + $0x58] sm:$0xff] %vm1493, %v1420
      %1506 = vst.msk [vmem:[#allocation3 + $0x60] sm:$0xff] %vm1493, %v1422
      %1507 = vst.msk [vmem:[#allocation3 + $0x68] sm:$0xff] %vm1493, %v1424
      %1508 = vst.msk [vmem:[#allocation3 + $0x70] sm:$0xff] %vm1493, %v1426
      %1509 = vst.msk [vmem:[#allocation3 + $0x78] sm:$0xff] %vm1493, %v1428
      %1510 = vst.msk [vmem:[#allocation3 + $0x80] sm:$0xff] %vm1493, %v1430
      %1511 = vst.msk [vmem:[#allocation3 + $0x88] sm:$0xff] %vm1493, %v1432
      %1512 = vst.msk [vmem:[#allocation3 + $0x90] sm:$0xff] %vm1493, %v1434
      %1513 = vst.msk [vmem:[#allocation3 + $0x98] sm:$0xff] %vm1493, %v1436
      %1514 = vst.msk [vmem:[#allocation3 + $0xa0] sm:$0xff] %vm1493, %v1438
      %1515 = vst.msk [vmem:[#allocation3 + $0xa8] sm:$0xff] %vm1493, %v1440
      %1516 = vst.msk [vmem:[#allocation3 + $0xb0] sm:$0xff] %vm1493, %v1442
      %1517 = vst.msk [vmem:[#allocation3 + $0xb8] sm:$0xff] %vm1493, %v1444
      %1518 = vst.msk [vmem:[#allocation3 + $0xc0] sm:$0xff] %vm1493, %v1446
      %1519 = vst.msk [vmem:[#allocation3 + $0xc8] sm:$0xff] %vm1493, %v1448
      %1520 = vst.msk [vmem:[#allocation3 + $0xd0] sm:$0xff] %vm1493, %v1450
      %1521 = vst.msk [vmem:[#allocation3 + $0xd8] sm:$0xff] %vm1493, %v1452
      %1522 = vst.msk [vmem:[#allocation3 + $0xe0] sm:$0xff] %vm1493, %v1454
      %1523 = vst.msk [vmem:[#allocation3 + $0xe8] sm:$0xff] %vm1493, %v1456
      %1524 = vst.msk [vmem:[#allocation3 + $0xf0] sm:$0xff] %vm1493, %v1458
      %1525 = vst.msk [vmem:[#allocation3 + $0xf8] sm:$0xff] %vm1493, %v1460
      %v1526 = vld [vmem:[%s1332 + $0x1] sm:$0xff]
      %v1527 = vld [vmem:[%s1332 + $0x9] sm:$0xff]
      %v1528 = vld [vmem:[%s1332 + $0x19] sm:$0xff]
      %v1529 = vld [vmem:[%s1332 + $0x21] sm:$0xff]
      %v1530 = vld [vmem:[%s1332 + $0x31] sm:$0xff]
      %v1531 = vld [vmem:[%s1332 + $0x39] sm:$0xff]
      %v1532 = vld [vmem:[%s1332 + $0x49] sm:$0xff]
      %v1533 = vld [vmem:[%s1332 + $0x51] sm:$0xff]
      %v1534 = vld [vmem:[%s1332 + $0x61] sm:$0xff]
      %v1535 = vld [vmem:[%s1332 + $0x69] sm:$0xff]
      %v1536 = vld [vmem:[%s1332 + $0x79] sm:$0xff]
      %v1537 = vld [vmem:[%s1332 + $0x81] sm:$0xff]
      %v1538 = vld [vmem:[%s1332 + $0x91] sm:$0xff]
      %v1539 = vld [vmem:[%s1332 + $0x99] sm:$0xff]
      %v1540 = vld [vmem:[%s1332 + $0xa9] sm:$0xff]
      %v1541 = vld [vmem:[%s1332 + $0xb1] sm:$0xff]
      %v1542 = vld [vmem:[%s1332 + $0xc1] sm:$0xff]
      %v1543 = vld [vmem:[%s1332 + $0xc9] sm:$0xff]
      %v1544 = vld [vmem:[%s1332 + $0xd9] sm:$0xff]
      %v1545 = vld [vmem:[%s1332 + $0xe1] sm:$0xff]
      %v1546 = vld [vmem:[%s1332 + $0xf1] sm:$0xff]
      %v1547 = vld [vmem:[%s1332 + $0xf9] sm:$0xff]
      %v1548 = vld [vmem:[%s1332 + $0x109] sm:$0xff]
      %v1549 = vld [vmem:[%s1332 + $0x111] sm:$0xff]
      %v1550 = vld [vmem:[%s1332 + $0x121] sm:$0xff]
      %v1551 = vld [vmem:[%s1332 + $0x129] sm:$0xff]
      %v1552 = vld [vmem:[%s1332 + $0x139] sm:$0xff]
      %v1553 = vld [vmem:[%s1332 + $0x141] sm:$0xff]
      %v1554 = vld [vmem:[%s1332 + $0x151] sm:$0xff]
      %v1555 = vld [vmem:[%s1332 + $0x159] sm:$0xff]
      %v1556 = vld [vmem:[%s1332 + $0x169] sm:$0xff]
      %v1557 = vld [vmem:[%s1332 + $0x171] sm:$0xff]
      %1590 = vrot.lane.b32.xlu0 %v1526, 28
      %v1591 = vpop.permute.xlu0 %1590
      %1592 = vrot.lane.b32.xlu0 %v1527, 28
      %v1593 = vpop.permute.xlu0 %1592
      %1594 = vrot.lane.b32.xlu0 %v1528, 28
      %v1595 = vpop.permute.xlu0 %1594
      %1596 = vrot.lane.b32.xlu0 %v1529, 28
      %v1597 = vpop.permute.xlu0 %1596
      %1598 = vrot.lane.b32.xlu0 %v1530, 28
      %v1599 = vpop.permute.xlu0 %1598
      %1600 = vrot.lane.b32.xlu0 %v1531, 28
      %v1601 = vpop.permute.xlu0 %1600
      %1602 = vrot.lane.b32.xlu0 %v1532, 28
      %v1603 = vpop.permute.xlu0 %1602
      %1604 = vrot.lane.b32.xlu0 %v1533, 28
      %v1605 = vpop.permute.xlu0 %1604
      %1606 = vrot.lane.b32.xlu0 %v1534, 28
      %v1607 = vpop.permute.xlu0 %1606
      %1608 = vrot.lane.b32.xlu0 %v1535, 28
      %v1609 = vpop.permute.xlu0 %1608
      %1610 = vrot.lane.b32.xlu0 %v1536, 28
      %v1611 = vpop.permute.xlu0 %1610
      %1612 = vrot.lane.b32.xlu0 %v1537, 28
      %v1613 = vpop.permute.xlu0 %1612
      %1614 = vrot.lane.b32.xlu0 %v1538, 28
      %v1615 = vpop.permute.xlu0 %1614
      %1616 = vrot.lane.b32.xlu0 %v1539, 28
      %v1617 = vpop.permute.xlu0 %1616
      %1618 = vrot.lane.b32.xlu0 %v1540, 28
      %v1619 = vpop.permute.xlu0 %1618
      %1620 = vrot.lane.b32.xlu0 %v1541, 28
      %v1621 = vpop.permute.xlu0 %1620
      %1622 = vrot.lane.b32.xlu0 %v1542, 28
      %v1623 = vpop.permute.xlu0 %1622
      %1624 = vrot.lane.b32.xlu0 %v1543, 28
      %v1625 = vpop.permute.xlu0 %1624
      %1626 = vrot.lane.b32.xlu0 %v1544, 28
      %v1627 = vpop.permute.xlu0 %1626
      %1628 = vrot.lane.b32.xlu0 %v1545, 28
      %v1629 = vpop.permute.xlu0 %1628
      %1630 = vrot.lane.b32.xlu0 %v1546, 28
      %v1631 = vpop.permute.xlu0 %1630
      %1632 = vrot.lane.b32.xlu0 %v1547, 28
      %v1633 = vpop.permute.xlu0 %1632
      %1634 = vrot.lane.b32.xlu0 %v1548, 28
      %v1635 = vpop.permute.xlu0 %1634
      %1636 = vrot.lane.b32.xlu0 %v1549, 28
      %v1637 = vpop.permute.xlu0 %1636
      %1638 = vrot.lane.b32.xlu0 %v1550, 28
      %v1639 = vpop.permute.xlu0 %1638
      %1640 = vrot.lane.b32.xlu0 %v1551, 28
      %v1641 = vpop.permute.xlu0 %1640
      %1642 = vrot.lane.b32.xlu0 %v1552, 28
      %v1643 = vpop.permute.xlu0 %1642
      %1644 = vrot.lane.b32.xlu0 %v1553, 28
      %v1645 = vpop.permute.xlu0 %1644
      %1646 = vrot.lane.b32.xlu0 %v1554, 28
      %v1647 = vpop.permute.xlu0 %1646
      %1648 = vrot.lane.b32.xlu0 %v1555, 28
      %v1649 = vpop.permute.xlu0 %1648
      %1650 = vrot.lane.b32.xlu0 %v1556, 28
      %v1651 = vpop.permute.xlu0 %1650
      %1652 = vrot.lane.b32.xlu0 %v1557, 28
      %v1653 = vpop.permute.xlu0 %1652
      %vm1686 = vcmask 261344
      %1687 = vst.msk [vmem:[#allocation3] sm:$0xff] %vm1686, %v1591
      %1688 = vst.msk [vmem:[#allocation3 + $0x8] sm:$0xff] %vm1686, %v1593
      %1689 = vst.msk [vmem:[#allocation3 + $0x10] sm:$0xff] %vm1686, %v1595
      %1690 = vst.msk [vmem:[#allocation3 + $0x18] sm:$0xff] %vm1686, %v1597
      %1691 = vst.msk [vmem:[#allocation3 + $0x20] sm:$0xff] %vm1686, %v1599
      %1692 = vst.msk [vmem:[#allocation3 + $0x28] sm:$0xff] %vm1686, %v1601
      %1693 = vst.msk [vmem:[#allocation3 + $0x30] sm:$0xff] %vm1686, %v1603
      %1694 = vst.msk [vmem:[#allocation3 + $0x38] sm:$0xff] %vm1686, %v1605
      %1695 = vst.msk [vmem:[#allocation3 + $0x40] sm:$0xff] %vm1686, %v1607
      %1696 = vst.msk [vmem:[#allocation3 + $0x48] sm:$0xff] %vm1686, %v1609
      %1697 = vst.msk [vmem:[#allocation3 + $0x50] sm:$0xff] %vm1686, %v1611
      %1698 = vst.msk [vmem:[#allocation3 + $0x58] sm:$0xff] %vm1686, %v1613
      %1699 = vst.msk [vmem:[#allocation3 + $0x60] sm:$0xff] %vm1686, %v1615
      %1700 = vst.msk [vmem:[#allocation3 + $0x68] sm:$0xff] %vm1686, %v1617
      %1701 = vst.msk [vmem:[#allocation3 + $0x70] sm:$0xff] %vm1686, %v1619
      %1702 = vst.msk [vmem:[#allocation3 + $0x78] sm:$0xff] %vm1686, %v1621
      %1703 = vst.msk [vmem:[#allocation3 + $0x80] sm:$0xff] %vm1686, %v1623
      %1704 = vst.msk [vmem:[#allocation3 + $0x88] sm:$0xff] %vm1686, %v1625
      %1705 = vst.msk [vmem:[#allocation3 + $0x90] sm:$0xff] %vm1686, %v1627
      %1706 = vst.msk [vmem:[#allocation3 + $0x98] sm:$0xff] %vm1686, %v1629
      %1707 = vst.msk [vmem:[#allocation3 + $0xa0] sm:$0xff] %vm1686, %v1631
      %1708 = vst.msk [vmem:[#allocation3 + $0xa8] sm:$0xff] %vm1686, %v1633
      %1709 = vst.msk [vmem:[#allocation3 + $0xb0] sm:$0xff] %vm1686, %v1635
      %1710 = vst.msk [vmem:[#allocation3 + $0xb8] sm:$0xff] %vm1686, %v1637
      %1711 = vst.msk [vmem:[#allocation3 + $0xc0] sm:$0xff] %vm1686, %v1639
      %1712 = vst.msk [vmem:[#allocation3 + $0xc8] sm:$0xff] %vm1686, %v1641
      %1713 = vst.msk [vmem:[#allocation3 + $0xd0] sm:$0xff] %vm1686, %v1643
      %1714 = vst.msk [vmem:[#allocation3 + $0xd8] sm:$0xff] %vm1686, %v1645
      %1715 = vst.msk [vmem:[#allocation3 + $0xe0] sm:$0xff] %vm1686, %v1647
      %1716 = vst.msk [vmem:[#allocation3 + $0xe8] sm:$0xff] %vm1686, %v1649
      %1717 = vst.msk [vmem:[#allocation3 + $0xf0] sm:$0xff] %vm1686, %v1651
      %1718 = vst.msk [vmem:[#allocation3 + $0xf8] sm:$0xff] %vm1686, %v1653
      %v1719 = vld [vmem:[%s1332 + $0x2] sm:$0xff]
      %v1720 = vld [vmem:[%s1332 + $0xa] sm:$0xff]
      %v1721 = vld [vmem:[%s1332 + $0x1a] sm:$0xff]
      %v1722 = vld [vmem:[%s1332 + $0x22] sm:$0xff]
      %v1723 = vld [vmem:[%s1332 + $0x32] sm:$0xff]
      %v1724 = vld [vmem:[%s1332 + $0x3a] sm:$0xff]
      %v1725 = vld [vmem:[%s1332 + $0x4a] sm:$0xff]
      %v1726 = vld [vmem:[%s1332 + $0x52] sm:$0xff]
      %v1727 = vld [vmem:[%s1332 + $0x62] sm:$0xff]
      %v1728 = vld [vmem:[%s1332 + $0x6a] sm:$0xff]
      %v1729 = vld [vmem:[%s1332 + $0x7a] sm:$0xff]
      %v1730 = vld [vmem:[%s1332 + $0x82] sm:$0xff]
      %v1731 = vld [vmem:[%s1332 + $0x92] sm:$0xff]
      %v1732 = vld [vmem:[%s1332 + $0x9a] sm:$0xff]
      %v1733 = vld [vmem:[%s1332 + $0xaa] sm:$0xff]
      %v1734 = vld [vmem:[%s1332 + $0xb2] sm:$0xff]
      %v1735 = vld [vmem:[%s1332 + $0xc2] sm:$0xff]
      %v1736 = vld [vmem:[%s1332 + $0xca] sm:$0xff]
      %v1737 = vld [vmem:[%s1332 + $0xda] sm:$0xff]
      %v1738 = vld [vmem:[%s1332 + $0xe2] sm:$0xff]
      %v1739 = vld [vmem:[%s1332 + $0xf2] sm:$0xff]
      %v1740 = vld [vmem:[%s1332 + $0xfa] sm:$0xff]
      %v1741 = vld [vmem:[%s1332 + $0x10a] sm:$0xff]
      %v1742 = vld [vmem:[%s1332 + $0x112] sm:$0xff]
      %v1743 = vld [vmem:[%s1332 + $0x122] sm:$0xff]
      %v1744 = vld [vmem:[%s1332 + $0x12a] sm:$0xff]
      %v1745 = vld [vmem:[%s1332 + $0x13a] sm:$0xff]
      %v1746 = vld [vmem:[%s1332 + $0x142] sm:$0xff]
      %v1747 = vld [vmem:[%s1332 + $0x152] sm:$0xff]
      %v1748 = vld [vmem:[%s1332 + $0x15a] sm:$0xff]
      %v1749 = vld [vmem:[%s1332 + $0x16a] sm:$0xff]
      %v1750 = vld [vmem:[%s1332 + $0x172] sm:$0xff]
      %1783 = vrot.lane.b32.xlu0 %v1719, 32
      %v1784 = vpop.permute.xlu0 %1783
      %1785 = vrot.lane.b32.xlu0 %v1720, 32
      %v1786 = vpop.permute.xlu0 %1785
      %1787 = vrot.lane.b32.xlu0 %v1721, 32
      %v1788 = vpop.permute.xlu0 %1787
      %1789 = vrot.lane.b32.xlu0 %v1722, 32
      %v1790 = vpop.permute.xlu0 %1789
      %1791 = vrot.lane.b32.xlu0 %v1723, 32
      %v1792 = vpop.permute.xlu0 %1791
      %1793 = vrot.lane.b32.xlu0 %v1724, 32
      %v1794 = vpop.permute.xlu0 %1793
      %1795 = vrot.lane.b32.xlu0 %v1725, 32
      %v1796 = vpop.permute.xlu0 %1795
      %1797 = vrot.lane.b32.xlu0 %v1726, 32
      %v1798 = vpop.permute.xlu0 %1797
      %1799 = vrot.lane.b32.xlu0 %v1727, 32
      %v1800 = vpop.permute.xlu0 %1799
      %1801 = vrot.lane.b32.xlu0 %v1728, 32
      %v1802 = vpop.permute.xlu0 %1801
      %1803 = vrot.lane.b32.xlu0 %v1729, 32
      %v1804 = vpop.permute.xlu0 %1803
      %1805 = vrot.lane.b32.xlu0 %v1730, 32
      %v1806 = vpop.permute.xlu0 %1805
      %1807 = vrot.lane.b32.xlu0 %v1731, 32
      %v1808 = vpop.permute.xlu0 %1807
      %1809 = vrot.lane.b32.xlu0 %v1732, 32
      %v1810 = vpop.permute.xlu0 %1809
      %1811 = vrot.lane.b32.xlu0 %v1733, 32
      %v1812 = vpop.permute.xlu0 %1811
      %1813 = vrot.lane.b32.xlu0 %v1734, 32
      %v1814 = vpop.permute.xlu0 %1813
      %1815 = vrot.lane.b32.xlu0 %v1735, 32
      %v1816 = vpop.permute.xlu0 %1815
      %1817 = vrot.lane.b32.xlu0 %v1736, 32
      %v1818 = vpop.permute.xlu0 %1817
      %1819 = vrot.lane.b32.xlu0 %v1737, 32
      %v1820 = vpop.permute.xlu0 %1819
      %1821 = vrot.lane.b32.xlu0 %v1738, 32
      %v1822 = vpop.permute.xlu0 %1821
      %1823 = vrot.lane.b32.xlu0 %v1739, 32
      %v1824 = vpop.permute.xlu0 %1823
      %1825 = vrot.lane.b32.xlu0 %v1740, 32
      %v1826 = vpop.permute.xlu0 %1825
      %1827 = vrot.lane.b32.xlu0 %v1741, 32
      %v1828 = vpop.permute.xlu0 %1827
      %1829 = vrot.lane.b32.xlu0 %v1742, 32
      %v1830 = vpop.permute.xlu0 %1829
      %1831 = vrot.lane.b32.xlu0 %v1743, 32
      %v1832 = vpop.permute.xlu0 %1831
      %1833 = vrot.lane.b32.xlu0 %v1744, 32
      %v1834 = vpop.permute.xlu0 %1833
      %1835 = vrot.lane.b32.xlu0 %v1745, 32
      %v1836 = vpop.permute.xlu0 %1835
      %1837 = vrot.lane.b32.xlu0 %v1746, 32
      %v1838 = vpop.permute.xlu0 %1837
      %1839 = vrot.lane.b32.xlu0 %v1747, 32
      %v1840 = vpop.permute.xlu0 %1839
      %1841 = vrot.lane.b32.xlu0 %v1748, 32
      %v1842 = vpop.permute.xlu0 %1841
      %1843 = vrot.lane.b32.xlu0 %v1749, 32
      %v1844 = vpop.permute.xlu0 %1843
      %1845 = vrot.lane.b32.xlu0 %v1750, 32
      %v1846 = vpop.permute.xlu0 %1845
      %vm1879 = vcmask 294144
      %1880 = vst.msk [vmem:[#allocation3] sm:$0xff] %vm1879, %v1784
      %1881 = vst.msk [vmem:[#allocation3 + $0x8] sm:$0xff] %vm1879, %v1786
      %1882 = vst.msk [vmem:[#allocation3 + $0x10] sm:$0xff] %vm1879, %v1788
      %1883 = vst.msk [vmem:[#allocation3 + $0x18] sm:$0xff] %vm1879, %v1790
      %1884 = vst.msk [vmem:[#allocation3 + $0x20] sm:$0xff] %vm1879, %v1792
      %1885 = vst.msk [vmem:[#allocation3 + $0x28] sm:$0xff] %vm1879, %v1794
      %1886 = vst.msk [vmem:[#allocation3 + $0x30] sm:$0xff] %vm1879, %v1796
      %1887 = vst.msk [vmem:[#allocation3 + $0x38] sm:$0xff] %vm1879, %v1798
      %1888 = vst.msk [vmem:[#allocation3 + $0x40] sm:$0xff] %vm1879, %v1800
      %1889 = vst.msk [vmem:[#allocation3 + $0x48] sm:$0xff] %vm1879, %v1802
      %1890 = vst.msk [vmem:[#allocation3 + $0x50] sm:$0xff] %vm1879, %v1804
      %1891 = vst.msk [vmem:[#allocation3 + $0x58] sm:$0xff] %vm1879, %v1806
      %1892 = vst.msk [vmem:[#allocation3 + $0x60] sm:$0xff] %vm1879, %v1808
      %1893 = vst.msk [vmem:[#allocation3 + $0x68] sm:$0xff] %vm1879, %v1810
      %1894 = vst.msk [vmem:[#allocation3 + $0x70] sm:$0xff] %vm1879, %v1812
      %1895 = vst.msk [vmem:[#allocation3 + $0x78] sm:$0xff] %vm1879, %v1814
      %1896 = vst.msk [vmem:[#allocation3 + $0x80] sm:$0xff] %vm1879, %v1816
      %1897 = vst.msk [vmem:[#allocation3 + $0x88] sm:$0xff] %vm1879, %v1818
      %1898 = vst.msk [vmem:[#allocation3 + $0x90] sm:$0xff] %vm1879, %v1820
      %1899 = vst.msk [vmem:[#allocation3 + $0x98] sm:$0xff] %vm1879, %v1822
      %1900 = vst.msk [vmem:[#allocation3 + $0xa0] sm:$0xff] %vm1879, %v1824
      %1901 = vst.msk [vmem:[#allocation3 + $0xa8] sm:$0xff] %vm1879, %v1826
      %1902 = vst.msk [vmem:[#allocation3 + $0xb0] sm:$0xff] %vm1879, %v1828
      %1903 = vst.msk [vmem:[#allocation3 + $0xb8] sm:$0xff] %vm1879, %v1830
      %1904 = vst.msk [vmem:[#allocation3 + $0xc0] sm:$0xff] %vm1879, %v1832
      %1905 = vst.msk [vmem:[#allocation3 + $0xc8] sm:$0xff] %vm1879, %v1834
      %1906 = vst.msk [vmem:[#allocation3 + $0xd0] sm:$0xff] %vm1879, %v1836
      %1907 = vst.msk [vmem:[#allocation3 + $0xd8] sm:$0xff] %vm1879, %v1838
      %1908 = vst.msk [vmem:[#allocation3 + $0xe0] sm:$0xff] %vm1879, %v1840
      %1909 = vst.msk [vmem:[#allocation3 + $0xe8] sm:$0xff] %vm1879, %v1842
      %1910 = vst.msk [vmem:[#allocation3 + $0xf0] sm:$0xff] %vm1879, %v1844
      %1911 = vst.msk [vmem:[#allocation3 + $0xf8] sm:$0xff] %vm1879, %v1846
      %v1912 = vld [vmem:[#allocation3] sm:$0xff]
      %v1913 = vld [vmem:[#allocation3 + $0x8] sm:$0xff]
      %v1914 = vld [vmem:[#allocation3 + $0x10] sm:$0xff]
      %v1915 = vld [vmem:[#allocation3 + $0x18] sm:$0xff]
      %v1916 = vld [vmem:[#allocation3 + $0x20] sm:$0xff]
      %v1917 = vld [vmem:[#allocation3 + $0x28] sm:$0xff]
      %v1918 = vld [vmem:[#allocation3 + $0x30] sm:$0xff]
      %v1919 = vld [vmem:[#allocation3 + $0x38] sm:$0xff]
      %v1920 = vld [vmem:[#allocation3 + $0x40] sm:$0xff]
      %v1921 = vld [vmem:[#allocation3 + $0x48] sm:$0xff]
      %v1922 = vld [vmem:[#allocation3 + $0x50] sm:$0xff]
      %v1923 = vld [vmem:[#allocation3 + $0x58] sm:$0xff]
      %v1924 = vld [vmem:[#allocation3 + $0x60] sm:$0xff]
      %v1925 = vld [vmem:[#allocation3 + $0x68] sm:$0xff]
      %v1926 = vld [vmem:[#allocation3 + $0x70] sm:$0xff]
      %v1927 = vld [vmem:[#allocation3 + $0x78] sm:$0xff]
      %v1928 = vld [vmem:[#allocation3 + $0x80] sm:$0xff]
      %v1929 = vld [vmem:[#allocation3 + $0x88] sm:$0xff]
      %v1930 = vld [vmem:[#allocation3 + $0x90] sm:$0xff]
      %v1931 = vld [vmem:[#allocation3 + $0x98] sm:$0xff]
      %v1932 = vld [vmem:[#allocation3 + $0xa0] sm:$0xff]
      %v1933 = vld [vmem:[#allocation3 + $0xa8] sm:$0xff]
      %v1934 = vld [vmem:[#allocation3 + $0xb0] sm:$0xff]
      %v1935 = vld [vmem:[#allocation3 + $0xb8] sm:$0xff]
      %v1936 = vld [vmem:[#allocation3 + $0xc0] sm:$0xff]
      %v1937 = vld [vmem:[#allocation3 + $0xc8] sm:$0xff]
      %v1938 = vld [vmem:[#allocation3 + $0xd0] sm:$0xff]
      %v1939 = vld [vmem:[#allocation3 + $0xd8] sm:$0xff]
      %v1940 = vld [vmem:[#allocation3 + $0xe0] sm:$0xff]
      %v1941 = vld [vmem:[#allocation3 + $0xe8] sm:$0xff]
      %v1942 = vld [vmem:[#allocation3 + $0xf0] sm:$0xff]
      %v1943 = vld [vmem:[#allocation3 + $0xf8] sm:$0xff]
      %v1944 = vld [vmem:[%s1] sm:$0xff]
      %v1945 = vld [vmem:[%s1 + $0x8] sm:$0xff]
      %v1946 = vld [vmem:[%s1 + $0x10] sm:$0xff]
      %v1947 = vld [vmem:[%s1 + $0x18] sm:$0xff]
      %v1948 = vld [vmem:[%s1 + $0x20] sm:$0xf]
      %vm1949 = vcmask 293888
      %v1951 = vsel %vm1949, %v1912, 0
      %v1954 = vsel %vm1949, %v1913, 0
      %v1957 = vsel %vm1949, %v1914, 0
      %v1960 = vsel %vm1949, %v1915, 0
      %v1963 = vsel %vm1949, %v1916, 0
      %v1966 = vsel %vm1949, %v1917, 0
      %v1969 = vsel %vm1949, %v1918, 0
      %v1972 = vsel %vm1949, %v1919, 0
      %v1975 = vsel %vm1949, %v1920, 0
      %v1978 = vsel %vm1949, %v1921, 0
      %v1981 = vsel %vm1949, %v1922, 0
      %v1984 = vsel %vm1949, %v1923, 0
      %v1987 = vsel %vm1949, %v1924, 0
      %v1990 = vsel %vm1949, %v1925, 0
      %v1993 = vsel %vm1949, %v1926, 0
      %v1996 = vsel %vm1949, %v1927, 0
      %v1999 = vsel %vm1949, %v1928, 0
      %v2002 = vsel %vm1949, %v1929, 0
      %v2005 = vsel %vm1949, %v1930, 0
      %v2008 = vsel %vm1949, %v1931, 0
      %v2011 = vsel %vm1949, %v1932, 0
      %v2014 = vsel %vm1949, %v1933, 0
      %v2017 = vsel %vm1949, %v1934, 0
      %v2020 = vsel %vm1949, %v1935, 0
      %v2023 = vsel %vm1949, %v1936, 0
      %v2026 = vsel %vm1949, %v1937, 0
      %v2029 = vsel %vm1949, %v1938, 0
      %v2032 = vsel %vm1949, %v1939, 0
      %v2035 = vsel %vm1949, %v1940, 0
      %v2038 = vsel %vm1949, %v1941, 0
      %v2041 = vsel %vm1949, %v1942, 0
      %v2044 = vsel %vm1949, %v1943, 0
      %vm2046 = vcmask 1043456
      %v2048 = vsel %vm2046, %v1948, 0
      %2050 = vmatpush.msra.mxu0 0.0
      %2051 = vmatpush.msra.mxu0 0.0
      %2052 = vmatpush.msra.mxu0 0.0
      %2053 = vmatpush.msra.mxu0 0.0
      %2054 = vmatpush.msra.mxu0 0.0
      %2055 = vmatpush.msra.mxu0 0.0
      %2056 = vmatpush.msra.mxu0 0.0
      %2057 = vmatpush.msra.mxu0 0.0
      %2058 = vmatpush.msra.mxu0 0.0
      %2059 = vmatpush.msra.mxu0 0.0
      %2060 = vmatpush.msra.mxu0 0.0
      %2061 = vmatpush.msra.mxu0 %v2048
      %2062 = vmatpush.msra.mxu0 %v1947
      %2063 = vmatpush.msra.mxu0 %v1946
      %2064 = vmatpush.msra.mxu0 %v1945
      %2065 = vmatpush.msra.mxu0 %v1944
      %2066 = vmatmul.f32.gmra.mxu0 %v1951
      %v2067 = vpop.f32.mrf.mxu0
      %v2068 = vadd.f32 0.0, %v2067
      %2069 = vmatmul.f32.gmra.mxu0 %v1954
      %v2070 = vpop.f32.mrf.mxu0
      %v2071 = vadd.f32 0.0, %v2070
      %2072 = vmatmul.f32.gmra.mxu0 %v1957
      %v2073 = vpop.f32.mrf.mxu0
      %v2074 = vadd.f32 0.0, %v2073
      %2075 = vmatmul.f32.gmra.mxu0 %v1960
      %v2076 = vpop.f32.mrf.mxu0
      %v2077 = vadd.f32 0.0, %v2076
      %2078 = vmatmul.f32.gmra.mxu0 %v1963
      %v2079 = vpop.f32.mrf.mxu0
      %v2080 = vadd.f32 0.0, %v2079
      %2081 = vmatmul.f32.gmra.mxu0 %v1966
      %v2082 = vpop.f32.mrf.mxu0
      %v2083 = vadd.f32 0.0, %v2082
      %2084 = vmatmul.f32.gmra.mxu0 %v1969
      %v2085 = vpop.f32.mrf.mxu0
      %v2086 = vadd.f32 0.0, %v2085
      %2087 = vmatmul.f32.gmra.mxu0 %v1972
      %v2088 = vpop.f32.mrf.mxu0
      %v2089 = vadd.f32 0.0, %v2088
      %2090 = vmatmul.f32.gmra.mxu0 %v1975
      %v2091 = vpop.f32.mrf.mxu0
      %v2092 = vadd.f32 0.0, %v2091
      %2093 = vmatmul.f32.gmra.mxu0 %v1978
      %v2094 = vpop.f32.mrf.mxu0
      %v2095 = vadd.f32 0.0, %v2094
      %2096 = vmatmul.f32.gmra.mxu0 %v1981
      %v2097 = vpop.f32.mrf.mxu0
      %v2098 = vadd.f32 0.0, %v2097
      %2099 = vmatmul.f32.gmra.mxu0 %v1984
      %v2100 = vpop.f32.mrf.mxu0
      %v2101 = vadd.f32 0.0, %v2100
      %2102 = vmatmul.f32.gmra.mxu0 %v1987
      %v2103 = vpop.f32.mrf.mxu0
      %v2104 = vadd.f32 0.0, %v2103
      %2105 = vmatmul.f32.gmra.mxu0 %v1990
      %v2106 = vpop.f32.mrf.mxu0
      %v2107 = vadd.f32 0.0, %v2106
      %2108 = vmatmul.f32.gmra.mxu0 %v1993
      %v2109 = vpop.f32.mrf.mxu0
      %v2110 = vadd.f32 0.0, %v2109
      %2111 = vmatmul.f32.gmra.mxu0 %v1996
      %v2112 = vpop.f32.mrf.mxu0
      %v2113 = vadd.f32 0.0, %v2112
      %2114 = vmatmul.f32.gmra.mxu0 %v1999
      %v2115 = vpop.f32.mrf.mxu0
      %v2116 = vadd.f32 0.0, %v2115
      %2117 = vmatmul.f32.gmra.mxu0 %v2002
      %v2118 = vpop.f32.mrf.mxu0
      %v2119 = vadd.f32 0.0, %v2118
      %2120 = vmatmul.f32.gmra.mxu0 %v2005
      %v2121 = vpop.f32.mrf.mxu0
      %v2122 = vadd.f32 0.0, %v2121
      %2123 = vmatmul.f32.gmra.mxu0 %v2008
      %v2124 = vpop.f32.mrf.mxu0
      %v2125 = vadd.f32 0.0, %v2124
      %2126 = vmatmul.f32.gmra.mxu0 %v2011
      %v2127 = vpop.f32.mrf.mxu0
      %v2128 = vadd.f32 0.0, %v2127
      %2129 = vmatmul.f32.gmra.mxu0 %v2014
      %v2130 = vpop.f32.mrf.mxu0
      %v2131 = vadd.f32 0.0, %v2130
      %2132 = vmatmul.f32.gmra.mxu0 %v2017
      %v2133 = vpop.f32.mrf.mxu0
      %v2134 = vadd.f32 0.0, %v2133
      %2135 = vmatmul.f32.gmra.mxu0 %v2020
      %v2136 = vpop.f32.mrf.mxu0
      %v2137 = vadd.f32 0.0, %v2136
      %2138 = vmatmul.f32.gmra.mxu0 %v2023
      %v2139 = vpop.f32.mrf.mxu0
      %v2140 = vadd.f32 0.0, %v2139
      %2141 = vmatmul.f32.gmra.mxu0 %v2026
      %v2142 = vpop.f32.mrf.mxu0
      %v2143 = vadd.f32 0.0, %v2142
      %2144 = vmatmul.f32.gmra.mxu0 %v2029
      %v2145 = vpop.f32.mrf.mxu0
      %v2146 = vadd.f32 0.0, %v2145
      %2147 = vmatmul.f32.gmra.mxu0 %v2032
      %v2148 = vpop.f32.mrf.mxu0
      %v2149 = vadd.f32 0.0, %v2148
      %2150 = vmatmul.f32.gmra.mxu0 %v2035
      %v2151 = vpop.f32.mrf.mxu0
      %v2152 = vadd.f32 0.0, %v2151
      %2153 = vmatmul.f32.gmra.mxu0 %v2038
      %v2154 = vpop.f32.mrf.mxu0
      %v2155 = vadd.f32 0.0, %v2154
      %2156 = vmatmul.f32.gmra.mxu0 %v2041
      %v2157 = vpop.f32.mrf.mxu0
      %v2158 = vadd.f32 0.0, %v2157
      %2159 = vmatmul.f32.gmra.mxu0 %v2044
      %v2160 = vpop.f32.mrf.mxu0
      %v2161 = vadd.f32 0.0, %v2160
      %2162 = vdwg.mxu0
      %2163 = vst.msk [vmem:[%s177] sm:$0xff] %vm214, %v2068
      %2164 = vst.msk [vmem:[%s177 + $0x8] sm:$0xff] %vm214, %v2071
      %2165 = vst.msk [vmem:[%s177 + $0x10] sm:$0xff] %vm214, %v2074
      %2166 = vst.msk [vmem:[%s177 + $0x18] sm:$0xff] %vm214, %v2077
      %2167 = vst.msk [vmem:[%s177 + $0x20] sm:$0xff] %vm214, %v2080
      %2168 = vst.msk [vmem:[%s177 + $0x28] sm:$0xff] %vm214, %v2083
      %2169 = vst.msk [vmem:[%s177 + $0x30] sm:$0xff] %vm214, %v2086
      %2170 = vst.msk [vmem:[%s177 + $0x38] sm:$0xff] %vm214, %v2089
      %2171 = vst.msk [vmem:[%s177 + $0x40] sm:$0xff] %vm214, %v2092
      %2172 = vst.msk [vmem:[%s177 + $0x48] sm:$0xff] %vm214, %v2095
      %2173 = vst.msk [vmem:[%s177 + $0x50] sm:$0xff] %vm214, %v2098
      %2174 = vst.msk [vmem:[%s177 + $0x58] sm:$0xff] %vm214, %v2101
      %2175 = vst.msk [vmem:[%s177 + $0x60] sm:$0xff] %vm214, %v2104
      %2176 = vst.msk [vmem:[%s177 + $0x68] sm:$0xff] %vm214, %v2107
      %2177 = vst.msk [vmem:[%s177 + $0x70] sm:$0xff] %vm214, %v2110
      %2178 = vst.msk [vmem:[%s177 + $0x78] sm:$0xff] %vm214, %v2113
      %2179 = vst.msk [vmem:[%s177 + $0x80] sm:$0xff] %vm214, %v2116
      %2180 = vst.msk [vmem:[%s177 + $0x88] sm:$0xff] %vm214, %v2119
      %2181 = vst.msk [vmem:[%s177 + $0x90] sm:$0xff] %vm214, %v2122
      %2182 = vst.msk [vmem:[%s177 + $0x98] sm:$0xff] %vm214, %v2125
      %2183 = vst.msk [vmem:[%s177 + $0xa0] sm:$0xff] %vm214, %v2128
      %2184 = vst.msk [vmem:[%s177 + $0xa8] sm:$0xff] %vm214, %v2131
      %2185 = vst.msk [vmem:[%s177 + $0xb0] sm:$0xff] %vm214, %v2134
      %2186 = vst.msk [vmem:[%s177 + $0xb8] sm:$0xff] %vm214, %v2137
      %2187 = vst.msk [vmem:[%s177 + $0xc0] sm:$0xff] %vm214, %v2140
      %2188 = vst.msk [vmem:[%s177 + $0xc8] sm:$0xff] %vm214, %v2143
      %2189 = vst.msk [vmem:[%s177 + $0xd0] sm:$0xff] %vm214, %v2146
      %2190 = vst.msk [vmem:[%s177 + $0xd8] sm:$0xff] %vm214, %v2149
      %2191 = vst.msk [vmem:[%s177 + $0xe0] sm:$0xff] %vm214, %v2152
      %2192 = vst.msk [vmem:[%s177 + $0xe8] sm:$0xff] %vm214, %v2155
      %2193 = vst.msk [vmem:[%s177 + $0xf0] sm:$0xff] %vm214, %v2158
      %2194 = vst.msk [vmem:[%s177 + $0xf8] sm:$0xff] %vm214, %v2161
      %v2195 = vsel %vm214, %v2068, 0.0
      %v2196 = vsel %vm214, %v2071, 0.0
      %v2197 = vadd.f32 %v2195, %v2196
      %v2198 = vsel %vm214, %v2074, 0.0
      %v2199 = vadd.f32 %v2197, %v2198
      %v2200 = vsel %vm214, %v2077, 0.0
      %v2201 = vadd.f32 %v2199, %v2200
      %v2202 = vsel %vm214, %v2080, 0.0
      %v2203 = vadd.f32 %v2201, %v2202
      %v2204 = vsel %vm214, %v2083, 0.0
      %v2205 = vadd.f32 %v2203, %v2204
      %v2206 = vsel %vm214, %v2086, 0.0
      %v2207 = vadd.f32 %v2205, %v2206
      %v2208 = vsel %vm214, %v2089, 0.0
      %v2209 = vadd.f32 %v2207, %v2208
      %v2210 = vsel %vm214, %v2092, 0.0
      %v2211 = vadd.f32 %v2209, %v2210
      %v2212 = vsel %vm214, %v2095, 0.0
      %v2213 = vadd.f32 %v2211, %v2212
      %v2214 = vsel %vm214, %v2098, 0.0
      %v2215 = vadd.f32 %v2213, %v2214
      %v2216 = vsel %vm214, %v2101, 0.0
      %v2217 = vadd.f32 %v2215, %v2216
      %v2218 = vsel %vm214, %v2104, 0.0
      %v2219 = vadd.f32 %v2217, %v2218
      %v2220 = vsel %vm214, %v2107, 0.0
      %v2221 = vadd.f32 %v2219, %v2220
      %v2222 = vsel %vm214, %v2110, 0.0
      %v2223 = vadd.f32 %v2221, %v2222
      %v2224 = vsel %vm214, %v2113, 0.0
      %v2225 = vadd.f32 %v2223, %v2224
      %v2226 = vsel %vm214, %v2116, 0.0
      %v2227 = vadd.f32 %v2225, %v2226
      %v2228 = vsel %vm214, %v2119, 0.0
      %v2229 = vadd.f32 %v2227, %v2228
      %v2230 = vsel %vm214, %v2122, 0.0
      %v2231 = vadd.f32 %v2229, %v2230
      %v2232 = vsel %vm214, %v2125, 0.0
      %v2233 = vadd.f32 %v2231, %v2232
      %v2234 = vsel %vm214, %v2128, 0.0
      %v2235 = vadd.f32 %v2233, %v2234
      %v2236 = vsel %vm214, %v2131, 0.0
      %v2237 = vadd.f32 %v2235, %v2236
      %v2238 = vsel %vm214, %v2134, 0.0
      %v2239 = vadd.f32 %v2237, %v2238
      %v2240 = vsel %vm214, %v2137, 0.0
      %v2241 = vadd.f32 %v2239, %v2240
      %v2242 = vsel %vm214, %v2140, 0.0
      %v2243 = vadd.f32 %v2241, %v2242
      %v2244 = vsel %vm214, %v2143, 0.0
      %v2245 = vadd.f32 %v2243, %v2244
      %v2246 = vsel %vm214, %v2146, 0.0
      %v2247 = vadd.f32 %v2245, %v2246
      %v2248 = vsel %vm214, %v2149, 0.0
      %v2249 = vadd.f32 %v2247, %v2248
      %v2250 = vsel %vm214, %v2152, 0.0
      %v2251 = vadd.f32 %v2249, %v2250
      %v2252 = vsel %vm214, %v2155, 0.0
      %v2253 = vadd.f32 %v2251, %v2252
      %v2254 = vsel %vm214, %v2158, 0.0
      %v2255 = vadd.f32 %v2253, %v2254
      %v2256 = vsel %vm214, %v2161, 0.0
      %v2257 = vadd.f32 %v2255, %v2256
      %v2258 = vrot.slane %v2257, 4
      %v2259 = vadd.f32 %v2257, %v2258
      %v2260 = vrot.slane %v2259, 2
      %v2261 = vadd.f32 %v2259, %v2260
      %v2262 = vrot.slane %v2261, 1
      %v2263 = vadd.f32 %v2261, %v2262
      %v2264 = vmul.f32 %v2068, %v2068
      %v2265 = vmul.f32 %v2071, %v2071
      %v2266 = vmul.f32 %v2074, %v2074
      %v2267 = vmul.f32 %v2077, %v2077
      %v2268 = vmul.f32 %v2080, %v2080
      %v2269 = vmul.f32 %v2083, %v2083
      %v2270 = vmul.f32 %v2086, %v2086
      %v2271 = vmul.f32 %v2089, %v2089
      %v2272 = vmul.f32 %v2092, %v2092
      %v2273 = vmul.f32 %v2095, %v2095
      %v2274 = vmul.f32 %v2098, %v2098
      %v2275 = vmul.f32 %v2101, %v2101
      %v2276 = vmul.f32 %v2104, %v2104
      %v2277 = vmul.f32 %v2107, %v2107
      %v2278 = vmul.f32 %v2110, %v2110
      %v2279 = vmul.f32 %v2113, %v2113
      %v2280 = vmul.f32 %v2116, %v2116
      %v2281 = vmul.f32 %v2119, %v2119
      %v2282 = vmul.f32 %v2122, %v2122
      %v2283 = vmul.f32 %v2125, %v2125
      %v2284 = vmul.f32 %v2128, %v2128
      %v2285 = vmul.f32 %v2131, %v2131
      %v2286 = vmul.f32 %v2134, %v2134
      %v2287 = vmul.f32 %v2137, %v2137
      %v2288 = vmul.f32 %v2140, %v2140
      %v2289 = vmul.f32 %v2143, %v2143
      %v2290 = vmul.f32 %v2146, %v2146
      %v2291 = vmul.f32 %v2149, %v2149
      %v2292 = vmul.f32 %v2152, %v2152
      %v2293 = vmul.f32 %v2155, %v2155
      %v2294 = vmul.f32 %v2158, %v2158
      %v2295 = vmul.f32 %v2161, %v2161
      %v2296 = vsel %vm214, %v2264, 0.0
      %v2297 = vsel %vm214, %v2265, 0.0
      %v2298 = vadd.f32 %v2296, %v2297
      %v2299 = vsel %vm214, %v2266, 0.0
      %v2300 = vadd.f32 %v2298, %v2299
      %v2301 = vsel %vm214, %v2267, 0.0
      %v2302 = vadd.f32 %v2300, %v2301
      %v2303 = vsel %vm214, %v2268, 0.0
      %v2304 = vadd.f32 %v2302, %v2303
      %v2305 = vsel %vm214, %v2269, 0.0
      %v2306 = vadd.f32 %v2304, %v2305
      %v2307 = vsel %vm214, %v2270, 0.0
      %v2308 = vadd.f32 %v2306, %v2307
      %v2309 = vsel %vm214, %v2271, 0.0
      %v2310 = vadd.f32 %v2308, %v2309
      %v2311 = vsel %vm214, %v2272, 0.0
      %v2312 = vadd.f32 %v2310, %v2311
      %v2313 = vsel %vm214, %v2273, 0.0
      %v2314 = vadd.f32 %v2312, %v2313
      %v2315 = vsel %vm214, %v2274, 0.0
      %v2316 = vadd.f32 %v2314, %v2315
      %v2317 = vsel %vm214, %v2275, 0.0
      %v2318 = vadd.f32 %v2316, %v2317
      %v2319 = vsel %vm214, %v2276, 0.0
      %v2320 = vadd.f32 %v2318, %v2319
      %v2321 = vsel %vm214, %v2277, 0.0
      %v2322 = vadd.f32 %v2320, %v2321
      %v2323 = vsel %vm214, %v2278, 0.0
      %v2324 = vadd.f32 %v2322, %v2323
      %v2325 = vsel %vm214, %v2279, 0.0
      %v2326 = vadd.f32 %v2324, %v2325
      %v2327 = vsel %vm214, %v2280, 0.0
      %v2328 = vadd.f32 %v2326, %v2327
      %v2329 = vsel %vm214, %v2281, 0.0
      %v2330 = vadd.f32 %v2328, %v2329
      %v2331 = vsel %vm214, %v2282, 0.0
      %v2332 = vadd.f32 %v2330, %v2331
      %v2333 = vsel %vm214, %v2283, 0.0
      %v2334 = vadd.f32 %v2332, %v2333
      %v2335 = vsel %vm214, %v2284, 0.0
      %v2336 = vadd.f32 %v2334, %v2335
      %v2337 = vsel %vm214, %v2285, 0.0
      %v2338 = vadd.f32 %v2336, %v2337
      %v2339 = vsel %vm214, %v2286, 0.0
      %v2340 = vadd.f32 %v2338, %v2339
      %v2341 = vsel %vm214, %v2287, 0.0
      %v2342 = vadd.f32 %v2340, %v2341
      %v2343 = vsel %vm214, %v2288, 0.0
      %v2344 = vadd.f32 %v2342, %v2343
      %v2345 = vsel %vm214, %v2289, 0.0
      %v2346 = vadd.f32 %v2344, %v2345
      %v2347 = vsel %vm214, %v2290, 0.0
      %v2348 = vadd.f32 %v2346, %v2347
      %v2349 = vsel %vm214, %v2291, 0.0
      %v2350 = vadd.f32 %v2348, %v2349
      %v2351 = vsel %vm214, %v2292, 0.0
      %v2352 = vadd.f32 %v2350, %v2351
      %v2353 = vsel %vm214, %v2293, 0.0
      %v2354 = vadd.f32 %v2352, %v2353
      %v2355 = vsel %vm214, %v2294, 0.0
      %v2356 = vadd.f32 %v2354, %v2355
      %v2357 = vsel %vm214, %v2295, 0.0
      %v2358 = vadd.f32 %v2356, %v2357
      %v2359 = vrot.slane %v2358, 4
      %v2360 = vadd.f32 %v2358, %v2359
      %v2361 = vrot.slane %v2360, 2
      %v2362 = vadd.f32 %v2360, %v2361
      %v2363 = vrot.slane %v2362, 1
      %v2364 = vadd.f32 %v2362, %v2363
      %vm2365 = vcmask 1040384
      %v2366 = vsel %vm2365, %v2263, %v2364
      %2367 = vst.msk [vmem:[%s181] sm:$0x3] %vm217, %v2366
      %p2368 = scmp.lt.s32.totalorder %s15, 1
      %s2369 = scalar_select %p2368, %s15, 1
      %s2370 = smul.addr %s2369, 32
      %s2371 = smul.addr %s2370, 8
      %s2372 = scalar_lea.vmem %s2, %s2371
      %p2373 = scmp.lt.s32.totalorder %s15, 1
      %s2374 = scalar_select %p2373, %s15, 1
      %s2375 = smul.addr %s2374, 2
      %s2376 = scalar_lea.vmem %s3, %s2375
      // Predicated region
      $region29: #{conv_block_forward.3} parent=27 // pred_check
        %p2377 = pneg %p80
      $region30: #{conv_block_forward.3} parent=27 // pred_check_branch
        %2379 = sbr.rel (%p2377) target = $region32
      $region31: #{conv_block_forward.3} parent=27 // pred_region
        _
      $region32: #{conv_block_forward.3} parent=27 // pred_fallthru
        _
      // Predicated region
      $region33: #{conv_block_forward.3} parent=27 // pred_check
        %p2380 = pneg %p106
      $region34: #{conv_block_forward.3} parent=27 // pred_check_branch
        %2382 = sbr.rel (%p2380) target = $region36
      $region35: #{conv_block_forward.3} parent=27 // pred_region
        _
      $region36: #{conv_block_forward.3} parent=27 // pred_fallthru
        _
    $region28: #{conv_block_forward.3} parent=5 // pred_fallthru
      _
    %p2383 = scmp.le.s32.totalorder 2, %s10
    // Predicated region
    $region37: #{conv_block_forward.3} parent=5 // pred_check
      %p2384 = pneg %p2383
    $region38: #{conv_block_forward.3} parent=5 // pred_check_branch
      %2386 = sbr.rel (%p2384) target = $region40
    $region39: #{conv_block_forward.3} parent=5 // pred_region
      %s2387 = ssub.s32 %s10, 2
      // Predicated region
      $region41: #{conv_block_forward.3} parent=39 // pred_check
        %p2388 = pneg %p86
      $region42: #{conv_block_forward.3} parent=39 // pred_check_branch
        %2390 = sbr.rel (%p2388) target = $region44
      $region43: #{conv_block_forward.3} parent=39 // pred_region
        %p2391 = scmp.lt.s32.totalorder %s16, 1
        %s2392 = scalar_select %p2391, %s16, 1
        %s2393 = smul.addr %s2392, 32
        %s2394 = smul.addr %s2393, 8
        %s2395 = scalar_lea.vmem %s2, %s2394
      $region44: #{conv_block_forward.3} parent=39 // pred_fallthru
        _
      // Predicated region
      $region45: #{conv_block_forward.3} parent=39 // pred_check
        %p2396 = pneg %p112
      $region46: #{conv_block_forward.3} parent=39 // pred_check_branch
        %2398 = sbr.rel (%p2396) target = $region48
      $region47: #{conv_block_forward.3} parent=39 // pred_region
        %p2399 = scmp.lt.s32.totalorder %s16, 1
        %s2400 = scalar_select %p2399, %s16, 1
        %s2401 = smul.addr %s2400, 2
        %s2402 = scalar_lea.vmem %s3, %s2401
      $region48: #{conv_block_forward.3} parent=39 // pred_fallthru
        _
    $region40: #{conv_block_forward.3} parent=5 // pred_fallthru
      _
  $region6: #{conv_block_forward.3} parent=0 // loop_footer
    %s14 = sadd.s32 1, %s10
  $region7: #{conv_block_forward.3} parent=0 // loop_footer_branch
    %9 = sbr.rel target = $region3
  $region8: #{conv_block_forward.3} parent=0 // loop_exit
    _

// kernel: conv_block_forward.4
$region0: #{conv_block_forward.4}
  #allocation0 [shape = 'u32[]', space=smem, size = 0x4, offset = 0x4, fixed_abs, tag = 'smem constant byte address 0x4 - core index']
  #allocation1 [shape = 'u32[72,128]{1,0:T(1,128)}', space=vmem, size = 0x9000, scoped, tag = 'internal scratch']
  #allocation2 [shape = 'f32[18,18,4]{2,1,0:T(8,128)}', space=vmem, size = 0x36000, scoped, tag = 'scratch operand']
  #allocation3 [shape = 'f32[256,36]{1,0:T(8,128)}', space=vmem, size = 0x20000, scoped, tag = 'scratch operand']
  %s0 = inlined_call_operand.vmem [shape: f32[2,16,16,4], index: 0, kind: input, shape index: {}]
  %s1 = inlined_call_operand.vmem [shape: f32[1,4], index: 1, kind: input, shape index: {}]
  %s2 = inlined_call_operand.vmem [shape: f32[1,4], index: 2, kind: input, shape index: {}]
  %s3 = inlined_call_operand.vmem [shape: f32[36,4], index: 3, kind: input, shape index: {}]
  %s4 = inlined_call_operand.vmem [shape: f32[2,16,16,4], index: 4, kind: output, shape index: {0}]
  %s5 = inlined_call_operand.vmem [shape: f32[2,2,4], index: 5, kind: output, shape index: {1}]
  %6 = xla_tuple %s4, %s5
  %s7 = sld [smem:[#allocation0]]
  $region57: #{conv_block_forward.4} parent=0
    _
  %s9 = ssub.s32 1, %s7
  %s10 = scalar_select 0, %s9, %s7
  loop: start=0, step=1, limit=4
  $region2: #{conv_block_forward.4} parent=0 // loop_pre_header
    _
  $region3: #{conv_block_forward.4} parent=0 // loop_header
    %s12 = sphi 0, %s16
    %p13 = scmp.ge.s32.totalorder %s12, 4
    %s22 = sphi 0, %s24
    %s25 = sphi 0, %s22
    %s26 = sphi 0, %s25
    %s42 = sphi 0, %s26
    %s46 = sphi 0, %s46
    %s48 = sphi 0, %s46
    %s49 = sphi 0, %s48
    %s63 = sphi 0, %s49
    %s67 = sphi 0, %s67
    %s69 = sphi 0, %s67
    %s70 = sphi 0, %s69
    %s84 = sphi 0, %s70
    %s88 = sphi 0, %s88
    %s90 = sphi 0, %s88
    %s91 = sphi 0, %s90
    %s105 = sphi 0, %s91
    %s111 = sphi 0, %s113
    %s114 = sphi 0, %s111
    %s115 = sphi 0, %s114
    %s131 = sphi 0, %s115
    %s137 = sphi 0, %s139
    %s140 = sphi 0, %s137
    %s141 = sphi 0, %s140
    %s157 = sphi 0, %s141
  $region4: #{conv_block_forward.4} parent=0 // loop_header_branch
    %15 = sbr.rel (%p13) target = $region8
  $region5: #{conv_block_forward.4} parent=0 // loop_body
    %s17 = ssub.s32 %s12, 1
    %s18 = ssub.s32 %s12, 2
    %s19 = sadd.s32 %s12, 1
    %s20 = ssub.s32 %s12, %s19
    %p21 = scmp.eq.s32.totalorder %s20, 0
    %s23 = sadd.s32 %s22, 1
    %s24 = scalar_select %p21, %s22, %s23
    %p27 = pneg %p21
    %p28 = scmp.eq.s32.totalorder %s12, 1
    %p29 = por %p27, %p28
    %p30 = scmp.ne.s32.totalorder %s22, %s25
    %p31 = scmp.eq.s32.totalorder %s12, 0
    %p32 = por %p30, %p31
    %p33 = scmp.ne.s32.totalorder %s22, %s25
    %p34 = scmp.eq.s32.totalorder %s17, 1
    %p35 = por %p33, %p34
    %p36 = scmp.ne.s32.totalorder %s25, %s26
    %p37 = scmp.eq.s32.totalorder %s17, 0
    %p38 = por %p36, %p37
    %p39 = scmp.ne.s32.totalorder %s25, %s26
    %p40 = scmp.eq.s32.totalorder %s18, 1
    %p41 = por %p39, %p40
    %p43 = scmp.ne.s32.totalorder %s26, %s42
    %p44 = scmp.eq.s32.totalorder %s18, 0
    %p45 = por %p43, %p44
    %s47 = sadd.s32 %s46, 1
    %p50 = scmp.eq.s32.totalorder %s12, 1
    %p51 = scmp.ne.s32.totalorder %s46, %s48
    %p52 = scmp.eq.s32.totalorder %s12, 0
    %p53 = por %p51, %p52
    %p54 = scmp.ne.s32.totalorder %s46, %s48
    %p55 = scmp.eq.s32.totalorder %s17, 1
    %p56 = por %p54, %p55
    %p57 = scmp.ne.s32.totalorder %s48, %s49
    %p58 = scmp.eq.s32.totalorder %s17, 0
    %p59 = por %p57, %p58
    %p60 = scmp.ne.s32.totalorder %s48, %s49
    %p61 = scmp.eq.s32.totalorder %s18, 1
    %p62 = por %p60, %p61
    %p64 = scmp.ne.s32.totalorder %s49, %s63
    %p65 = scmp.eq.s32.totalorder %s18, 0
    %p66 = por %p64, %p65
    %s68 = sadd.s32 %s67, 1
    %p71 = scmp.eq.s32.totalorder %s12, 1
    %p72 = scmp.ne.s32.totalorder %s67, %s69
    %p73 = scmp.eq.s32.totalorder %s12, 0
    %p74 = por %p72, %p73
    %p75 = scmp.ne.s32.totalorder %s67, %s69
    %p76 = scmp.eq.s32.totalorder %s17, 1
    %p77 = por %p75, %p76
    %p78 = scmp.ne.s32.totalorder %s69, %s70
    %p79 = scmp.eq.s32.totalorder %s17, 0
    %p80 = por %p78, %p79
    %p81 = scmp.ne.s32.totalorder %s69, %s70
    %p82 = scmp.eq.s32.totalorder %s18, 1
    %p83 = por %p81, %p82
    %p85 = scmp.ne.s32.totalorder %s70, %s84
    %p86 = scmp.eq.s32.totalorder %s18, 0
    %p87 = por %p85, %p86
    %s89 = sadd.s32 %s88, 1
    %p92 = scmp.eq.s32.totalorder %s12, 1
    %p93 = scmp.ne.s32.totalorder %s88, %s90
    %p94 = scmp.eq.s32.totalorder %s12, 0
    %p95 = por %p93, %p94
    %p96 = scmp.ne.s32.totalorder %s88, %s90
    %p97 = scmp.eq.s32.totalorder %s17, 1
    %p98 = por %p96, %p97
    %p99 = scmp.ne.s32.totalorder %s90, %s91
    %p100 = scmp.eq.s32.totalorder %s17, 0
    %p101 = por %p99, %p100
    %p102 = scmp.ne.s32.totalorder %s90, %s91
    %p103 = scmp.eq.s32.totalorder %s18, 1
    %p104 = por %p102, %p103
    %p106 = scmp.ne.s32.totalorder %s91, %s105
    %p107 = scmp.eq.s32.totalorder %s18, 0
    %p108 = por %p106, %p107
    %s109 = ssub.s32 %s12, %s19
    %p110 = scmp.eq.s32.totalorder %s109, 0
    %s112 = sadd.s32 %s111, 1
    %s113 = scalar_select %p110, %s111, %s112
    %p116 = pneg %p110
    %p117 = scmp.eq.s32.totalorder %s12, 1
    %p118 = por %p116, %p117
    %p119 = scmp.ne.s32.totalorder %s111, %s114
    %p120 = scmp.eq.s32.totalorder %s12, 0
    %p121 = por %p119, %p120
    %p122 = scmp.ne.s32.totalorder %s111, %s114
    %p123 = scmp.eq.s32.totalorder %s17, 1
    %p124 = por %p122, %p123
    %p125 = scmp.ne.s32.totalorder %s114, %s115
    %p126 = scmp.eq.s32.totalorder %s17, 0
    %p127 = por %p125, %p126
    %p128 = scmp.ne.s32.totalorder %s114, %s115
    %p129 = scmp.eq.s32.totalorder %s18, 1
    %p130 = por %p128, %p129
    %p132 = scmp.ne.s32.totalorder %s115, %s131
    %p133 = scmp.eq.s32.totalorder %s18, 0
    %p134 = por %p132, %p133
    %s135 = ssub.s32 %s12, %s19
    %p136 = scmp.eq.s32.totalorder %s135, 0
    %s138 = sadd.s32 %s137, 1
    %s139 = scalar_select %p136, %s137, %s138
    %p142 = pneg %p136
    %p143 = scmp.eq.s32.totalorder %s12, 1
    %p144 = por %p142, %p143
    %p145 = scmp.ne.s32.totalorder %s137, %s140
    %p146 = scmp.eq.s32.totalorder %s12, 0
    %p147 = por %p145, %p146
    %p148 = scmp.ne.s32.totalorder %s137, %s140
    %p149 = scmp.eq.s32.totalorder %s17, 1
    %p150 = por %p148, %p149
    %p151 = scmp.ne.s32.totalorder %s140, %s141
    %p152 = scmp.eq.s32.totalorder %s17, 0
    %p153 = por %p151, %p152
    %p154 = scmp.ne.s32.totalorder %s140, %s141
    %p155 = scmp.eq.s32.totalorder %s18, 1
    %p156 = por %p154, %p155
    %p158 = scmp.ne.s32.totalorder %s141, %s157
    %p159 = scmp.eq.s32.totalorder %s18, 0
    %p160 = por %p158, %p159
    %p161 = scmp.le.s32.totalorder 1, %s12
    %p162 = scmp.lt.s32.totalorder %s12, 3
    %p163 = pnand %p161, %p162
    %p164 = pneg %p163
    // Predicated region
    $region9: #{conv_block_forward.4} parent=5 // pred_check
      _
    $region10: #{conv_block_forward.4} parent=5 // pred_check_branch
      %166 = sbr.rel (%p163) target = $region12
    $region11: #{conv_block_forward.4} parent=5 // pred_region
      %s167 = ssub.s32 %s12, 1
      // Predicated region
      $region13: #{conv_block_forward.4} parent=11 // pred_check
        %p168 = pneg %p59
      $region14: #{conv_block_forward.4} parent=11 // pred_check_branch
        %170 = sbr.rel (%p168) target = $region16
      $region15: #{conv_block_forward.4} parent=11 // pred_region
        _
      $region16: #{conv_block_forward.4} parent=11 // pred_fallthru
        _
      // Predicated region
      $region17: #{conv_block_forward.4} parent=11 // pred_check
        %p171 = pneg %p80
      $region18: #{conv_block_forward.4} parent=11 // pred_check_branch
        %173 = sbr.rel (%p171) target = $region20
      $region19: #{conv_block_forward.4} parent=11 // pred_region
        _
      $region20: #{conv_block_forward.4} parent=11 // pred_fallthru
        _
      // Predicated region
      $region21: #{conv_block_forward.4} parent=11 // pred_check
        %p174 = pneg %p101
      $region22: #{conv_block_forward.4} parent=11 // pred_check_branch
        %176 = sbr.rel (%p174) target = $region24
      $region23: #{conv_block_forward.4} parent=11 // pred_region
        _
      $region24: #{conv_block_forward.4} parent=11 // pred_fallthru
        _
    $region12: #{conv_block_forward.4} parent=5 // pred_fallthru
      _
    %p177 = scmp.lt.s32.totalorder %s12, 2
    // Predicated region
    $region25: #{conv_block_forward.4} parent=5 // pred_check
      %p178 = pneg %p177
    $region26: #{conv_block_forward.4} parent=5 // pred_check_branch
      %180 = sbr.rel (%p178) target = $region28
    $region27: #{conv_block_forward.4} parent=5 // pred_region
      // Predicated region
      $region29: #{conv_block_forward.4} parent=27 // pred_check
        %p181 = pneg %p32
      $region30: #{conv_block_forward.4} parent=27 // pred_check_branch
        %183 = sbr.rel (%p181) target = $region32
      $region31: #{conv_block_forward.4} parent=27 // pred_region
        %p184 = scmp.lt.s32.totalorder %s12, 1
        %s185 = scalar_select %p184, %s12, 1
        %s186 = smul.addr %s185, 32
        %s187 = smul.addr %s186, 8
        %s188 = scalar_lea.vmem %s0, %s187
      $region32: #{conv_block_forward.4} parent=27 // pred_fallthru
        _
    $region28: #{conv_block_forward.4} parent=5 // pred_fallthru
      _
    %p189 = scmp.le.s32.totalorder 1, %s12
    %p190 = scmp.lt.s32.totalorder %s12, 3
    %p191 = pnand %p189, %p190
    %p192 = pneg %p191
    // Predicated region
    $region33: #{conv_block_forward.4} parent=5 // pred_check
      _
    $region34: #{conv_block_forward.4} parent=5 // pred_check_branch
      %194 = sbr.rel (%p191) target = $region36
    $region35: #{conv_block_forward.4} parent=5 // pred_region
      %s195 = ssub.s32 %s12, 1
      %p196 = scmp.lt.s32.totalorder %s17, 1
      %s197 = scalar_select %p196, %s17, 1
      %s198 = smul.addr %s197, 32
      %s199 = smul.addr %s198, 8
      %s200 = scalar_lea.vmem %s0, %s199
      %p201 = pneg %p38
      %p202 = pneg %p35
      %p203 = pneg %p59
      %p204 = pneg %p56
      %p205 = pneg %p80
      %p206 = pneg %p77
      %p207 = pneg %p101
      %p208 = pneg %p98
      %p209 = pneg %p127
      %p210 = pneg %p124
      %p211 = scmp.lt.s32.totalorder %s17, 1
      %s212 = scalar_select %p211, %s17, 1
      %s213 = smul.addr %s212, 32
      %s214 = smul.addr %s213, 8
      %s215 = scalar_lea.vmem %s4, %s214
      %p216 = pneg %p153
      %p217 = pneg %p150
      %p218 = scmp.lt.s32.totalorder %s17, 1
      %s219 = scalar_select %p218, %s17, 1
      %s220 = smul.addr %s219, 2
      %s221 = scalar_lea.vmem %s5, %s220
      %p222 = scmp.lt.s32.totalorder %s17, 1
      %s223 = scalar_select %p222, %s17, 1
      %s224 = smul.addr %s223, 32
      %s225 = smul.addr %s224, 8
      %s226 = scalar_lea.vmem %s0, %s225
      %p227 = scmp.lt.s32.totalorder %s17, 1
      %s228 = scalar_select %p227, %s17, 1
      %s229 = smul.addr %s228, 32
      %s230 = smul.addr %s229, 8
      %s231 = scalar_lea.vmem %s4, %s230
      %p232 = scmp.lt.s32.totalorder %s17, 1
      %s233 = scalar_select %p232, %s17, 1
      %s234 = smul.addr %s233, 2
      %s235 = scalar_lea.vmem %s5, %s234
      %v236 = vld [vmem:[%s226] sm:$0xff]
      %v237 = vld [vmem:[%s226 + $0x8] sm:$0xff]
      %v238 = vld [vmem:[%s226 + $0x10] sm:$0xff]
      %v239 = vld [vmem:[%s226 + $0x18] sm:$0xff]
      %v240 = vld [vmem:[%s226 + $0x20] sm:$0xff]
      %v241 = vld [vmem:[%s226 + $0x28] sm:$0xff]
      %v242 = vld [vmem:[%s226 + $0x30] sm:$0xff]
      %v243 = vld [vmem:[%s226 + $0x38] sm:$0xff]
      %v244 = vld [vmem:[%s226 + $0x40] sm:$0xff]
      %v245 = vld [vmem:[%s226 + $0x48] sm:$0xff]
      %v246 = vld [vmem:[%s226 + $0x50] sm:$0xff]
      %v247 = vld [vmem:[%s226 + $0x58] sm:$0xff]
      %v248 = vld [vmem:[%s226 + $0x60] sm:$0xff]
      %v249 = vld [vmem:[%s226 + $0x68] sm:$0xff]
      %v250 = vld [vmem:[%s226 + $0x70] sm:$0xff]
      %v251 = vld [vmem:[%s226 + $0x78] sm:$0xff]
      %v252 = vld [vmem:[%s226 + $0x80] sm:$0xff]
      %v253 = vld [vmem:[%s226 + $0x88] sm:$0xff]
      %v254 = vld [vmem:[%s226 + $0x90] sm:$0xff]
      %v255 = vld [vmem:[%s226 + $0x98] sm:$0xff]
      %v256 = vld [vmem:[%s226 + $0xa0] sm:$0xff]
      %v257 = vld [vmem:[%s226 + $0xa8] sm:$0xff]
      %v258 = vld [vmem:[%s226 + $0xb0] sm:$0xff]
      %v259 = vld [vmem:[%s226 + $0xb8] sm:$0xff]
      %v260 = vld [vmem:[%s226 + $0xc0] sm:$0xff]
      %v261 = vld [vmem:[%s226 + $0xc8] sm:$0xff]
      %v262 = vld [vmem:[%s226 + $0xd0] sm:$0xff]
      %v263 = vld [vmem:[%s226 + $0xd8] sm:$0xff]
      %v264 = vld [vmem:[%s226 + $0xe0] sm:$0xff]
      %v265 = vld [vmem:[%s226 + $0xe8] sm:$0xff]
      %v266 = vld [vmem:[%s226 + $0xf0] sm:$0xff]
      %v267 = vld [vmem:[%s226 + $0xf8] sm:$0xff]
      %v268 = vld [vmem:[%s1] sm:$0x1]
      %v270 = vperm.slane %v268, 0
      %v272 = vmul.f32 %v236, %v270
      %v273 = vmul.f32 %v237, %v270
      %v274 = vmul.f32 %v238, %v270
      %v275 = vmul.f32 %v239, %v270
      %v276 = vmul.f32 %v240, %v270
      %v277 = vmul.f32 %v241, %v270
      %v278 = vmul.f32 %v242, %v270
      %v279 = vmul.f32 %v243, %v270
      %v280 = vmul.f32 %v244, %v270
      %v281 = vmul.f32 %v245, %v270
      %v282 = vmul.f32 %v246, %v270
      %v283 = vmul.f32 %v247, %v270
      %v284 = vmul.f32 %v248, %v270
      %v285 = vmul.f32 %v249, %v270
      %v286 = vmul.f32 %v250, %v270
      %v287 = vmul.f32 %v251, %v270
      %v288 = vmul.f32 %v252, %v270
      %v289 = vmul.f32 %v253, %v270
      %v290 = vmul.f32 %v254, %v270
      %v291 = vmul.f32 %v255, %v270
      %v292 = vmul.f32 %v256, %v270
      %v293 = vmul.f32 %v257, %v270
      %v294 = vmul.f32 %v258, %v270
      %v295 = vmul.f32 %v259, %v270
      %v296 = vmul.f32 %v260, %v270
      %v297 = vmul.f32 %v261, %v270
      %v298 = vmul.f32 %v262, %v270
      %v299 = vmul.f32 %v263, %v270
      %v300 = vmul.f32 %v264, %v270
      %v301 = vmul.f32 %v265, %v270
      %v302 = vmul.f32 %v266, %v270
      %v303 = vmul.f32 %v267, %v270
      %v304 = vld [vmem:[%s2] sm:$0x1]
      %v306 = vperm.slane %v304, 0
      %v308 = vadd.f32 %v272, %v306
      %v309 = vadd.f32 %v273, %v306
      %v310 = vadd.f32 %v274, %v306
      %v311 = vadd.f32 %v275, %v306
      %v312 = vadd.f32 %v276, %v306
      %v313 = vadd.f32 %v277, %v306
      %v314 = vadd.f32 %v278, %v306
      %v315 = vadd.f32 %v279, %v306
      %v316 = vadd.f32 %v280, %v306
      %v317 = vadd.f32 %v281, %v306
      %v318 = vadd.f32 %v282, %v306
      %v319 = vadd.f32 %v283, %v306
      %v320 = vadd.f32 %v284, %v306
      %v321 = vadd.f32 %v285, %v306
      %v322 = vadd.f32 %v286, %v306
      %v323 = vadd.f32 %v287, %v306
      %v324 = vadd.f32 %v288, %v306
      %v325 = vadd.f32 %v289, %v306
      %v326 = vadd.f32 %v290, %v306
      %v327 = vadd.f32 %v291, %v306
      %v328 = vadd.f32 %v292, %v306
      %v329 = vadd.f32 %v293, %v306
      %v330 = vadd.f32 %v294, %v306
      %v331 = vadd.f32 %v295, %v306
      %v332 = vadd.f32 %v296, %v306
      %v333 = vadd.f32 %v297, %v306
      %v334 = vadd.f32 %v298, %v306
      %v335 = vadd.f32 %v299, %v306
      %v336 = vadd.f32 %v300, %v306
      %v337 = vadd.f32 %v301, %v306
      %v338 = vadd.f32 %v302, %v306
      %v339 = vadd.f32 %v303, %v306
      %v340 = vmax.f32 %v308, 0.0
      %v341 = vmax.f32 %v309, 0.0
      %v342 = vmax.f32 %v310, 0.0
      %v343 = vmax.f32 %v311, 0.0
      %v344 = vmax.f32 %v312, 0.0
      %v345 = vmax.f32 %v313, 0.0
      %v346 = vmax.f32 %v314, 0.0
      %v347 = vmax.f32 %v315, 0.0
      %v348 = vmax.f32 %v316, 0.0
      %v349 = vmax.f32 %v317, 0.0
      %v350 = vmax.f32 %v318, 0.0
      %v351 = vmax.f32 %v319, 0.0
      %v352 = vmax.f32 %v320, 0.0
      %v353 = vmax.f32 %v321, 0.0
      %v354 = vmax.f32 %v322, 0.0
      %v355 = vmax.f32 %v323, 0.0
      %v356 = vmax.f32 %v324, 0.0
      %v357 = vmax.f32 %v325, 0.0
      %v358 = vmax.f32 %v326, 0.0
      %v359 = vmax.f32 %v327, 0.0
      %v360 = vmax.f32 %v328, 0.0
      %v361 = vmax.f32 %v329, 0.0
      %v362 = vmax.f32 %v330, 0.0
      %v363 = vmax.f32 %v331, 0.0
      %v364 = vmax.f32 %v332, 0.0
      %v365 = vmax.f32 %v333, 0.0
      %v366 = vmax.f32 %v334, 0.0
      %v367 = vmax.f32 %v335, 0.0
      %v368 = vmax.f32 %v336, 0.0
      %v369 = vmax.f32 %v337, 0.0
      %v370 = vmax.f32 %v338, 0.0
      %v371 = vmax.f32 %v339, 0.0
      %vm372 = vcmask 31744
      %373 = vst.msk [vmem:[#allocation2] sm:$0xff] %vm372, 0.0
      %374 = vst.msk [vmem:[#allocation2 + $0x8] sm:$0xff] %vm372, 0.0
      %vm375 = vcmask 25600
      %376 = vst.msk [vmem:[#allocation2 + $0x10] sm:$0x3] %vm375, 0.0
      %377 = vst.msk [vmem:[#allocation2 + $0x18] sm:$0xff] %vm372, 0.0
      %378 = vst.msk [vmem:[#allocation2 + $0x20] sm:$0xff] %vm372, 0.0
      %379 = vst.msk [vmem:[#allocation2 + $0x28] sm:$0x3] %vm375, 0.0
      %380 = vst.msk [vmem:[#allocation2 + $0x30] sm:$0xff] %vm372, 0.0
      %381 = vst.msk [vmem:[#allocation2 + $0x38] sm:$0xff] %vm372, 0.0
      %382 = vst.msk [vmem:[#allocation2 + $0x40] sm:$0x3] %vm375, 0.0
      %383 = vst.msk [vmem:[#allocation2 + $0x48] sm:$0xff] %vm372, 0.0
      %384 = vst.msk [vmem:[#allocation2 + $0x50] sm:$0xff] %vm372, 0.0
      %385 = vst.msk [vmem:[#allocation2 + $0x58] sm:$0x3] %vm375, 0.0
      %386 = vst.msk [vmem:[#allocation2 + $0x60] sm:$0xff] %vm372, 0.0
      %387 = vst.msk [vmem:[#allocation2 + $0x68] sm:$0xff] %vm372, 0.0
      %388 = vst.msk [vmem:[#allocation2 + $0x70] sm:$0x3] %vm375, 0.0
      %389 = vst.msk [vmem:[#allocation2 + $0x78] sm:$0xff] %vm372, 0.0
      %390 = vst.msk [vmem:[#allocation2 + $0x80] sm:$0xff] %vm372, 0.0
      %391 = vst.msk [vmem:[#allocation2 + $0x88] sm:$0x3] %vm375, 0.0
      %392 = vst.msk [vmem:[#allocation2 + $0x90] sm:$0xff] %vm372, 0.0
      %393 = vst.msk [vmem:[#allocation2 + $0x98] sm:$0xff] %vm372, 0.0
      %394 = vst.msk [vmem:[#allocation2 + $0xa0] sm:$0x3] %vm375, 0.0
      %395 = vst.msk [vmem:[#allocation2 + $0xa8] sm:$0xff] %vm372, 0.0
      %396 = vst.msk [vmem:[#allocation2 + $0xb0] sm:$0xff] %vm372, 0.0
      %397 = vst.msk [vmem:[#allocation2 + $0xb8] sm:$0x3] %vm375, 0.0
      %398 = vst.msk [vmem:[#allocation2 + $0xc0] sm:$0xff] %vm372, 0.0
      %399 = vst.msk [vmem:[#allocation2 + $0xc8] sm:$0xff] %vm372, 0.0
      %400 = vst.msk [vmem:[#allocation2 + $0xd0] sm:$0x3] %vm375, 0.0
      %401 = vst.msk [vmem:[#allocation2 + $0xd8] sm:$0xff] %vm372, 0.0
      %402 = vst.msk [vmem:[#allocation2 + $0xe0] sm:$0xff] %vm372, 0.0
      %403 = vst.msk [vmem:[#allocation2 + $0xe8] sm:$0x3] %vm375, 0.0
      %404 = vst.msk [vmem:[#allocation2 + $0xf0] sm:$0xff] %vm372, 0.0
      %405 = vst.msk [vmem:[#allocation2 + $0xf8] sm:$0xff] %vm372, 0.0
      %406 = vst.msk [vmem:[#allocation2 + $0x100] sm:$0x3] %vm375, 0.0
      %407 = vst.msk [vmem:[#allocation2 + $0x108] sm:$0xff] %vm372, 0.0
      %408 = vst.msk [vmem:[#allocation2 + $0x110] sm:$0xff] %vm372, 0.0
      %409 = vst.msk [vmem:[#allocation2 + $0x118] sm:$0x3] %vm375, 0.0
      %410 = vst.msk [vmem:[#allocation2 + $0x120] sm:$0xff] %vm372, 0.0
      %411 = vst.msk [vmem:[#allocation2 + $0x128] sm:$0xff] %vm372, 0.0
      %412 = vst.msk [vmem:[#allocation2 + $0x130] sm:$0x3] %vm375, 0.0
      %413 = vst.msk [vmem:[#allocation2 + $0x138] sm:$0xff] %vm372, 0.0
      %414 = vst.msk [vmem:[#allocation2 + $0x140] sm:$0xff] %vm372, 0.0
      %415 = vst.msk [vmem:[#allocation2 + $0x148] sm:$0x3] %vm375, 0.0
      %416 = vst.msk [vmem:[#allocation2 + $0x150] sm:$0xff] %vm372, 0.0
      %417 = vst.msk [vmem:[#allocation2 + $0x158] sm:$0xff] %vm372, 0.0
      %418 = vst.msk [vmem:[#allocation2 + $0x160] sm:$0x3] %vm375, 0.0
      %419 = vst.msk [vmem:[#allocation2 + $0x168] sm:$0xff] %vm372, 0.0
      %420 = vst.msk [vmem:[#allocation2 + $0x170] sm:$0xff] %vm372, 0.0
      %421 = vst.msk [vmem:[#allocation2 + $0x178] sm:$0x3] %vm375, 0.0
      %422 = vst.msk [vmem:[#allocation2 + $0x180] sm:$0xff] %vm372, 0.0
      %423 = vst.msk [vmem:[#allocation2 + $0x188] sm:$0xff] %vm372, 0.0
      %424 = vst.msk [vmem:[#allocation2 + $0x190] sm:$0x3] %vm375, 0.0
      %425 = vst.msk [vmem:[#allocation2 + $0x198] sm:$0xff] %vm372, 0.0
      %426 = vst.msk [vmem:[#allocation2 + $0x1a0] sm:$0xff] %vm372, 0.0
      %427 = vst.msk [vmem:[#allocation2 + $0x1a8] sm:$0x3] %vm375, 0.0
      %s428 = scalar_lea.vmem [#allocation2], 24
      %429 = vst.msk [vmem:[%s428 + $0x1] sm:$0xff] %vm372, %v340
      %430 = vst.msk [vmem:[%s428 + $0x9] sm:$0xff] %vm372, %v341
      %431 = vst.msk [vmem:[%s428 + $0x19] sm:$0xff] %vm372, %v342
      %432 = vst.msk [vmem:[%s428 + $0x21] sm:$0xff] %vm372, %v343
      %433 = vst.msk [vmem:[%s428 + $0x31] sm:$0xff] %vm372, %v344
      %434 = vst.msk [vmem:[%s428 + $0x39] sm:$0xff] %vm372, %v345
      %435 = vst.msk [vmem:[%s428 + $0x49] sm:$0xff] %vm372, %v346
      %436 = vst.msk [vmem:[%s428 + $0x51] sm:$0xff] %vm372, %v347
      %437 = vst.msk [vmem:[%s428 + $0x61] sm:$0xff] %vm372, %v348
      %438 = vst.msk [vmem:[%s428 + $0x69] sm:$0xff] %vm372, %v349
      %439 = vst.msk [vmem:[%s428 + $0x79] sm:$0xff] %vm372, %v350
      %440 = vst.msk [vmem:[%s428 + $0x81] sm:$0xff] %vm372, %v351
      %441 = vst.msk [vmem:[%s428 + $0x91] sm:$0xff] %vm372, %v352
      %442 = vst.msk [vmem:[%s428 + $0x99] sm:$0xff] %vm372, %v353
      %443 = vst.msk [vmem:[%s428 + $0xa9] sm:$0xff] %vm372, %v354
      %444 = vst.msk [vmem:[%s428 + $0xb1] sm:$0xff] %vm372, %v355
      %445 = vst.msk [vmem:[%s428 + $0xc1] sm:$0xff] %vm372, %v356
      %446 = vst.msk [vmem:[%s428 + $0xc9] sm:$0xff] %vm372, %v357
      %447 = vst.msk [vmem:[%s428 + $0xd9] sm:$0xff] %vm372, %v358
      %448 = vst.msk [vmem:[%s428 + $0xe1] sm:$0xff] %vm372, %v359
      %449 = vst.msk [vmem:[%s428 + $0xf1] sm:$0xff] %vm372, %v360
      %450 = vst.msk [vmem:[%s428 + $0xf9] sm:$0xff] %vm372, %v361
      %451 = vst.msk [vmem:[%s428 + $0x109] sm:$0xff] %vm372, %v362
      %452 = vst.msk [vmem:[%s428 + $0x111] sm:$0xff] %vm372, %v363
      %453 = vst.msk [vmem:[%s428 + $0x121] sm:$0xff] %vm372, %v364
      %454 = vst.msk [vmem:[%s428 + $0x129] sm:$0xff] %vm372, %v365
      %455 = vst.msk [vmem:[%s428 + $0x139] sm:$0xff] %vm372, %v366
      %456 = vst.msk [vmem:[%s428 + $0x141] sm:$0xff] %vm372, %v367
      %457 = vst.msk [vmem:[%s428 + $0x151] sm:$0xff] %vm372, %v368
      %458 = vst.msk [vmem:[%s428 + $0x159] sm:$0xff] %vm372, %v369
      %459 = vst.msk [vmem:[%s428 + $0x169] sm:$0xff] %vm372, %v370
      %460 = vst.msk [vmem:[%s428 + $0x171] sm:$0xff] %vm372, %v371
      %v461 = vld [vmem:[#allocation2] sm:$0xff]
      %v462 = vld [vmem:[#allocation2 + $0x8] sm:$0xff]
      %v463 = vld [vmem:[#allocation2 + $0x18] sm:$0xff]
      %v464 = vld [vmem:[#allocation2 + $0x20] sm:$0xff]
      %v465 = vld [vmem:[#allocation2 + $0x30] sm:$0xff]
      %v466 = vld [vmem:[#allocation2 + $0x38] sm:$0xff]
      %v467 = vld [vmem:[#allocation2 + $0x48] sm:$0xff]
      %v468 = vld [vmem:[#allocation2 + $0x50] sm:$0xff]
      %v469 = vld [vmem:[#allocation2 + $0x60] sm:$0xff]
      %v470 = vld [vmem:[#allocation2 + $0x68] sm:$0xff]
      %v471 = vld [vmem:[#allocation2 + $0x78] sm:$0xff]
      %v472 = vld [vmem:[#allocation2 + $0x80] sm:$0xff]
      %v473 = vld [vmem:[#allocation2 + $0x90] sm:$0xff]
      %v474 = vld [vmem:[#allocation2 + $0x98] sm:$0xff]
      %v475 = vld [vmem:[#allocation2 + $0xa8] sm:$0xff]
      %v476 = vld [vmem:[#allocation2 + $0xb0] sm:$0xff]
      %v477 = vld [vmem:[#allocation2 + $0xc0] sm:$0xff]
      %v478 = vld [vmem:[#allocation2 + $0xc8] sm:$0xff]
      %v479 = vld [vmem:[#allocation2 + $0xd8] sm:$0xff]
      %v480 = vld [vmem:[#allocation2 + $0xe0] sm:$0xff]
      %v481 = vld [vmem:[#allocation2 + $0xf0] sm:$0xff]
      %v482 = vld [vmem:[#allocation2 + $0xf8] sm:$0xff]
      %v483 = vld [vmem:[#allocation2 + $0x108] sm:$0xff]
      %v484 = vld [vmem:[#allocation2 + $0x110] sm:$0xff]
      %v485 = vld [vmem:[#allocation2 + $0x120] sm:$0xff]
      %v486 = vld [vmem:[#allocation2 + $0x128] sm:$0xff]
      %v487 = vld [vmem:[#allocation2 + $0x138] sm:$0xff]
      %v488 = vld [vmem:[#allocation2 + $0x140] sm:$0xff]
      %v489 = vld [vmem:[#allocation2 + $0x150] sm:$0xff]
      %v490 = vld [vmem:[#allocation2 + $0x158] sm:$0xff]
      %v491 = vld [vmem:[#allocation2 + $0x168] sm:$0xff]
      %v492 = vld [vmem:[#allocation2 + $0x170] sm:$0xff]
      %493 = vst.msk [vmem:[#allocation3] sm:$0xff] %vm372, %v461
      %494 = vst.msk [vmem:[#allocation3 + $0x8] sm:$0xff] %vm372, %v462
      %495 = vst.msk [vmem:[#allocation3 + $0x10] sm:$0xff] %vm372, %v463
      %496 = vst.msk [vmem:[#allocation3 + $0x18] sm:$0xff] %vm372, %v464
      %497 = vst.msk [vmem:[#allocation3 + $0x20] sm:$0xff] %vm372, %v465
      %498 = vst.msk [vmem:[#allocation3 + $0x28] sm:$0xff] %vm372, %v466
      %499 = vst.msk [vmem:[#allocation3 + $0x30] sm:$0xff] %vm372, %v467
      %500 = vst.msk [vmem:[#allocation3 + $0x38] sm:$0xff] %vm372, %v468
      %501 = vst.msk [vmem:[#allocation3 + $0x40] sm:$0xff] %vm372, %v469
      %502 = vst.msk [vmem:[#allocation3 + $0x48] sm:$0xff] %vm372, %v470
      %503 = vst.msk [vmem:[#allocation3 + $0x50] sm:$0xff] %vm372, %v471
      %504 = vst.msk [vmem:[#allocation3 + $0x58] sm:$0xff] %vm372, %v472
      %505 = vst.msk [vmem:[#allocation3 + $0x60] sm:$0xff] %vm372, %v473
      %506 = vst.msk [vmem:[#allocation3 + $0x68] sm:$0xff] %vm372, %v474
      %507 = vst.msk [vmem:[#allocation3 + $0x70] sm:$0xff] %vm372, %v475
      %508 = vst.msk [vmem:[#allocation3 + $0x78] sm:$0xff] %vm372, %v476
      %509 = vst.msk [vmem:[#allocation3 + $0x80] sm:$0xff] %vm372, %v477
      %510 = vst.msk [vmem:[#allocation3 + $0x88] sm:$0xff] %vm372, %v478
      %511 = vst.msk [vmem:[#allocation3 + $0x90] sm:$0xff] %vm372, %v479
      %512 = vst.msk [vmem:[#allocation3 + $0x98] sm:$0xff] %vm372, %v480
      %513 = vst.msk [vmem:[#allocation3 + $0xa0] sm:$0xff] %vm372, %v481
      %514 = vst.msk [vmem:[#allocation3 + $0xa8] sm:$0xff] %vm372, %v482
      %515 = vst.msk [vmem:[#allocation3 + $0xb0] sm:$0xff] %vm372, %v483
      %516 = vst.msk [vmem:[#allocation3 + $0xb8] sm:$0xff] %vm372, %v484
      %517 = vst.msk [vmem:[#allocation3 + $0xc0] sm:$0xff] %vm372, %v485
      %518 = vst.msk [vmem:[#allocation3 + $0xc8] sm:$0xff] %vm372, %v486
      %519 = vst.msk [vmem:[#allocation3 + $0xd0] sm:$0xff] %vm372, %v487
      %520 = vst.msk [vmem:[#allocation3 + $0xd8] sm:$0xff] %vm372, %v488
      %521 = vst.msk [vmem:[#allocation3 + $0xe0] sm:$0xff] %vm372, %v489
      %522 = vst.msk [vmem:[#allocation3 + $0xe8] sm:$0xff] %vm372, %v490
      %523 = vst.msk [vmem:[#allocation3 + $0xf0] sm:$0xff] %vm372, %v491
      %524 = vst.msk [vmem:[#allocation3 + $0xf8] sm:$0xff] %vm372, %v492
      %v525 = vld [vmem:[#allocation2 + $0x1] sm:$0xff]
      %v526 = vld [vmem:[#allocation2 + $0x9] sm:$0xff]
      %v527 = vld [vmem:[#allocation2 + $0x19] sm:$0xff]
      %v528 = vld [vmem:[#allocation2 + $0x21] sm:$0xff]
      %v529 = vld [vmem:[#allocation2 + $0x31] sm:$0xff]
      %v530 = vld [vmem:[#allocation2 + $0x39] sm:$0xff]
      %v531 = vld [vmem:[#allocation2 + $0x49] sm:$0xff]
      %v532 = vld [vmem:[#allocation2 + $0x51] sm:$0xff]
      %v533 = vld [vmem:[#allocation2 + $0x61] sm:$0xff]
      %v534 = vld [vmem:[#allocation2 + $0x69] sm:$0xff]
      %v535 = vld [vmem:[#allocation2 + $0x79] sm:$0xff]
      %v536 = vld [vmem:[#allocation2 + $0x81] sm:$0xff]
      %v537 = vld [vmem:[#allocation2 + $0x91] sm:$0xff]
      %v538 = vld [vmem:[#allocation2 + $0x99] sm:$0xff]
      %v539 = vld [vmem:[#allocation2 + $0xa9] sm:$0xff]
      %v540 = vld [vmem:[#allocation2 + $0xb1] sm:$0xff]
      %v541 = vld [vmem:[#allocation2 + $0xc1] sm:$0xff]
      %v542 = vld [vmem:[#allocation2 + $0xc9] sm:$0xff]
      %v543 = vld [vmem:[#allocation2 + $0xd9] sm:$0xff]
      %v544 = vld [vmem:[#allocation2 + $0xe1] sm:$0xff]
      %v545 = vld [vmem:[#allocation2 + $0xf1] sm:$0xff]
      %v546 = vld [vmem:[#allocation2 + $0xf9] sm:$0xff]
      %v547 = vld [vmem:[#allocation2 + $0x109] sm:$0xff]
      %v548 = vld [vmem:[#allocation2 + $0x111] sm:$0xff]
      %v549 = vld [vmem:[#allocation2 + $0x121] sm:$0xff]
      %v550 = vld [vmem:[#allocation2 + $0x129] sm:$0xff]
      %v551 = vld [vmem:[#allocation2 + $0x139] sm:$0xff]
      %v552 = vld [vmem:[#allocation2 + $0x141] sm:$0xff]
      %v553 = vld [vmem:[#allocation2 + $0x151] sm:$0xff]
      %v554 = vld [vmem:[#allocation2 + $0x159] sm:$0xff]
      %v555 = vld [vmem:[#allocation2 + $0x169] sm:$0xff]
      %v556 = vld [vmem:[#allocation2 + $0x171] sm:$0xff]
      %589 = vrot.lane.b32.xlu0 %v525, 4
      %v590 = vpop.permute.xlu0 %589
      %591 = vrot.lane.b32.xlu0 %v526, 4
      %v592 = vpop.permute.xlu0 %591
      %593 = vrot.lane.b32.xlu0 %v527, 4
      %v594 = vpop.permute.xlu0 %593
      %595 = vrot.lane.b32.xlu0 %v528, 4
      %v596 = vpop.permute.xlu0 %595
      %597 = vrot.lane.b32.xlu0 %v529, 4
      %v598 = vpop.permute.xlu0 %597
      %599 = vrot.lane.b32.xlu0 %v530, 4
      %v600 = vpop.permute.xlu0 %599
      %601 = vrot.lane.b32.xlu0 %v531, 4
      %v602 = vpop.permute.xlu0 %601
      %603 = vrot.lane.b32.xlu0 %v532, 4
      %v604 = vpop.permute.xlu0 %603
      %605 = vrot.lane.b32.xlu0 %v533, 4
      %v606 = vpop.permute.xlu0 %605
      %607 = vrot.lane.b32.xlu0 %v534, 4
      %v608 = vpop.permute.xlu0 %607
      %609 = vrot.lane.b32.xlu0 %v535, 4
      %v610 = vpop.permute.xlu0 %609
      %611 = vrot.lane.b32.xlu0 %v536, 4
      %v612 = vpop.permute.xlu0 %611
      %613 = vrot.lane.b32.xlu0 %v537, 4
      %v614 = vpop.permute.xlu0 %613
      %615 = vrot.lane.b32.xlu0 %v538, 4
      %v616 = vpop.permute.xlu0 %615
      %617 = vrot.lane.b32.xlu0 %v539, 4
      %v618 = vpop.permute.xlu0 %617
      %619 = vrot.lane.b32.xlu0 %v540, 4
      %v620 = vpop.permute.xlu0 %619
      %621 = vrot.lane.b32.xlu0 %v541, 4
      %v622 = vpop.permute.xlu0 %621
      %623 = vrot.lane.b32.xlu0 %v542, 4
      %v624 = vpop.permute.xlu0 %623
      %625 = vrot.lane.b32.xlu0 %v543, 4
      %v626 = vpop.permute.xlu0 %625
      %627 = vrot.lane.b32.xlu0 %v544, 4
      %v628 = vpop.permute.xlu0 %627
      %629 = vrot.lane.b32.xlu0 %v545, 4
      %v630 = vpop.permute.xlu0 %629
      %631 = vrot.lane.b32.xlu0 %v546, 4
      %v632 = vpop.permute.xlu0 %631
      %633 = vrot.lane.b32.xlu0 %v547, 4
      %v634 = vpop.permute.xlu0 %633
      %635 = vrot.lane.b32.xlu0 %v548, 4
      %v636 = vpop.permute.xlu0 %635
      %637 = vrot.lane.b32.xlu0 %v549, 4
      %v638 = vpop.permute.xlu0 %637
      %639 = vrot.lane.b32.xlu0 %v550, 4
      %v640 = vpop.permute.xlu0 %639
      %641 = vrot.lane.b32.xlu0 %v551, 4
      %v642 = vpop.permute.xlu0 %641
      %643 = vrot.lane.b32.xlu0 %v552, 4
      %v644 = vpop.permute.xlu0 %643
      %645 = vrot.lane.b32.xlu0 %v553, 4
      %v646 = vpop.permute.xlu0 %645
      %647 = vrot.lane.b32.xlu0 %v554, 4
      %v648 = vpop.permute.xlu0 %647
      %649 = vrot.lane.b32.xlu0 %v555, 4
      %v650 = vpop.permute.xlu0 %649
      %651 = vrot.lane.b32.xlu0 %v556, 4
      %v652 = vpop.permute.xlu0 %651
      %vm685 = vcmask 64544
      %686 = vst.msk [vmem:[#allocation3] sm:$0xff] %vm685, %v590
      %687 = vst.msk [vmem:[#allocation3 + $0x8] sm:$0xff] %vm685, %v592
      %688 = vst.msk [vmem:[#allocation3 + $0x10] sm:$0xff] %vm685, %v594
      %689 = vst.msk [vmem:[#allocation3 + $0x18] sm:$0xff] %vm685, %v596
      %690 = vst.msk [vmem:[#allocation3 + $0x20] sm:$0xff] %vm685, %v598
      %691 = vst.msk [vmem:[#allocation3 + $0x28] sm:$0xff] %vm685, %v600
      %692 = vst.msk [vmem:[#allocation3 + $0x30] sm:$0xff] %vm685, %v602
      %693 = vst.msk [vmem:[#allocation3 + $0x38] sm:$0xff] %vm685, %v604
      %694 = vst.msk [vmem:[#allocation3 + $0x40] sm:$0xff] %vm685, %v606
      %695 = vst.msk [vmem:[#allocation3 + $0x48] sm:$0xff] %vm685, %v608
      %696 = vst.msk [vmem:[#allocation3 + $0x50] sm:$0xff] %vm685, %v610
      %697 = vst.msk [vmem:[#allocation3 + $0x58] sm:$0xff] %vm685, %v612
      %698 = vst.msk [vmem:[#allocation3 + $0x60] sm:$0xff] %vm685, %v614
      %699 = vst.msk [vmem:[#allocation3 + $0x68] sm:$0xff] %vm685, %v616
      %700 = vst.msk [vmem:[#allocation3 + $0x70] sm:$0xff] %vm685, %v618
      %701 = vst.msk [vmem:[#allocation3 + $0x78] sm:$0xff] %vm685, %v620
      %702 = vst.msk [vmem:[#allocation3 + $0x80] sm:$0xff] %vm685, %v622
      %703 = vst.msk [vmem:[#allocation3 + $0x88] sm:$0xff] %vm685, %v624
      %704 = vst.msk [vmem:[#allocation3 + $0x90] sm:$0xff] %vm685, %v626
      %705 = vst.msk [vmem:[#allocation3 + $0x98] sm:$0xff] %vm685, %v628
      %706 = vst.msk [vmem:[#allocation3 + $0xa0] sm:$0xff] %vm685, %v630
      %707 = vst.msk [vmem:[#allocation3 + $0xa8] sm:$0xff] %vm685, %v632
      %708 = vst.msk [vmem:[#allocation3 + $0xb0] sm:$0xff] %vm685, %v634
      %709 = vst.msk [vmem:[#allocation3 + $0xb8] sm:$0xff] %vm685, %v636
      %710 = vst.msk [vmem:[#allocation3 + $0xc0] sm:$0xff] %vm685, %v638
      %711 = vst.msk [vmem:[#allocation3 + $0xc8] sm:$0xff] %vm685, %v640
      %712 = vst.msk [vmem:[#allocation3 + $0xd0] sm:$0xff] %vm685, %v642
      %713 = vst.msk [vmem:[#allocation3 + $0xd8] sm:$0xff] %vm685, %v644
      %714 = vst.msk [vmem:[#allocation3 + $0xe0] sm:$0xff] %vm685, %v646
      %715 = vst.msk [vmem:[#allocation3 + $0xe8] sm:$0xff] %vm685, %v648
      %716 = vst.msk [vmem:[#allocation3 + $0xf0] sm:$0xff] %vm685, %v650
      %717 = vst.msk [vmem:[#allocation3 + $0xf8] sm:$0xff] %vm685, %v652
      %v718 = vld [vmem:[#allocation2 + $0x2] sm:$0xff]
      %v719 = vld [vmem:[#allocation2 + $0xa] sm:$0xff]
      %v720 = vld [vmem:[#allocation2 + $0x1a] sm:$0xff]
      %v721 = vld [vmem:[#allocation2 + $0x22] sm:$0xff]
      %v722 = vld [vmem:[#allocation2 + $0x32] sm:$0xff]
      %v723 = vld [vmem:[#allocation2 + $0x3a] sm:$0xff]
      %v724 = vld [vmem:[#allocation2 + $0x4a] sm:$0xff]
      %v725 = vld [vmem:[#allocation2 + $0x52] sm:$0xff]
      %v726 = vld [vmem:[#allocation2 + $0x62] sm:$0xff]
      %v727 = vld [vmem:[#allocation2 + $0x6a] sm:$0xff]
      %v728 = vld [vmem:[#allocation2 + $0x7a] sm:$0xff]
      %v729 = vld [vmem:[#allocation2 + $0x82] sm:$0xff]
      %v730 = vld [vmem:[#allocation2 + $0x92] sm:$0xff]
      %v731 = vld [vmem:[#allocation2 + $0x9a] sm:$0xff]
      %v732 = vld [vmem:[#allocation2 + $0xaa] sm:$0xff]
      %v733 = vld [vmem:[#allocation2 + $0xb2] sm:$0xff]
      %v734 = vld [vmem:[#allocation2 + $0xc2] sm:$0xff]
      %v735 = vld [vmem:[#allocation2 + $0xca] sm:$0xff]
      %v736 = vld [vmem:[#allocation2 + $0xda] sm:$0xff]
      %v737 = vld [vmem:[#allocation2 + $0xe2] sm:$0xff]
      %v738 = vld [vmem:[#allocation2 + $0xf2] sm:$0xff]
      %v739 = vld [vmem:[#allocation2 + $0xfa] sm:$0xff]
      %v740 = vld [vmem:[#allocation2 + $0x10a] sm:$0xff]
      %v741 = vld [vmem:[#allocation2 + $0x112] sm:$0xff]
      %v742 = vld [vmem:[#allocation2 + $0x122] sm:$0xff]
      %v743 = vld [vmem:[#allocation2 + $0x12a] sm:$0xff]
      %v744 = vld [vmem:[#allocation2 + $0x13a] sm:$0xff]
      %v745 = vld [vmem:[#allocation2 + $0x142] sm:$0xff]
      %v746 = vld [vmem:[#allocation2 + $0x152] sm:$0xff]
      %v747 = vld [vmem:[#allocation2 + $0x15a] sm:$0xff]
      %v748 = vld [vmem:[#allocation2 + $0x16a] sm:$0xff]
      %v749 = vld [vmem:[#allocation2 + $0x172] sm:$0xff]
      %782 = vrot.lane.b32.xlu0 %v718, 8
      %v783 = vpop.permute.xlu0 %782
      %784 = vrot.lane.b32.xlu0 %v719, 8
      %v785 = vpop.permute.xlu0 %784
      %786 = vrot.lane.b32.xlu0 %v720, 8
      %v787 = vpop.permute.xlu0 %786
      %788 = vrot.lane.b32.xlu0 %v721, 8
      %v789 = vpop.permute.xlu0 %788
      %790 = vrot.lane.b32.xlu0 %v722, 8
      %v791 = vpop.permute.xlu0 %790
      %792 = vrot.lane.b32.xlu0 %v723, 8
      %v793 = vpop.permute.xlu0 %792
      %794 = vrot.lane.b32.xlu0 %v724, 8
      %v795 = vpop.permute.xlu0 %794
      %796 = vrot.lane.b32.xlu0 %v725, 8
      %v797 = vpop.permute.xlu0 %796
      %798 = vrot.lane.b32.xlu0 %v726, 8
      %v799 = vpop.permute.xlu0 %798
      %800 = vrot.lane.b32.xlu0 %v727, 8
      %v801 = vpop.permute.xlu0 %800
      %802 = vrot.lane.b32.xlu0 %v728, 8
      %v803 = vpop.permute.xlu0 %802
      %804 = vrot.lane.b32.xlu0 %v729, 8
      %v805 = vpop.permute.xlu0 %804
      %806 = vrot.lane.b32.xlu0 %v730, 8
      %v807 = vpop.permute.xlu0 %806
      %808 = vrot.lane.b32.xlu0 %v731, 8
      %v809 = vpop.permute.xlu0 %808
      %810 = vrot.lane.b32.xlu0 %v732, 8
      %v811 = vpop.permute.xlu0 %810
      %812 = vrot.lane.b32.xlu0 %v733, 8
      %v813 = vpop.permute.xlu0 %812
      %814 = vrot.lane.b32.xlu0 %v734, 8
      %v815 = vpop.permute.xlu0 %814
      %816 = vrot.lane.b32.xlu0 %v735, 8
      %v817 = vpop.permute.xlu0 %816
      %818 = vrot.lane.b32.xlu0 %v736, 8
      %v819 = vpop.permute.xlu0 %818
      %820 = vrot.lane.b32.xlu0 %v737, 8
      %v821 = vpop.permute.xlu0 %820
      %822 = vrot.lane.b32.xlu0 %v738, 8
      %v823 = vpop.permute.xlu0 %822
      %824 = vrot.lane.b32.xlu0 %v739, 8
      %v825 = vpop.permute.xlu0 %824
      %826 = vrot.lane.b32.xlu0 %v740, 8
      %v827 = vpop.permute.xlu0 %826
      %828 = vrot.lane.b32.xlu0 %v741, 8
      %v829 = vpop.permute.xlu0 %828
      %830 = vrot.lane.b32.xlu0 %v742, 8
      %v831 = vpop.permute.xlu0 %830
      %832 = vrot.lane.b32.xlu0 %v743, 8
      %v833 = vpop.permute.xlu0 %832
      %834 = vrot.lane.b32.xlu0 %v744, 8
      %v835 = vpop.permute.xlu0 %834
      %836 = vrot.lane.b32.xlu0 %v745, 8
      %v837 = vpop.permute.xlu0 %836
      %838 = vrot.lane.b32.xlu0 %v746, 8
      %v839 = vpop.permute.xlu0 %838
      %840 = vrot.lane.b32.xlu0 %v747, 8
      %v841 = vpop.permute.xlu0 %840
      %842 = vrot.lane.b32.xlu0 %v748, 8
      %v843 = vpop.permute.xlu0 %842
      %844 = vrot.lane.b32.xlu0 %v749, 8
      %v845 = vpop.permute.xlu0 %844
      %vm878 = vcmask 97344
      %879 = vst.msk [vmem:[#allocation3] sm:$0xff] %vm878, %v783
      %880 = vst.msk [vmem:[#allocation3 + $0x8] sm:$0xff] %vm878, %v785
      %881 = vst.msk [vmem:[#allocation3 + $0x10] sm:$0xff] %vm878, %v787
      %882 = vst.msk [vmem:[#allocation3 + $0x18] sm:$0xff] %vm878, %v789
      %883 = vst.msk [vmem:[#allocation3 + $0x20] sm:$0xff] %vm878, %v791
      %884 = vst.msk [vmem:[#allocation3 + $0x28] sm:$0xff] %vm878, %v793
      %885 = vst.msk [vmem:[#allocation3 + $0x30] sm:$0xff] %vm878, %v795
      %886 = vst.msk [vmem:[#allocation3 + $0x38] sm:$0xff] %vm878, %v797
      %887 = vst.msk [vmem:[#allocation3 + $0x40] sm:$0xff] %vm878, %v799
      %888 = vst.msk [vmem:[#allocation3 + $0x48] sm:$0xff] %vm878, %v801
      %889 = vst.msk [vmem:[#allocation3 + $0x50] sm:$0xff] %vm878, %v803
      %890 = vst.msk [vmem:[#allocation3 + $0x58] sm:$0xff] %vm878, %v805
      %891 = vst.msk [vmem:[#allocation3 + $0x60] sm:$0xff] %vm878, %v807
      %892 = vst.msk [vmem:[#allocation3 + $0x68] sm:$0xff] %vm878, %v809
      %893 = vst.msk [vmem:[#allocation3 + $0x70] sm:$0xff] %vm878, %v811
      %894 = vst.msk [vmem:[#allocation3 + $0x78] sm:$0xff] %vm878, %v813
      %895 = vst.msk [vmem:[#allocation3 + $0x80] sm:$0xff] %vm878, %v815
      %896 = vst.msk [vmem:[#allocation3 + $0x88] sm:$0xff] %vm878, %v817
      %897 = vst.msk [vmem:[#allocation3 + $0x90] sm:$0xff] %vm878, %v819
      %898 = vst.msk [vmem:[#allocation3 + $0x98] sm:$0xff] %vm878, %v821
      %899 = vst.msk [vmem:[#allocation3 + $0xa0] sm:$0xff] %vm878, %v823
      %900 = vst.msk [vmem:[#allocation3 + $0xa8] sm:$0xff] %vm878, %v825
      %901 = vst.msk [vmem:[#allocation3 + $0xb0] sm:$0xff] %vm878, %v827
      %902 = vst.msk [vmem:[#allocation3 + $0xb8] sm:$0xff] %vm878, %v829
      %903 = vst.msk [vmem:[#allocation3 + $0xc0] sm:$0xff] %vm878, %v831
      %904 = vst.msk [vmem:[#allocation3 + $0xc8] sm:$0xff] %vm878, %v833
      %905 = vst.msk [vmem:[#allocation3 + $0xd0] sm:$0xff] %vm878, %v835
      %906 = vst.msk [vmem:[#allocation3 + $0xd8] sm:$0xff] %vm878, %v837
      %907 = vst.msk [vmem:[#allocation3 + $0xe0] sm:$0xff] %vm878, %v839
      %908 = vst.msk [vmem:[#allocation3 + $0xe8] sm:$0xff] %vm878, %v841
      %909 = vst.msk [vmem:[#allocation3 + $0xf0] sm:$0xff] %vm878, %v843
      %910 = vst.msk [vmem:[#allocation3 + $0xf8] sm:$0xff] %vm878, %v845
      %v911 = vld [vmem:[%s428] sm:$0xff]
      %v912 = vld [vmem:[%s428 + $0x8] sm:$0xff]
      %v913 = vld [vmem:[%s428 + $0x18] sm:$0xff]
      %v914 = vld [vmem:[%s428 + $0x20] sm:$0xff]
      %v915 = vld [vmem:[%s428 + $0x30] sm:$0xff]
      %v916 = vld [vmem:[%s428 + $0x38] sm:$0xff]
      %v917 = vld [vmem:[%s428 + $0x48] sm:$0xff]
      %v918 = vld [vmem:[%s428 + $0x50] sm:$0xff]
      %v919 = vld [vmem:[%s428 + $0x60] sm:$0xff]
      %v920 = vld [vmem:[%s428 + $0x68] sm:$0xff]
      %v921 = vld [vmem:[%s428 + $0x78] sm:$0xff]
      %v922 = vld [vmem:[%s428 + $0x80] sm:$0xff]
      %v923 = vld [vmem:[%s428 + $0x90] sm:$0xff]
      %v924 = vld [vmem:[%s428 + $0x98] sm:$0xff]
      %v925 = vld [vmem:[%s428 + $0xa8] sm:$0xff]
      %v926 = vld [vmem:[%s428 + $0xb0] sm:$0xff]
      %v927 = vld [vmem:[%s428 + $0xc0] sm:$0xff]
      %v928 = vld [vmem:[%s428 + $0xc8] sm:$0xff]
      %v929 = vld [vmem:[%s428 + $0xd8] sm:$0xff]
      %v930 = vld [vmem:[%s428 + $0xe0] sm:$0xff]
      %v931 = vld [vmem:[%s428 + $0xf0] sm:$0xff]
      %v932 = vld [vmem:[%s428 + $0xf8] sm:$0xff]
      %v933 = vld [vmem:[%s428 + $0x108] sm:$0xff]
      %v934 = vld [vmem:[%s428 + $0x110] sm:$0xff]
      %v935 = vld [vmem:[%s428 + $0x120] sm:$0xff]
      %v936 = vld [vmem:[%s428 + $0x128] sm:$0xff]
      %v937 = vld [vmem:[%s428 + $0x138] sm:$0xff]
      %v938 = vld [vmem:[%s428 + $0x140] sm:$0xff]
      %v939 = vld [vmem:[%s428 + $0x150] sm:$0xff]
      %v940 = vld [vmem:[%s428 + $0x158] sm:$0xff]
      %v941 = vld [vmem:[%s428 + $0x168] sm:$0xff]
      %v942 = vld [vmem:[%s428 + $0x170] sm:$0xff]
      %975 = vrot.lane.b32.xlu0 %v911, 12
      %v976 = vpop.permute.xlu0 %975
      %977 = vrot.lane.b32.xlu0 %v912, 12
      %v978 = vpop.permute.xlu0 %977
      %979 = vrot.lane.b32.xlu0 %v913, 12
      %v980 = vpop.permute.xlu0 %979
      %981 = vrot.lane.b32.xlu0 %v914, 12
      %v982 = vpop.permute.xlu0 %981
      %983 = vrot.lane.b32.xlu0 %v915, 12
      %v984 = vpop.permute.xlu0 %983
      %985 = vrot.lane.b32.xlu0 %v916, 12
      %v986 = vpop.permute.xlu0 %985
      %987 = vrot.lane.b32.xlu0 %v917, 12
      %v988 = vpop.permute.xlu0 %987
      %989 = vrot.lane.b32.xlu0 %v918, 12
      %v990 = vpop.permute.xlu0 %989
      %991 = vrot.lane.b32.xlu0 %v919, 12
      %v992 = vpop.permute.xlu0 %991
      %993 = vrot.lane.b32.xlu0 %v920, 12
      %v994 = vpop.permute.xlu0 %993
      %995 = vrot.lane.b32.xlu0 %v921, 12
      %v996 = vpop.permute.xlu0 %995
      %997 = vrot.lane.b32.xlu0 %v922, 12
      %v998 = vpop.permute.xlu0 %997
      %999 = vrot.lane.b32.xlu0 %v923, 12
      %v1000 = vpop.permute.xlu0 %999
      %1001 = vrot.lane.b32.xlu0 %v924, 12
      %v1002 = vpop.permute.xlu0 %1001
      %1003 = vrot.lane.b32.xlu0 %v925, 12
      %v1004 = vpop.permute.xlu0 %1003
      %1005 = vrot.lane.b32.xlu0 %v926, 12
      %v1006 = vpop.permute.xlu0 %1005
      %1007 = vrot.lane.b32.xlu0 %v927, 12
      %v1008 = vpop.permute.xlu0 %1007
      %1009 = vrot.lane.b32.xlu0 %v928, 12
      %v1010 = vpop.permute.xlu0 %1009
      %1011 = vrot.lane.b32.xlu0 %v929, 12
      %v1012 = vpop.permute.xlu0 %1011
      %1013 = vrot.lane.b32.xlu0 %v930, 12
      %v1014 = vpop.permute.xlu0 %1013
      %1015 = vrot.lane.b32.xlu0 %v931, 12
      %v1016 = vpop.permute.xlu0 %1015
      %1017 = vrot.lane.b32.xlu0 %v932, 12
      %v1018 = vpop.permute.xlu0 %1017
      %1019 = vrot.lane.b32.xlu0 %v933, 12
      %v1020 = vpop.permute.xlu0 %1019
      %1021 = vrot.lane.b32.xlu0 %v934, 12
      %v1022 = vpop.permute.xlu0 %1021
      %1023 = vrot.lane.b32.xlu0 %v935, 12
      %v1024 = vpop.permute.xlu0 %1023
      %1025 = vrot.lane.b32.xlu0 %v936, 12
      %v1026 = vpop.permute.xlu0 %1025
      %1027 = vrot.lane.b32.xlu0 %v937, 12
      %v1028 = vpop.permute.xlu0 %1027
      %1029 = vrot.lane.b32.xlu0 %v938, 12
      %v1030 = vpop.permute.xlu0 %1029
      %1031 = vrot.lane.b32.xlu0 %v939, 12
      %v1032 = vpop.permute.xlu0 %1031
      %1033 = vrot.lane.b32.xlu0 %v940, 12
      %v1034 = vpop.permute.xlu0 %1033
      %1035 = vrot.lane.b32.xlu0 %v941, 12
      %v1036 = vpop.permute.xlu0 %1035
      %1037 = vrot.lane.b32.xlu0 %v942, 12
      %v1038 = vpop.permute.xlu0 %1037
      %vm1071 = vcmask 130144
      %1072 = vst.msk [vmem:[#allocation3] sm:$0xff] %vm1071, %v976
      %1073 = vst.msk [vmem:[#allocation3 + $0x8] sm:$0xff] %vm1071, %v978
      %1074 = vst.msk [vmem:[#allocation3 + $0x10] sm:$0xff] %vm1071, %v980
      %1075 = vst.msk [vmem:[#allocation3 + $0x18] sm:$0xff] %vm1071, %v982
      %1076 = vst.msk [vmem:[#allocation3 + $0x20] sm:$0xff] %vm1071, %v984
      %1077 = vst.msk [vmem:[#allocation3 + $0x28] sm:$0xff] %vm1071, %v986
      %1078 = vst.msk [vmem:[#allocation3 + $0x30] sm:$0xff] %vm1071, %v988
      %1079 = vst.msk [vmem:[#allocation3 + $0x38] sm:$0xff] %vm1071, %v990
      %1080 = vst.msk [vmem:[#allocation3 + $0x40] sm:$0xff] %vm1071, %v992
      %1081 = vst.msk [vmem:[#allocation3 + $0x48] sm:$0xff] %vm1071, %v994
      %1082 = vst.msk [vmem:[#allocation3 + $0x50] sm:$0xff] %vm1071, %v996
      %1083 = vst.msk [vmem:[#allocation3 + $0x58] sm:$0xff] %vm1071, %v998
      %1084 = vst.msk [vmem:[#allocation3 + $0x60] sm:$0xff] %vm1071, %v1000
      %1085 = vst.msk [vmem:[#allocation3 + $0x68] sm:$0xff] %vm1071, %v1002
      %1086 = vst.msk [vmem:[#allocation3 + $0x70] sm:$0xff] %vm1071, %v1004
      %1087 = vst.msk [vmem:[#allocation3 + $0x78] sm:$0xff] %vm1071, %v1006
      %1088 = vst.msk [vmem:[#allocation3 + $0x80] sm:$0xff] %vm1071, %v1008
      %1089 = vst.msk [vmem:[#allocation3 + $0x88] sm:$0xff] %vm1071, %v1010
      %1090 = vst.msk [vmem:[#allocation3 + $0x90] sm:$0xff] %vm1071, %v1012
      %1091 = vst.msk [vmem:[#allocation3 + $0x98] sm:$0xff] %vm1071, %v1014
      %1092 = vst.msk [vmem:[#allocation3 + $0xa0] sm:$0xff] %vm1071, %v1016
      %1093 = vst.msk [vmem:[#allocation3 + $0xa8] sm:$0xff] %vm1071, %v1018
      %1094 = vst.msk [vmem:[#allocation3 + $0xb0] sm:$0xff] %vm1071, %v1020
      %1095 = vst.msk [vmem:[#allocation3 + $0xb8] sm:$0xff] %vm1071, %v1022
      %1096 = vst.msk [vmem:[#allocation3 + $0xc0] sm:$0xff] %vm1071, %v1024
      %1097 = vst.msk [vmem:[#allocation3 + $0xc8] sm:$0xff] %vm1071, %v1026
      %1098 = vst.msk [vmem:[#allocation3 + $0xd0] sm:$0xff] %vm1071, %v1028
      %1099 = vst.msk [vmem:[#allocation3 + $0xd8] sm:$0xff] %vm1071, %v1030
      %1100 = vst.msk [vmem:[#allocation3 + $0xe0] sm:$0xff] %vm1071, %v1032
      %1101 = vst.msk [vmem:[#allocation3 + $0xe8] sm:$0xff] %vm1071, %v1034
      %1102 = vst.msk [vmem:[#allocation3 + $0xf0] sm:$0xff] %vm1071, %v1036
      %1103 = vst.msk [vmem:[#allocation3 + $0xf8] sm:$0xff] %vm1071, %v1038
      %v1104 = vld [vmem:[%s428 + $0x1] sm:$0xff]
      %v1105 = vld [vmem:[%s428 + $0x9] sm:$0xff]
      %v1106 = vld [vmem:[%s428 + $0x19] sm:$0xff]
      %v1107 = vld [vmem:[%s428 + $0x21] sm:$0xff]
      %v1108 = vld [vmem:[%s428 + $0x31] sm:$0xff]
      %v1109 = vld [vmem:[%s428 + $0x39] sm:$0xff]
      %v1110 = vld [vmem:[%s428 + $0x49] sm:$0xff]
      %v1111 = vld [vmem:[%s428 + $0x51] sm:$0xff]
      %v1112 = vld [vmem:[%s428 + $0x61] sm:$0xff]
      %v1113 = vld [vmem:[%s428 + $0x69] sm:$0xff]
      %v1114 = vld [vmem:[%s428 + $0x79] sm:$0xff]
      %v1115 = vld [vmem:[%s428 + $0x81] sm:$0xff]
      %v1116 = vld [vmem:[%s428 + $0x91] sm:$0xff]
      %v1117 = vld [vmem:[%s428 + $0x99] sm:$0xff]
      %v1118 = vld [vmem:[%s428 + $0xa9] sm:$0xff]
      %v1119 = vld [vmem:[%s428 + $0xb1] sm:$0xff]
      %v1120 = vld [vmem:[%s428 + $0xc1] sm:$0xff]
      %v1121 = vld [vmem:[%s428 + $0xc9] sm:$0xff]
      %v1122 = vld [vmem:[%s428 + $0xd9] sm:$0xff]
      %v1123 = vld [vmem:[%s428 + $0xe1] sm:$0xff]
      %v1124 = vld [vmem:[%s428 + $0xf1] sm:$0xff]
      %v1125 = vld [vmem:[%s428 + $0xf9] sm:$0xff]
      %v1126 = vld [vmem:[%s428 + $0x109] sm:$0xff]
      %v1127 = vld [vmem:[%s428 + $0x111] sm:$0xff]
      %v1128 = vld [vmem:[%s428 + $0x121] sm:$0xff]
      %v1129 = vld [vmem:[%s428 + $0x129] sm:$0xff]
      %v1130 = vld [vmem:[%s428 + $0x139] sm:$0xff]
      %v1131 = vld [vmem:[%s428 + $0x141] sm:$0xff]
      %v1132 = vld [vmem:[%s428 + $0x151] sm:$0xff]
      %v1133 = vld [vmem:[%s428 + $0x159] sm:$0xff]
      %v1134 = vld [vmem:[%s428 + $0x169] sm:$0xff]
      %v1135 = vld [vmem:[%s428 + $0x171] sm:$0xff]
      %1168 = vrot.lane.b32.xlu0 %v1104, 16
      %v1169 = vpop.permute.xlu0 %1168
      %1170 = vrot.lane.b32.xlu0 %v1105, 16
      %v1171 = vpop.permute.xlu0 %1170
      %1172 = vrot.lane.b32.xlu0 %v1106, 16
      %v1173 = vpop.permute.xlu0 %1172
      %1174 = vrot.lane.b32.xlu0 %v1107, 16
      %v1175 = vpop.permute.xlu0 %1174
      %1176 = vrot.lane.b32.xlu0 %v1108, 16
      %v1177 = vpop.permute.xlu0 %1176
      %1178 = vrot.lane.b32.xlu0 %v1109, 16
      %v1179 = vpop.permute.xlu0 %1178
      %1180 = vrot.lane.b32.xlu0 %v1110, 16
      %v1181 = vpop.permute.xlu0 %1180
      %1182 = vrot.lane.b32.xlu0 %v1111, 16
      %v1183 = vpop.permute.xlu0 %1182
      %1184 = vrot.lane.b32.xlu0 %v1112, 16
      %v1185 = vpop.permute.xlu0 %1184
      %1186 = vrot.lane.b32.xlu0 %v1113, 16
      %v1187 = vpop.permute.xlu0 %1186
      %1188 = vrot.lane.b32.xlu0 %v1114, 16
      %v1189 = vpop.permute.xlu0 %1188
      %1190 = vrot.lane.b32.xlu0 %v1115, 16
      %v1191 = vpop.permute.xlu0 %1190
      %1192 = vrot.lane.b32.xlu0 %v1116, 16
      %v1193 = vpop.permute.xlu0 %1192
      %1194 = vrot.lane.b32.xlu0 %v1117, 16
      %v1195 = vpop.permute.xlu0 %1194
      %1196 = vrot.lane.b32.xlu0 %v1118, 16
      %v1197 = vpop.permute.xlu0 %1196
      %1198 = vrot.lane.b32.xlu0 %v1119, 16
      %v1199 = vpop.permute.xlu0 %1198
      %1200 = vrot.lane.b32.xlu0 %v1120, 16
      %v1201 = vpop.permute.xlu0 %1200
      %1202 = vrot.lane.b32.xlu0 %v1121, 16
      %v1203 = vpop.permute.xlu0 %1202
      %1204 = vrot.lane.b32.xlu0 %v1122, 16
      %v1205 = vpop.permute.xlu0 %1204
      %1206 = vrot.lane.b32.xlu0 %v1123, 16
      %v1207 = vpop.permute.xlu0 %1206
      %1208 = vrot.lane.b32.xlu0 %v1124, 16
      %v1209 = vpop.permute.xlu0 %1208
      %1210 = vrot.lane.b32.xlu0 %v1125, 16
      %v1211 = vpop.permute.xlu0 %1210
      %1212 = vrot.lane.b32.xlu0 %v1126, 16
      %v1213 = vpop.permute.xlu0 %1212
      %1214 = vrot.lane.b32.xlu0 %v1127, 16
      %v1215 = vpop.permute.xlu0 %1214
      %1216 = vrot.lane.b32.xlu0 %v1128, 16
      %v1217 = vpop.permute.xlu0 %1216
      %1218 = vrot.lane.b32.xlu0 %v1129, 16
      %v1219 = vpop.permute.xlu0 %1218
      %1220 = vrot.lane.b32.xlu0 %v1130, 16
      %v1221 = vpop.permute.xlu0 %1220
      %1222 = vrot.lane.b32.xlu0 %v1131, 16
      %v1223 = vpop.permute.xlu0 %1222
      %1224 = vrot.lane.b32.xlu0 %v1132, 16
      %v1225 = vpop.permute.xlu0 %1224
      %1226 = vrot.lane.b32.xlu0 %v1133, 16
      %v1227 = vpop.permute.xlu0 %1226
      %1228 = vrot.lane.b32.xlu0 %v1134, 16
      %v1229 = vpop.permute.xlu0 %1228
      %1230 = vrot.lane.b32.xlu0 %v1135, 16
      %v1231 = vpop.permute.xlu0 %1230
      %vm1264 = vcmask 162944
      %1265 = vst.msk [vmem:[#allocation3] sm:$0xff] %vm1264, %v1169
      %1266 = vst.msk [vmem:[#allocation3 + $0x8] sm:$0xff] %vm1264, %v1171
      %1267 = vst.msk [vmem:[#allocation3 + $0x10] sm:$0xff] %vm1264, %v1173
      %1268 = vst.msk [vmem:[#allocation3 + $0x18] sm:$0xff] %vm1264, %v1175
      %1269 = vst.msk [vmem:[#allocation3 + $0x20] sm:$0xff] %vm1264, %v1177
      %1270 = vst.msk [vmem:[#allocation3 + $0x28] sm:$0xff] %vm1264, %v1179
      %1271 = vst.msk [vmem:[#allocation3 + $0x30] sm:$0xff] %vm1264, %v1181
      %1272 = vst.msk [vmem:[#allocation3 + $0x38] sm:$0xff] %vm1264, %v1183
      %1273 = vst.msk [vmem:[#allocation3 + $0x40] sm:$0xff] %vm1264, %v1185
      %1274 = vst.msk [vmem:[#allocation3 + $0x48] sm:$0xff] %vm1264, %v1187
      %1275 = vst.msk [vmem:[#allocation3 + $0x50] sm:$0xff] %vm1264, %v1189
      %1276 = vst.msk [vmem:[#allocation3 + $0x58] sm:$0xff] %vm1264, %v1191
      %1277 = vst.msk [vmem:[#allocation3 + $0x60] sm:$0xff] %vm1264, %v1193
      %1278 = vst.msk [vmem:[#allocation3 + $0x68] sm:$0xff] %vm1264, %v1195
      %1279 = vst.msk [vmem:[#allocation3 + $0x70] sm:$0xff] %vm1264, %v1197
      %1280 = vst.msk [vmem:[#allocation3 + $0x78] sm:$0xff] %vm1264, %v1199
      %1281 = vst.msk [vmem:[#allocation3 + $0x80] sm:$0xff] %vm1264, %v1201
      %1282 = vst.msk [vmem:[#allocation3 + $0x88] sm:$0xff] %vm1264, %v1203
      %1283 = vst.msk [vmem:[#allocation3 + $0x90] sm:$0xff] %vm1264, %v1205
      %1284 = vst.msk [vmem:[#allocation3 + $0x98] sm:$0xff] %vm1264, %v1207
      %1285 = vst.msk [vmem:[#allocation3 + $0xa0] sm:$0xff] %vm1264, %v1209
      %1286 = vst.msk [vmem:[#allocation3 + $0xa8] sm:$0xff] %vm1264, %v1211
      %1287 = vst.msk [vmem:[#allocation3 + $0xb0] sm:$0xff] %vm1264, %v1213
      %1288 = vst.msk [vmem:[#allocation3 + $0xb8] sm:$0xff] %vm1264, %v1215
      %1289 = vst.msk [vmem:[#allocation3 + $0xc0] sm:$0xff] %vm1264, %v1217
      %1290 = vst.msk [vmem:[#allocation3 + $0xc8] sm:$0xff] %vm1264, %v1219
      %1291 = vst.msk [vmem:[#allocation3 + $0xd0] sm:$0xff] %vm1264, %v1221
      %1292 = vst.msk [vmem:[#allocation3 + $0xd8] sm:$0xff] %vm1264, %v1223
      %1293 = vst.msk [vmem:[#allocation3 + $0xe0] sm:$0xff] %vm1264, %v1225
      %1294 = vst.msk [vmem:[#allocation3 + $0xe8] sm:$0xff] %vm1264, %v1227
      %1295 = vst.msk [vmem:[#allocation3 + $0xf0] sm:$0xff] %vm1264, %v1229
      %1296 = vst.msk [vmem:[#allocation3 + $0xf8] sm:$0xff] %vm1264, %v1231
      %v1297 = vld [vmem:[%s428 + $0x2] sm:$0xff]
      %v1298 = vld [vmem:[%s428 + $0xa] sm:$0xff]
      %v1299 = vld [vmem:[%s428 + $0x1a] sm:$0xff]
      %v1300 = vld [vmem:[%s428 + $0x22] sm:$0xff]
      %v1301 = vld [vmem:[%s428 + $0x32] sm:$0xff]
      %v1302 = vld [vmem:[%s428 + $0x3a] sm:$0xff]
      %v1303 = vld [vmem:[%s428 + $0x4a] sm:$0xff]
      %v1304 = vld [vmem:[%s428 + $0x52] sm:$0xff]
      %v1305 = vld [vmem:[%s428 + $0x62] sm:$0xff]
      %v1306 = vld [vmem:[%s428 + $0x6a] sm:$0xff]
      %v1307 = vld [vmem:[%s428 + $0x7a] sm:$0xff]
      %v1308 = vld [vmem:[%s428 + $0x82] sm:$0xff]
      %v1309 = vld [vmem:[%s428 + $0x92] sm:$0xff]
      %v1310 = vld [vmem:[%s428 + $0x9a] sm:$0xff]
      %v1311 = vld [vmem:[%s428 + $0xaa] sm:$0xff]
      %v1312 = vld [vmem:[%s428 + $0xb2] sm:$0xff]
      %v1313 = vld [vmem:[%s428 + $0xc2] sm:$0xff]
      %v1314 = vld [vmem:[%s428 + $0xca] sm:$0xff]
      %v1315 = vld [vmem:[%s428 + $0xda] sm:$0xff]
      %v1316 = vld [vmem:[%s428 + $0xe2] sm:$0xff]
      %v1317 = vld [vmem:[%s428 + $0xf2] sm:$0xff]
      %v1318 = vld [vmem:[%s428 + $0xfa] sm:$0xff]
      %v1319 = vld [vmem:[%s428 + $0x10a] sm:$0xff]
      %v1320 = vld [vmem:[%s428 + $0x112] sm:$0xff]
      %v1321 = vld [vmem:[%s428 + $0x122] sm:$0xff]
      %v1322 = vld [vmem:[%s428 + $0x12a] sm:$0xff]
      %v1323 = vld [vmem:[%s428 + $0x13a] sm:$0xff]
      %v1324 = vld [vmem:[%s428 + $0x142] sm:$0xff]
      %v1325 = vld [vmem:[%s428 + $0x152] sm:$0xff]
      %v1326 = vld [vmem:[%s428 + $0x15a] sm:$0xff]
      %v1327 = vld [vmem:[%s428 + $0x16a] sm:$0xff]
      %v1328 = vld [vmem:[%s428 + $0x172] sm:$0xff]
      %1361 = vrot.lane.b32.xlu0 %v1297, 20
      %v1362 = vpop.permute.xlu0 %1361
      %1363 = vrot.lane.b32.xlu0 %v1298, 20
      %v1364 = vpop.permute.xlu0 %1363
      %1365 = vrot.lane.b32.xlu0 %v1299, 20
      %v1366 = vpop.permute.xlu0 %1365
      %1367 = vrot.lane.b32.xlu0 %v1300, 20
      %v1368 = vpop.permute.xlu0 %1367
      %1369 = vrot.lane.b32.xlu0 %v1301, 20
      %v1370 = vpop.permute.xlu0 %1369
      %1371 = vrot.lane.b32.xlu0 %v1302, 20
      %v1372 = vpop.permute.xlu0 %1371
      %1373 = vrot.lane.b32.xlu0 %v1303, 20
      %v1374 = vpop.permute.xlu0 %1373
      %1375 = vrot.lane.b32.xlu0 %v1304, 20
      %v1376 = vpop.permute.xlu0 %1375
      %1377 = vrot.lane.b32.xlu0 %v1305, 20
      %v1378 = vpop.permute.xlu0 %1377
      %1379 = vrot.lane.b32.xlu0 %v1306, 20
      %v1380 = vpop.permute.xlu0 %1379
      %1381 = vrot.lane.b32.xlu0 %v1307, 20
      %v1382 = vpop.permute.xlu0 %1381
      %1383 = vrot.lane.b32.xlu0 %v1308, 20
      %v1384 = vpop.permute.xlu0 %1383
      %1385 = vrot.lane.b32.xlu0 %v1309, 20
      %v1386 = vpop.permute.xlu0 %1385
      %1387 = vrot.lane.b32.xlu0 %v1310, 20
      %v1388 = vpop.permute.xlu0 %1387
      %1389 = vrot.lane.b32.xlu0 %v1311, 20
      %v1390 = vpop.permute.xlu0 %1389
      %1391 = vrot.lane.b32.xlu0 %v1312, 20
      %v1392 = vpop.permute.xlu0 %1391
      %1393 = vrot.lane.b32.xlu0 %v1313, 20
      %v1394 = vpop.permute.xlu0 %1393
      %1395 = vrot.lane.b32.xlu0 %v1314, 20
      %v1396 = vpop.permute.xlu0 %1395
      %1397 = vrot.lane.b32.xlu0 %v1315, 20
      %v1398 = vpop.permute.xlu0 %1397
      %1399 = vrot.lane.b32.xlu0 %v1316, 20
      %v1400 = vpop.permute.xlu0 %1399
      %1401 = vrot.lane.b32.xlu0 %v1317, 20
      %v1402 = vpop.permute.xlu0 %1401
      %1403 = vrot.lane.b32.xlu0 %v1318, 20
      %v1404 = vpop.permute.xlu0 %1403
      %1405 = vrot.lane.b32.xlu0 %v1319, 20
      %v1406 = vpop.permute.xlu0 %1405
      %1407 = vrot.lane.b32.xlu0 %v1320, 20
      %v1408 = vpop.permute.xlu0 %1407
      %1409 = vrot.lane.b32.xlu0 %v1321, 20
      %v1410 = vpop.permute.xlu0 %1409
      %1411 = vrot.lane.b32.xlu0 %v1322, 20
      %v1412 = vpop.permute.xlu0 %1411
      %1413 = vrot.lane.b32.xlu0 %v1323, 20
      %v1414 = vpop.permute.xlu0 %1413
      %1415 = vrot.lane.b32.xlu0 %v1324, 20
      %v1416 = vpop.permute.xlu0 %1415
      %1417 = vrot.lane.b32.xlu0 %v1325, 20
      %v1418 = vpop.permute.xlu0 %1417
      %1419 = vrot.lane.b32.xlu0 %v1326, 20
      %v1420 = vpop.permute.xlu0 %1419
      %1421 = vrot.lane.b32.xlu0 %v1327, 20
      %v1422 = vpop.permute.xlu0 %1421
      %1423 = vrot.lane.b32.xlu0 %v1328, 20
      %v1424 = vpop.permute.xlu0 %1423
      %vm1457 = vcmask 195744
      %1458 = vst.msk [vmem:[#allocation3] sm:$0xff] %vm1457, %v1362
      %1459 = vst.msk [vmem:[#allocation3 + $0x8] sm:$0xff] %vm1457, %v1364
      %1460 = vst.msk [vmem:[#allocation3 + $0x10] sm:$0xff] %vm1457, %v1366
      %1461 = vst.msk [vmem:[#allocation3 + $0x18] sm:$0xff] %vm1457, %v1368
      %1462 = vst.msk [vmem:[#allocation3 + $0x20] sm:$0xff] %vm1457, %v1370
      %1463 = vst.msk [vmem:[#allocation3 + $0x28] sm:$0xff] %vm1457, %v1372
      %1464 = vst.msk [vmem:[#allocation3 + $0x30] sm:$0xff] %vm1457, %v1374
      %1465 = vst.msk [vmem:[#allocation3 + $0x38] sm:$0xff] %vm1457, %v1376
      %1466 = vst.msk [vmem:[#allocation3 + $0x40] sm:$0xff] %vm1457, %v1378
      %1467 = vst.msk [vmem:[#allocation3 + $0x48] sm:$0xff] %vm1457, %v1380
      %1468 = vst.msk [vmem:[#allocation3 + $0x50] sm:$0xff] %vm1457, %v1382
      %1469 = vst.msk [vmem:[#allocation3 + $0x58] sm:$0xff] %vm1457, %v1384
      %1470 = vst.msk [vmem:[#allocation3 + $0x60] sm:$0xff] %vm1457, %v1386
      %1471 = vst.msk [vmem:[#allocation3 + $0x68] sm:$0xff] %vm1457, %v1388
      %1472 = vst.msk [vmem:[#allocation3 + $0x70] sm:$0xff] %vm1457, %v1390
      %1473 = vst.msk [vmem:[#allocation3 + $0x78] sm:$0xff] %vm1457, %v1392
      %1474 = vst.msk [vmem:[#allocation3 + $0x80] sm:$0xff] %vm1457, %v1394
      %1475 = vst.msk [vmem:[#allocation3 + $0x88] sm:$0xff] %vm1457, %v1396
      %1476 = vst.msk [vmem:[#allocation3 + $0x90] sm:$0xff] %vm1457, %v1398
      %1477 = vst.msk [vmem:[#allocation3 + $0x98] sm:$0xff] %vm1457, %v1400
      %1478 = vst.msk [vmem:[#allocation3 + $0xa0] sm:$0xff] %vm1457, %v1402
      %1479 = vst.msk [vmem:[#allocation3 + $0xa8] sm:$0xff] %vm1457, %v1404
      %1480 = vst.msk [vmem:[#allocation3 + $0xb0] sm:$0xff] %vm1457, %v1406
      %1481 = vst.msk [vmem:[#allocation3 + $0xb8] sm:$0xff] %vm1457, %v1408
      %1482 = vst.msk [vmem:[#allocation3 + $0xc0] sm:$0xff] %vm1457, %v1410
      %1483 = vst.msk [vmem:[#allocation3 + $0xc8] sm:$0xff] %vm1457, %v1412
      %1484 = vst.msk [vmem:[#allocation3 + $0xd0] sm:$0xff] %vm1457, %v1414
      %1485 = vst.msk [vmem:[#allocation3 + $0xd8] sm:$0xff] %vm1457, %v1416
      %1486 = vst.msk [vmem:[#allocation3 + $0xe0] sm:$0xff] %vm1457, %v1418
      %1487 = vst.msk [vmem:[#allocation3 + $0xe8] sm:$0xff] %vm1457, %v1420
      %1488 = vst.msk [vmem:[#allocation3 + $0xf0] sm:$0xff] %vm1457, %v1422
      %1489 = vst.msk [vmem:[#allocation3 + $0xf8] sm:$0xff] %vm1457, %v1424
      %s1490 = scalar_lea.vmem [#allocation2], 48
      %v1491 = vld [vmem:[%s1490] sm:$0xff]
      %v1492 = vld [vmem:[%s1490 + $0x8] sm:$0xff]
      %v1493 = vld [vmem:[%s1490 + $0x18] sm:$0xff]
      %v1494 = vld [vmem:[%s1490 + $0x20] sm:$0xff]
      %v1495 = vld [vmem:[%s1490 + $0x30] sm:$0xff]
      %v1496 = vld [vmem:[%s1490 + $0x38] sm:$0xff]
      %v1497 = vld [vmem:[%s1490 + $0x48] sm:$0xff]
      %v1498 = vld [vmem:[%s1490 + $0x50] sm:$0xff]
      %v1499 = vld [vmem:[%s1490 + $0x60] sm:$0xff]
      %v1500 = vld [vmem:[%s1490 + $0x68] sm:$0xff]
      %v1501 = vld [vmem:[%s1490 + $0x78] sm:$0xff]
      %v1502 = vld [vmem:[%s1490 + $0x80] sm:$0xff]
      %v1503 = vld [vmem:[%s1490 + $0x90] sm:$0xff]
      %v1504 = vld [vmem:[%s1490 + $0x98] sm:$0xff]
      %v1505 = vld [vmem:[%s1490 + $0xa8] sm:$0xff]
      %v1506 = vld [vmem:[%s1490 + $0xb0] sm:$0xff]
      %v1507 = vld [vmem:[%s1490 + $0xc0] sm:$0xff]
      %v1508 = vld [vmem:[%s1490 + $0xc8] sm:$0xff]
      %v1509 = vld [vmem:[%s1490 + $0xd8] sm:$0xff]
      %v1510 = vld [vmem:[%s1490 + $0xe0] sm:$0xff]
      %v1511 = vld [vmem:[%s1490 + $0xf0] sm:$0xff]
      %v1512 = vld [vmem:[%s1490 + $0xf8] sm:$0xff]
      %v1513 = vld [vmem:[%s1490 + $0x108] sm:$0xff]
      %v1514 = vld [vmem:[%s1490 + $0x110] sm:$0xff]
      %v1515 = vld [vmem:[%s1490 + $0x120] sm:$0xff]
      %v1516 = vld [vmem:[%s1490 + $0x128] sm:$0xff]
      %v1517 = vld [vmem:[%s1490 + $0x138] sm:$0xff]
      %v1518 = vld [vmem:[%s1490 + $0x140] sm:$0xff]
      %v1519 = vld [vmem:[%s1490 + $0x150] sm:$0xff]
      %v1520 = vld [vmem:[%s1490 + $0x158] sm:$0xff]
      %v1521 = vld [vmem:[%s1490 + $0x168] sm:$0xff]
      %v1522 = vld [vmem:[%s1490 + $0x170] sm:$0xff]
      %1555 = vrot.lane.b32.xlu0 %v1491, 24
      %v1556 = vpop.permute.xlu0 %1555
      %1557 = vrot.lane.b32.xlu0 %v1492, 24
      %v1558 = vpop.permute.xlu0 %1557
      %1559 = vrot.lane.b32.xlu0 %v1493, 24
      %v1560 = vpop.permute.xlu0 %1559
      %1561 = vrot.lane.b32.xlu0 %v1494, 24
      %v1562 = vpop.permute.xlu0 %1561
      %1563 = vrot.lane.b32.xlu0 %v1495, 24
      %v1564 = vpop.permute.xlu0 %1563
      %1565 = vrot.lane.b32.xlu0 %v1496, 24
      %v1566 = vpop.permute.xlu0 %1565
      %1567 = vrot.lane.b32.xlu0 %v1497, 24
      %v1568 = vpop.permute.xlu0 %1567
      %1569 = vrot.lane.b32.xlu0 %v1498, 24
      %v1570 = vpop.permute.xlu0 %1569
      %1571 = vrot.lane.b32.xlu0 %v1499, 24
      %v1572 = vpop.permute.xlu0 %1571
      %1573 = vrot.lane.b32.xlu0 %v1500, 24
      %v1574 = vpop.permute.xlu0 %1573
      %1575 = vrot.lane.b32.xlu0 %v1501, 24
      %v1576 = vpop.permute.xlu0 %1575
      %1577 = vrot.lane.b32.xlu0 %v1502, 24
      %v1578 = vpop.permute.xlu0 %1577
      %1579 = vrot.lane.b32.xlu0 %v1503, 24
      %v1580 = vpop.permute.xlu0 %1579
      %1581 = vrot.lane.b32.xlu0 %v1504, 24
      %v1582 = vpop.permute.xlu0 %1581
      %1583 = vrot.lane.b32.xlu0 %v1505, 24
      %v1584 = vpop.permute.xlu0 %1583
      %1585 = vrot.lane.b32.xlu0 %v1506, 24
      %v1586 = vpop.permute.xlu0 %1585
      %1587 = vrot.lane.b32.xlu0 %v1507, 24
      %v1588 = vpop.permute.xlu0 %1587
      %1589 = vrot.lane.b32.xlu0 %v1508, 24
      %v1590 = vpop.permute.xlu0 %1589
      %1591 = vrot.lane.b32.xlu0 %v1509, 24
      %v1592 = vpop.permute.xlu0 %1591
      %1593 = vrot.lane.b32.xlu0 %v1510, 24
      %v1594 = vpop.permute.xlu0 %1593
      %1595 = vrot.lane.b32.xlu0 %v1511, 24
      %v1596 = vpop.permute.xlu0 %1595
      %1597 = vrot.lane.b32.xlu0 %v1512, 24
      %v1598 = vpop.permute.xlu0 %1597
      %1599 = vrot.lane.b32.xlu0 %v1513, 24
      %v1600 = vpop.permute.xlu0 %1599
      %1601 = vrot.lane.b32.xlu0 %v1514, 24
      %v1602 = vpop.permute.xlu0 %1601
      %1603 = vrot.lane.b32.xlu0 %v1515, 24
      %v1604 = vpop.permute.xlu0 %1603
      %1605 = vrot.lane.b32.xlu0 %v1516, 24
      %v1606 = vpop.permute.xlu0 %1605
      %1607 = vrot.lane.b32.xlu0 %v1517, 24
      %v1608 = vpop.permute.xlu0 %1607
      %1609 = vrot.lane.b32.xlu0 %v1518, 24
      %v1610 = vpop.permute.xlu0 %1609
      %1611 = vrot.lane.b32.xlu0 %v1519, 24
      %v1612 = vpop.permute.xlu0 %1611
      %1613 = vrot.lane.b32.xlu0 %v1520, 24
      %v1614 = vpop.permute.xlu0 %1613
      %1615 = vrot.lane.b32.xlu0 %v1521, 24
      %v1616 = vpop.permute.xlu0 %1615
      %1617 = vrot.lane.b32.xlu0 %v1522, 24
      %v1618 = vpop.permute.xlu0 %1617
      %vm1651 = vcmask 228544
      %1652 = vst.msk [vmem:[#allocation3] sm:$0xff] %vm1651, %v1556
      %1653 = vst.msk [vmem:[#allocation3 + $0x8] sm:$0xff] %vm1651, %v1558
      %1654 = vst.msk [vmem:[#allocation3 + $0x10] sm:$0xff] %vm1651, %v1560
      %1655 = vst.msk [vmem:[#allocation3 + $0x18] sm:$0xff] %vm1651, %v1562
      %1656 = vst.msk [vmem:[#allocation3 + $0x20] sm:$0xff] %vm1651, %v1564
      %1657 = vst.msk [vmem:[#allocation3 + $0x28] sm:$0xff] %vm1651, %v1566
      %1658 = vst.msk [vmem:[#allocation3 + $0x30] sm:$0xff] %vm1651, %v1568
      %1659 = vst.msk [vmem:[#allocation3 + $0x38] sm:$0xff] %vm1651, %v1570
      %1660 = vst.msk [vmem:[#allocation3 + $0x40] sm:$0xff] %vm1651, %v1572
      %1661 = vst.msk [vmem:[#allocation3 + $0x48] sm:$0xff] %vm1651, %v1574
      %1662 = vst.msk [vmem:[#allocation3 + $0x50] sm:$0xff] %vm1651, %v1576
      %1663 = vst.msk [vmem:[#allocation3 + $0x58] sm:$0xff] %vm1651, %v1578
      %1664 = vst.msk [vmem:[#allocation3 + $0x60] sm:$0xff] %vm1651, %v1580
      %1665 = vst.msk [vmem:[#allocation3 + $0x68] sm:$0xff] %vm1651, %v1582
      %1666 = vst.msk [vmem:[#allocation3 + $0x70] sm:$0xff] %vm1651, %v1584
      %1667 = vst.msk [vmem:[#allocation3 + $0x78] sm:$0xff] %vm1651, %v1586
      %1668 = vst.msk [vmem:[#allocation3 + $0x80] sm:$0xff] %vm1651, %v1588
      %1669 = vst.msk [vmem:[#allocation3 + $0x88] sm:$0xff] %vm1651, %v1590
      %1670 = vst.msk [vmem:[#allocation3 + $0x90] sm:$0xff] %vm1651, %v1592
      %1671 = vst.msk [vmem:[#allocation3 + $0x98] sm:$0xff] %vm1651, %v1594
      %1672 = vst.msk [vmem:[#allocation3 + $0xa0] sm:$0xff] %vm1651, %v1596
      %1673 = vst.msk [vmem:[#allocation3 + $0xa8] sm:$0xff] %vm1651, %v1598
      %1674 = vst.msk [vmem:[#allocation3 + $0xb0] sm:$0xff] %vm1651, %v1600
      %1675 = vst.msk [vmem:[#allocation3 + $0xb8] sm:$0xff] %vm1651, %v1602
      %1676 = vst.msk [vmem:[#allocation3 + $0xc0] sm:$0xff] %vm1651, %v1604
      %1677 = vst.msk [vmem:[#allocation3 + $0xc8] sm:$0xff] %vm1651, %v1606
      %1678 = vst.msk [vmem:[#allocation3 + $0xd0] sm:$0xff] %vm1651, %v1608
      %1679 = vst.msk [vmem:[#allocation3 + $0xd8] sm:$0xff] %vm1651, %v1610
      %1680 = vst.msk [vmem:[#allocation3 + $0xe0] sm:$0xff] %vm1651, %v1612
      %1681 = vst.msk [vmem:[#allocation3 + $0xe8] sm:$0xff] %vm1651, %v1614
      %1682 = vst.msk [vmem:[#allocation3 + $0xf0] sm:$0xff] %vm1651, %v1616
      %1683 = vst.msk [vmem:[#allocation3 + $0xf8] sm:$0xff] %vm1651, %v1618
      %v1684 = vld [vmem:[%s1490 + $0x1] sm:$0xff]
      %v1685 = vld [vmem:[%s1490 + $0x9] sm:$0xff]
      %v1686 = vld [vmem:[%s1490 + $0x19] sm:$0xff]
      %v1687 = vld [vmem:[%s1490 + $0x21] sm:$0xff]
      %v1688 = vld [vmem:[%s1490 + $0x31] sm:$0xff]
      %v1689 = vld [vmem:[%s1490 + $0x39] sm:$0xff]
      %v1690 = vld [vmem:[%s1490 + $0x49] sm:$0xff]
      %v1691 = vld [vmem:[%s1490 + $0x51] sm:$0xff]
      %v1692 = vld [vmem:[%s1490 + $0x61] sm:$0xff]
      %v1693 = vld [vmem:[%s1490 + $0x69] sm:$0xff]
      %v1694 = vld [vmem:[%s1490 + $0x79] sm:$0xff]
      %v1695 = vld [vmem:[%s1490 + $0x81] sm:$0xff]
      %v1696 = vld [vmem:[%s1490 + $0x91] sm:$0xff]
      %v1697 = vld [vmem:[%s1490 + $0x99] sm:$0xff]
      %v1698 = vld [vmem:[%s1490 + $0xa9] sm:$0xff]
      %v1699 = vld [vmem:[%s1490 + $0xb1] sm:$0xff]
      %v1700 = vld [vmem:[%s1490 + $0xc1] sm:$0xff]
      %v1701 = vld [vmem:[%s1490 + $0xc9] sm:$0xff]
      %v1702 = vld [vmem:[%s1490 + $0xd9] sm:$0xff]
      %v1703 = vld [vmem:[%s1490 + $0xe1] sm:$0xff]
      %v1704 = vld [vmem:[%s1490 + $0xf1] sm:$0xff]
      %v1705 = vld [vmem:[%s1490 + $0xf9] sm:$0xff]
      %v1706 = vld [vmem:[%s1490 + $0x109] sm:$0xff]
      %v1707 = vld [vmem:[%s1490 + $0x111] sm:$0xff]
      %v1708 = vld [vmem:[%s1490 + $0x121] sm:$0xff]
      %v1709 = vld [vmem:[%s1490 + $0x129] sm:$0xff]
      %v1710 = vld [vmem:[%s1490 + $0x139] sm:$0xff]
      %v1711 = vld [vmem:[%s1490 + $0x141] sm:$0xff]
      %v1712 = vld [vmem:[%s1490 + $0x151] sm:$0xff]
      %v1713 = vld [vmem:[%s1490 + $0x159] sm:$0xff]
      %v1714 = vld [vmem:[%s1490 + $0x169] sm:$0xff]
      %v1715 = vld [vmem:[%s1490 + $0x171] sm:$0xff]
      %1748 = vrot.lane.b32.xlu0 %v1684, 28
      %v1749 = vpop.permute.xlu0 %1748
      %1750 = vrot.lane.b32.xlu0 %v1685, 28
      %v1751 = vpop.permute.xlu0 %1750
      %1752 = vrot.lane.b32.xlu0 %v1686, 28
      %v1753 = vpop.permute.xlu0 %1752
      %1754 = vrot.lane.b32.xlu0 %v1687, 28
      %v1755 = vpop.permute.xlu0 %1754
      %1756 = vrot.lane.b32.xlu0 %v1688, 28
      %v1757 = vpop.permute.xlu0 %1756
      %1758 = vrot.lane.b32.xlu0 %v1689, 28
      %v1759 = vpop.permute.xlu0 %1758
      %1760 = vrot.lane.b32.xlu0 %v1690, 28
      %v1761 = vpop.permute.xlu0 %1760
      %1762 = vrot.lane.b32.xlu0 %v1691, 28
      %v1763 = vpop.permute.xlu0 %1762
      %1764 = vrot.lane.b32.xlu0 %v1692, 28
      %v1765 = vpop.permute.xlu0 %1764
      %1766 = vrot.lane.b32.xlu0 %v1693, 28
      %v1767 = vpop.permute.xlu0 %1766
      %1768 = vrot.lane.b32.xlu0 %v1694, 28
      %v1769 = vpop.permute.xlu0 %1768
      %1770 = vrot.lane.b32.xlu0 %v1695, 28
      %v1771 = vpop.permute.xlu0 %1770
      %1772 = vrot.lane.b32.xlu0 %v1696, 28
      %v1773 = vpop.permute.xlu0 %1772
      %1774 = vrot.lane.b32.xlu0 %v1697, 28
      %v1775 = vpop.permute.xlu0 %1774
      %1776 = vrot.lane.b32.xlu0 %v1698, 28
      %v1777 = vpop.permute.xlu0 %1776
      %1778 = vrot.lane.b32.xlu0 %v1699, 28
      %v1779 = vpop.permute.xlu0 %1778
      %1780 = vrot.lane.b32.xlu0 %v1700, 28
      %v1781 = vpop.permute.xlu0 %1780
      %1782 = vrot.lane.b32.xlu0 %v1701, 28
      %v1783 = vpop.permute.xlu0 %1782
      %1784 = vrot.lane.b32.xlu0 %v1702, 28
      %v1785 = vpop.permute.xlu0 %1784
      %1786 = vrot.lane.b32.xlu0 %v1703, 28
      %v1787 = vpop.permute.xlu0 %1786
      %1788 = vrot.lane.b32.xlu0 %v1704, 28
      %v1789 = vpop.permute.xlu0 %1788
      %1790 = vrot.lane.b32.xlu0 %v1705, 28
      %v1791 = vpop.permute.xlu0 %1790
      %1792 = vrot.lane.b32.xlu0 %v1706, 28
      %v1793 = vpop.permute.xlu0 %1792
      %1794 = vrot.lane.b32.xlu0 %v1707, 28
      %v1795 = vpop.permute.xlu0 %1794
      %1796 = vrot.lane.b32.xlu0 %v1708, 28
      %v1797 = vpop.permute.xlu0 %1796
      %1798 = vrot.lane.b32.xlu0 %v1709, 28
      %v1799 = vpop.permute.xlu0 %1798
      %1800 = vrot.lane.b32.xlu0 %v1710, 28
      %v1801 = vpop.permute.xlu0 %1800
      %1802 = vrot.lane.b32.xlu0 %v1711, 28
      %v1803 = vpop.permute.xlu0 %1802
      %1804 = vrot.lane.b32.xlu0 %v1712, 28
      %v1805 = vpop.permute.xlu0 %1804
      %1806 = vrot.lane.b32.xlu0 %v1713, 28
      %v1807 = vpop.permute.xlu0 %1806
      %1808 = vrot.lane.b32.xlu0 %v1714, 28
      %v1809 = vpop.permute.xlu0 %1808
      %1810 = vrot.lane.b32.xlu0 %v1715, 28
      %v1811 = vpop.permute.xlu0 %1810
      %vm1844 = vcmask 261344
      %1845 = vst.msk [vmem:[#allocation3] sm:$0xff] %vm1844, %v1749
      %1846 = vst.msk [vmem:[#allocation3 + $0x8] sm:$0xff] %vm1844, %v1751
      %1847 = vst.msk [vmem:[#allocation3 + $0x10] sm:$0xff] %vm1844, %v1753
      %1848 = vst.msk [vmem:[#allocation3 + $0x18] sm:$0xff] %vm1844, %v1755
      %1849 = vst.msk [vmem:[#allocation3 + $0x20] sm:$0xff] %vm1844, %v1757
      %1850 = vst.msk [vmem:[#allocation3 + $0x28] sm:$0xff] %vm1844, %v1759
      %1851 = vst.msk [vmem:[#allocation3 + $0x30] sm:$0xff] %vm1844, %v1761
      %1852 = vst.msk [vmem:[#allocation3 + $0x38] sm:$0xff] %vm1844, %v1763
      %1853 = vst.msk [vmem:[#allocation3 + $0x40] sm:$0xff] %vm1844, %v1765
      %1854 = vst.msk [vmem:[#allocation3 + $0x48] sm:$0xff] %vm1844, %v1767
      %1855 = vst.msk [vmem:[#allocation3 + $0x50] sm:$0xff] %vm1844, %v1769
      %1856 = vst.msk [vmem:[#allocation3 + $0x58] sm:$0xff] %vm1844, %v1771
      %1857 = vst.msk [vmem:[#allocation3 + $0x60] sm:$0xff] %vm1844, %v1773
      %1858 = vst.msk [vmem:[#allocation3 + $0x68] sm:$0xff] %vm1844, %v1775
      %1859 = vst.msk [vmem:[#allocation3 + $0x70] sm:$0xff] %vm1844, %v1777
      %1860 = vst.msk [vmem:[#allocation3 + $0x78] sm:$0xff] %vm1844, %v1779
      %1861 = vst.msk [vmem:[#allocation3 + $0x80] sm:$0xff] %vm1844, %v1781
      %1862 = vst.msk [vmem:[#allocation3 + $0x88] sm:$0xff] %vm1844, %v1783
      %1863 = vst.msk [vmem:[#allocation3 + $0x90] sm:$0xff] %vm1844, %v1785
      %1864 = vst.msk [vmem:[#allocation3 + $0x98] sm:$0xff] %vm1844, %v1787
      %1865 = vst.msk [vmem:[#allocation3 + $0xa0] sm:$0xff] %vm1844, %v1789
      %1866 = vst.msk [vmem:[#allocation3 + $0xa8] sm:$0xff] %vm1844, %v1791
      %1867 = vst.msk [vmem:[#allocation3 + $0xb0] sm:$0xff] %vm1844, %v1793
      %1868 = vst.msk [vmem:[#allocation3 + $0xb8] sm:$0xff] %vm1844, %v1795
      %1869 = vst.msk [vmem:[#allocation3 + $0xc0] sm:$0xff] %vm1844, %v1797
      %1870 = vst.msk [vmem:[#allocation3 + $0xc8] sm:$0xff] %vm1844, %v1799
      %1871 = vst.msk [vmem:[#allocation3 + $0xd0] sm:$0xff] %vm1844, %v1801
      %1872 = vst.msk [vmem:[#allocation3 + $0xd8] sm:$0xff] %vm1844, %v1803
      %1873 = vst.msk [vmem:[#allocation3 + $0xe0] sm:$0xff] %vm1844, %v1805
      %1874 = vst.msk [vmem:[#allocation3 + $0xe8] sm:$0xff] %vm1844, %v1807
      %1875 = vst.msk [vmem:[#allocation3 + $0xf0] sm:$0xff] %vm1844, %v1809
      %1876 = vst.msk [vmem:[#allocation3 + $0xf8] sm:$0xff] %vm1844, %v1811
      %v1877 = vld [vmem:[%s1490 + $0x2] sm:$0xff]
      %v1878 = vld [vmem:[%s1490 + $0xa] sm:$0xff]
      %v1879 = vld [vmem:[%s1490 + $0x1a] sm:$0xff]
      %v1880 = vld [vmem:[%s1490 + $0x22] sm:$0xff]
      %v1881 = vld [vmem:[%s1490 + $0x32] sm:$0xff]
      %v1882 = vld [vmem:[%s1490 + $0x3a] sm:$0xff]
      %v1883 = vld [vmem:[%s1490 + $0x4a] sm:$0xff]
      %v1884 = vld [vmem:[%s1490 + $0x52] sm:$0xff]
      %v1885 = vld [vmem:[%s1490 + $0x62] sm:$0xff]
      %v1886 = vld [vmem:[%s1490 + $0x6a] sm:$0xff]
      %v1887 = vld [vmem:[%s1490 + $0x7a] sm:$0xff]
      %v1888 = vld [vmem:[%s1490 + $0x82] sm:$0xff]
      %v1889 = vld [vmem:[%s1490 + $0x92] sm:$0xff]
      %v1890 = vld [vmem:[%s1490 + $0x9a] sm:$0xff]
      %v1891 = vld [vmem:[%s1490 + $0xaa] sm:$0xff]
      %v1892 = vld [vmem:[%s1490 + $0xb2] sm:$0xff]
      %v1893 = vld [vmem:[%s1490 + $0xc2] sm:$0xff]
      %v1894 = vld [vmem:[%s1490 + $0xca] sm:$0xff]
      %v1895 = vld [vmem:[%s1490 + $0xda] sm:$0xff]
      %v1896 = vld [vmem:[%s1490 + $0xe2] sm:$0xff]
      %v1897 = vld [vmem:[%s1490 + $0xf2] sm:$0xff]
      %v1898 = vld [vmem:[%s1490 + $0xfa] sm:$0xff]
      %v1899 = vld [vmem:[%s1490 + $0x10a] sm:$0xff]
      %v1900 = vld [vmem:[%s1490 + $0x112] sm:$0xff]
      %v1901 = vld [vmem:[%s1490 + $0x122] sm:$0xff]
      %v1902 = vld [vmem:[%s1490 + $0x12a] sm:$0xff]
      %v1903 = vld [vmem:[%s1490 + $0x13a] sm:$0xff]
      %v1904 = vld [vmem:[%s1490 + $0x142] sm:$0xff]
      %v1905 = vld [vmem:[%s1490 + $0x152] sm:$0xff]
      %v1906 = vld [vmem:[%s1490 + $0x15a] sm:$0xff]
      %v1907 = vld [vmem:[%s1490 + $0x16a] sm:$0xff]
      %v1908 = vld [vmem:[%s1490 + $0x172] sm:$0xff]
      %1941 = vrot.lane.b32.xlu0 %v1877, 32
      %v1942 = vpop.permute.xlu0 %1941
      %1943 = vrot.lane.b32.xlu0 %v1878, 32
      %v1944 = vpop.permute.xlu0 %1943
      %1945 = vrot.lane.b32.xlu0 %v1879, 32
      %v1946 = vpop.permute.xlu0 %1945
      %1947 = vrot.lane.b32.xlu0 %v1880, 32
      %v1948 = vpop.permute.xlu0 %1947
      %1949 = vrot.lane.b32.xlu0 %v1881, 32
      %v1950 = vpop.permute.xlu0 %1949
      %1951 = vrot.lane.b32.xlu0 %v1882, 32
      %v1952 = vpop.permute.xlu0 %1951
      %1953 = vrot.lane.b32.xlu0 %v1883, 32
      %v1954 = vpop.permute.xlu0 %1953
      %1955 = vrot.lane.b32.xlu0 %v1884, 32
      %v1956 = vpop.permute.xlu0 %1955
      %1957 = vrot.lane.b32.xlu0 %v1885, 32
      %v1958 = vpop.permute.xlu0 %1957
      %1959 = vrot.lane.b32.xlu0 %v1886, 32
      %v1960 = vpop.permute.xlu0 %1959
      %1961 = vrot.lane.b32.xlu0 %v1887, 32
      %v1962 = vpop.permute.xlu0 %1961
      %1963 = vrot.lane.b32.xlu0 %v1888, 32
      %v1964 = vpop.permute.xlu0 %1963
      %1965 = vrot.lane.b32.xlu0 %v1889, 32
      %v1966 = vpop.permute.xlu0 %1965
      %1967 = vrot.lane.b32.xlu0 %v1890, 32
      %v1968 = vpop.permute.xlu0 %1967
      %1969 = vrot.lane.b32.xlu0 %v1891, 32
      %v1970 = vpop.permute.xlu0 %1969
      %1971 = vrot.lane.b32.xlu0 %v1892, 32
      %v1972 = vpop.permute.xlu0 %1971
      %1973 = vrot.lane.b32.xlu0 %v1893, 32
      %v1974 = vpop.permute.xlu0 %1973
      %1975 = vrot.lane.b32.xlu0 %v1894, 32
      %v1976 = vpop.permute.xlu0 %1975
      %1977 = vrot.lane.b32.xlu0 %v1895, 32
      %v1978 = vpop.permute.xlu0 %1977
      %1979 = vrot.lane.b32.xlu0 %v1896, 32
      %v1980 = vpop.permute.xlu0 %1979
      %1981 = vrot.lane.b32.xlu0 %v1897, 32
      %v1982 = vpop.permute.xlu0 %1981
      %1983 = vrot.lane.b32.xlu0 %v1898, 32
      %v1984 = vpop.permute.xlu0 %1983
      %1985 = vrot.lane.b32.xlu0 %v1899, 32
      %v1986 = vpop.permute.xlu0 %1985
      %1987 = vrot.lane.b32.xlu0 %v1900, 32
      %v1988 = vpop.permute.xlu0 %1987
      %1989 = vrot.lane.b32.xlu0 %v1901, 32
      %v1990 = vpop.permute.xlu0 %1989
      %1991 = vrot.lane.b32.xlu0 %v1902, 32
      %v1992 = vpop.permute.xlu0 %1991
      %1993 = vrot.lane.b32.xlu0 %v1903, 32
      %v1994 = vpop.permute.xlu0 %1993
      %1995 = vrot.lane.b32.xlu0 %v1904, 32
      %v1996 = vpop.permute.xlu0 %1995
      %1997 = vrot.lane.b32.xlu0 %v1905, 32
      %v1998 = vpop.permute.xlu0 %1997
      %1999 = vrot.lane.b32.xlu0 %v1906, 32
      %v2000 = vpop.permute.xlu0 %1999
      %2001 = vrot.lane.b32.xlu0 %v1907, 32
      %v2002 = vpop.permute.xlu0 %2001
      %2003 = vrot.lane.b32.xlu0 %v1908, 32
      %v2004 = vpop.permute.xlu0 %2003
      %vm2037 = vcmask 294144
      %2038 = vst.msk [vmem:[#allocation3] sm:$0xff] %vm2037, %v1942
      %2039 = vst.msk [vmem:[#allocation3 + $0x8] sm:$0xff] %vm2037, %v1944
      %2040 = vst.msk [vmem:[#allocation3 + $0x10] sm:$0xff] %vm2037, %v1946
      %2041 = vst.msk [vmem:[#allocation3 + $0x18] sm:$0xff] %vm2037, %v1948
      %2042 = vst.msk [vmem:[#allocation3 + $0x20] sm:$0xff] %vm2037, %v1950
      %2043 = vst.msk [vmem:[#allocation3 + $0x28] sm:$0xff] %vm2037, %v1952
      %2044 = vst.msk [vmem:[#allocation3 + $0x30] sm:$0xff] %vm2037, %v1954
      %2045 = vst.msk [vmem:[#allocation3 + $0x38] sm:$0xff] %vm2037, %v1956
      %2046 = vst.msk [vmem:[#allocation3 + $0x40] sm:$0xff] %vm2037, %v1958
      %2047 = vst.msk [vmem:[#allocation3 + $0x48] sm:$0xff] %vm2037, %v1960
      %2048 = vst.msk [vmem:[#allocation3 + $0x50] sm:$0xff] %vm2037, %v1962
      %2049 = vst.msk [vmem:[#allocation3 + $0x58] sm:$0xff] %vm2037, %v1964
      %2050 = vst.msk [vmem:[#allocation3 + $0x60] sm:$0xff] %vm2037, %v1966
      %2051 = vst.msk [vmem:[#allocation3 + $0x68] sm:$0xff] %vm2037, %v1968
      %2052 = vst.msk [vmem:[#allocation3 + $0x70] sm:$0xff] %vm2037, %v1970
      %2053 = vst.msk [vmem:[#allocation3 + $0x78] sm:$0xff] %vm2037, %v1972
      %2054 = vst.msk [vmem:[#allocation3 + $0x80] sm:$0xff] %vm2037, %v1974
      %2055 = vst.msk [vmem:[#allocation3 + $0x88] sm:$0xff] %vm2037, %v1976
      %2056 = vst.msk [vmem:[#allocation3 + $0x90] sm:$0xff] %vm2037, %v1978
      %2057 = vst.msk [vmem:[#allocation3 + $0x98] sm:$0xff] %vm2037, %v1980
      %2058 = vst.msk [vmem:[#allocation3 + $0xa0] sm:$0xff] %vm2037, %v1982
      %2059 = vst.msk [vmem:[#allocation3 + $0xa8] sm:$0xff] %vm2037, %v1984
      %2060 = vst.msk [vmem:[#allocation3 + $0xb0] sm:$0xff] %vm2037, %v1986
      %2061 = vst.msk [vmem:[#allocation3 + $0xb8] sm:$0xff] %vm2037, %v1988
      %2062 = vst.msk [vmem:[#allocation3 + $0xc0] sm:$0xff] %vm2037, %v1990
      %2063 = vst.msk [vmem:[#allocation3 + $0xc8] sm:$0xff] %vm2037, %v1992
      %2064 = vst.msk [vmem:[#allocation3 + $0xd0] sm:$0xff] %vm2037, %v1994
      %2065 = vst.msk [vmem:[#allocation3 + $0xd8] sm:$0xff] %vm2037, %v1996
      %2066 = vst.msk [vmem:[#allocation3 + $0xe0] sm:$0xff] %vm2037, %v1998
      %2067 = vst.msk [vmem:[#allocation3 + $0xe8] sm:$0xff] %vm2037, %v2000
      %2068 = vst.msk [vmem:[#allocation3 + $0xf0] sm:$0xff] %vm2037, %v2002
      %2069 = vst.msk [vmem:[#allocation3 + $0xf8] sm:$0xff] %vm2037, %v2004
      %v2070 = vld [vmem:[#allocation3] sm:$0xff]
      %v2071 = vld [vmem:[#allocation3 + $0x8] sm:$0xff]
      %v2072 = vld [vmem:[#allocation3 + $0x10] sm:$0xff]
      %v2073 = vld [vmem:[#allocation3 + $0x18] sm:$0xff]
      %v2074 = vld [vmem:[#allocation3 + $0x20] sm:$0xff]
      %v2075 = vld [vmem:[#allocation3 + $0x28] sm:$0xff]
      %v2076 = vld [vmem:[#allocation3 + $0x30] sm:$0xff]
      %v2077 = vld [vmem:[#allocation3 + $0x38] sm:$0xff]
      %v2078 = vld [vmem:[#allocation3 + $0x40] sm:$0xff]
      %v2079 = vld [vmem:[#allocation3 + $0x48] sm:$0xff]
      %v2080 = vld [vmem:[#allocation3 + $0x50] sm:$0xff]
      %v2081 = vld [vmem:[#allocation3 + $0x58] sm:$0xff]
      %v2082 = vld [vmem:[#allocation3 + $0x60] sm:$0xff]
      %v2083 = vld [vmem:[#allocation3 + $0x68] sm:$0xff]
      %v2084 = vld [vmem:[#allocation3 + $0x70] sm:$0xff]
      %v2085 = vld [vmem:[#allocation3 + $0x78] sm:$0xff]
      %v2086 = vld [vmem:[#allocation3 + $0x80] sm:$0xff]
      %v2087 = vld [vmem:[#allocation3 + $0x88] sm:$0xff]
      %v2088 = vld [vmem:[#allocation3 + $0x90] sm:$0xff]
      %v2089 = vld [vmem:[#allocation3 + $0x98] sm:$0xff]
      %v2090 = vld [vmem:[#allocation3 + $0xa0] sm:$0xff]
      %v2091 = vld [vmem:[#allocation3 + $0xa8] sm:$0xff]
      %v2092 = vld [vmem:[#allocation3 + $0xb0] sm:$0xff]
      %v2093 = vld [vmem:[#allocation3 + $0xb8] sm:$0xff]
      %v2094 = vld [vmem:[#allocation3 + $0xc0] sm:$0xff]
      %v2095 = vld [vmem:[#allocation3 + $0xc8] sm:$0xff]
      %v2096 = vld [vmem:[#allocation3 + $0xd0] sm:$0xff]
      %v2097 = vld [vmem:[#allocation3 + $0xd8] sm:$0xff]
      %v2098 = vld [vmem:[#allocation3 + $0xe0] sm:$0xff]
      %v2099 = vld [vmem:[#allocation3 + $0xe8] sm:$0xff]
      %v2100 = vld [vmem:[#allocation3 + $0xf0] sm:$0xff]
      %v2101 = vld [vmem:[#allocation3 + $0xf8] sm:$0xff]
      %v2102 = vld [vmem:[%s3] sm:$0xff]
      %v2103 = vld [vmem:[%s3 + $0x8] sm:$0xff]
      %v2104 = vld [vmem:[%s3 + $0x10] sm:$0xff]
      %v2105 = vld [vmem:[%s3 + $0x18] sm:$0xff]
      %v2106 = vld [vmem:[%s3 + $0x20] sm:$0xf]
      %vm2107 = vcmask 293888
      %v2109 = vsel %vm2107, %v2070, 0
      %v2112 = vsel %vm2107, %v2071, 0
      %v2115 = vsel %vm2107, %v2072, 0
      %v2118 = vsel %vm2107, %v2073, 0
      %v2121 = vsel %vm2107, %v2074, 0
      %v2124 = vsel %vm2107, %v2075, 0
      %v2127 = vsel %vm2107, %v2076, 0
      %v2130 = vsel %vm2107, %v2077, 0
      %v2133 = vsel %vm2107, %v2078, 0
      %v2136 = vsel %vm2107, %v2079, 0
      %v2139 = vsel %vm2107, %v2080, 0
      %v2142 = vsel %vm2107, %v2081, 0
      %v2145 = vsel %vm2107, %v2082, 0
      %v2148 = vsel %vm2107, %v2083, 0
      %v2151 = vsel %vm2107, %v2084, 0
      %v2154 = vsel %vm2107, %v2085, 0
      %v2157 = vsel %vm2107, %v2086, 0
      %v2160 = vsel %vm2107, %v2087, 0
      %v2163 = vsel %vm2107, %v2088, 0
      %v2166 = vsel %vm2107, %v2089, 0
      %v2169 = vsel %vm2107, %v2090, 0
      %v2172 = vsel %vm2107, %v2091, 0
      %v2175 = vsel %vm2107, %v2092, 0
      %v2178 = vsel %vm2107, %v2093, 0
      %v2181 = vsel %vm2107, %v2094, 0
      %v2184 = vsel %vm2107, %v2095, 0
      %v2187 = vsel %vm2107, %v2096, 0
      %v2190 = vsel %vm2107, %v2097, 0
      %v2193 = vsel %vm2107, %v2098, 0
      %v2196 = vsel %vm2107, %v2099, 0
      %v2199 = vsel %vm2107, %v2100, 0
      %v2202 = vsel %vm2107, %v2101, 0
      %vm2204 = vcmask 1043456
      %v2206 = vsel %vm2204, %v2106, 0
      %2208 = vmatpush.msra.mxu0 0.0
      %2209 = vmatpush.msra.mxu0 0.0
      %2210 = vmatpush.msra.mxu0 0.0
      %2211 = vmatpush.msra.mxu0 0.0
      %2212 = vmatpush.msra.mxu0 0.0
      %2213 = vmatpush.msra.mxu0 0.0
      %2214 = vmatpush.msra.mxu0 0.0
      %2215 = vmatpush.msra.mxu0 0.0
      %2216 = vmatpush.msra.mxu0 0.0
      %2217 = vmatpush.msra.mxu0 0.0
      %2218 = vmatpush.msra.mxu0 0.0
      %2219 = vmatpush.msra.mxu0 %v2206
      %2220 = vmatpush.msra.mxu0 %v2105
      %2221 = vmatpush.msra.mxu0 %v2104
      %2222 = vmatpush.msra.mxu0 %v2103
      %2223 = vmatpush.msra.mxu0 %v2102
      %2224 = vmatmul.f32.gmra.mxu0 %v2109
      %v2225 = vpop.f32.mrf.mxu0
      %v2226 = vadd.f32 0.0, %v2225
      %2227 = vmatmul.f32.gmra.mxu0 %v2112
      %v2228 = vpop.f32.mrf.mxu0
      %v2229 = vadd.f32 0.0, %v2228
      %2230 = vmatmul.f32.gmra.mxu0 %v2115
      %v2231 = vpop.f32.mrf.mxu0
      %v2232 = vadd.f32 0.0, %v2231
      %2233 = vmatmul.f32.gmra.mxu0 %v2118
      %v2234 = vpop.f32.mrf.mxu0
      %v2235 = vadd.f32 0.0, %v2234
      %2236 = vmatmul.f32.gmra.mxu0 %v2121
      %v2237 = vpop.f32.mrf.mxu0
      %v2238 = vadd.f32 0.0, %v2237
      %2239 = vmatmul.f32.gmra.mxu0 %v2124
      %v2240 = vpop.f32.mrf.mxu0
      %v2241 = vadd.f32 0.0, %v2240
      %2242 = vmatmul.f32.gmra.mxu0 %v2127
      %v2243 = vpop.f32.mrf.mxu0
      %v2244 = vadd.f32 0.0, %v2243
      %2245 = vmatmul.f32.gmra.mxu0 %v2130
      %v2246 = vpop.f32.mrf.mxu0
      %v2247 = vadd.f32 0.0, %v2246
      %2248 = vmatmul.f32.gmra.mxu0 %v2133
      %v2249 = vpop.f32.mrf.mxu0
      %v2250 = vadd.f32 0.0, %v2249
      %2251 = vmatmul.f32.gmra.mxu0 %v2136
      %v2252 = vpop.f32.mrf.mxu0
      %v2253 = vadd.f32 0.0, %v2252
      %2254 = vmatmul.f32.gmra.mxu0 %v2139
      %v2255 = vpop.f32.mrf.mxu0
      %v2256 = vadd.f32 0.0, %v2255
      %2257 = vmatmul.f32.gmra.mxu0 %v2142
      %v2258 = vpop.f32.mrf.mxu0
      %v2259 = vadd.f32 0.0, %v2258
      %2260 = vmatmul.f32.gmra.mxu0 %v2145
      %v2261 = vpop.f32.mrf.mxu0
      %v2262 = vadd.f32 0.0, %v2261
      %2263 = vmatmul.f32.gmra.mxu0 %v2148
      %v2264 = vpop.f32.mrf.mxu0
      %v2265 = vadd.f32 0.0, %v2264
      %2266 = vmatmul.f32.gmra.mxu0 %v2151
      %v2267 = vpop.f32.mrf.mxu0
      %v2268 = vadd.f32 0.0, %v2267
      %2269 = vmatmul.f32.gmra.mxu0 %v2154
      %v2270 = vpop.f32.mrf.mxu0
      %v2271 = vadd.f32 0.0, %v2270
      %2272 = vmatmul.f32.gmra.mxu0 %v2157
      %v2273 = vpop.f32.mrf.mxu0
      %v2274 = vadd.f32 0.0, %v2273
      %2275 = vmatmul.f32.gmra.mxu0 %v2160
      %v2276 = vpop.f32.mrf.mxu0
      %v2277 = vadd.f32 0.0, %v2276
      %2278 = vmatmul.f32.gmra.mxu0 %v2163
      %v2279 = vpop.f32.mrf.mxu0
      %v2280 = vadd.f32 0.0, %v2279
      %2281 = vmatmul.f32.gmra.mxu0 %v2166
      %v2282 = vpop.f32.mrf.mxu0
      %v2283 = vadd.f32 0.0, %v2282
      %2284 = vmatmul.f32.gmra.mxu0 %v2169
      %v2285 = vpop.f32.mrf.mxu0
      %v2286 = vadd.f32 0.0, %v2285
      %2287 = vmatmul.f32.gmra.mxu0 %v2172
      %v2288 = vpop.f32.mrf.mxu0
      %v2289 = vadd.f32 0.0, %v2288
      %2290 = vmatmul.f32.gmra.mxu0 %v2175
      %v2291 = vpop.f32.mrf.mxu0
      %v2292 = vadd.f32 0.0, %v2291
      %2293 = vmatmul.f32.gmra.mxu0 %v2178
      %v2294 = vpop.f32.mrf.mxu0
      %v2295 = vadd.f32 0.0, %v2294
      %2296 = vmatmul.f32.gmra.mxu0 %v2181
      %v2297 = vpop.f32.mrf.mxu0
      %v2298 = vadd.f32 0.0, %v2297
      %2299 = vmatmul.f32.gmra.mxu0 %v2184
      %v2300 = vpop.f32.mrf.mxu0
      %v2301 = vadd.f32 0.0, %v2300
      %2302 = vmatmul.f32.gmra.mxu0 %v2187
      %v2303 = vpop.f32.mrf.mxu0
      %v2304 = vadd.f32 0.0, %v2303
      %2305 = vmatmul.f32.gmra.mxu0 %v2190
      %v2306 = vpop.f32.mrf.mxu0
      %v2307 = vadd.f32 0.0, %v2306
      %2308 = vmatmul.f32.gmra.mxu0 %v2193
      %v2309 = vpop.f32.mrf.mxu0
      %v2310 = vadd.f32 0.0, %v2309
      %2311 = vmatmul.f32.gmra.mxu0 %v2196
      %v2312 = vpop.f32.mrf.mxu0
      %v2313 = vadd.f32 0.0, %v2312
      %2314 = vmatmul.f32.gmra.mxu0 %v2199
      %v2315 = vpop.f32.mrf.mxu0
      %v2316 = vadd.f32 0.0, %v2315
      %2317 = vmatmul.f32.gmra.mxu0 %v2202
      %v2318 = vpop.f32.mrf.mxu0
      %v2319 = vadd.f32 0.0, %v2318
      %2320 = vdwg.mxu0
      %2321 = vst.msk [vmem:[%s231] sm:$0xff] %vm372, %v2226
      %2322 = vst.msk [vmem:[%s231 + $0x8] sm:$0xff] %vm372, %v2229
      %2323 = vst.msk [vmem:[%s231 + $0x10] sm:$0xff] %vm372, %v2232
      %2324 = vst.msk [vmem:[%s231 + $0x18] sm:$0xff] %vm372, %v2235
      %2325 = vst.msk [vmem:[%s231 + $0x20] sm:$0xff] %vm372, %v2238
      %2326 = vst.msk [vmem:[%s231 + $0x28] sm:$0xff] %vm372, %v2241
      %2327 = vst.msk [vmem:[%s231 + $0x30] sm:$0xff] %vm372, %v2244
      %2328 = vst.msk [vmem:[%s231 + $0x38] sm:$0xff] %vm372, %v2247
      %2329 = vst.msk [vmem:[%s231 + $0x40] sm:$0xff] %vm372, %v2250
      %2330 = vst.msk [vmem:[%s231 + $0x48] sm:$0xff] %vm372, %v2253
      %2331 = vst.msk [vmem:[%s231 + $0x50] sm:$0xff] %vm372, %v2256
      %2332 = vst.msk [vmem:[%s231 + $0x58] sm:$0xff] %vm372, %v2259
      %2333 = vst.msk [vmem:[%s231 + $0x60] sm:$0xff] %vm372, %v2262
      %2334 = vst.msk [vmem:[%s231 + $0x68] sm:$0xff] %vm372, %v2265
      %2335 = vst.msk [vmem:[%s231 + $0x70] sm:$0xff] %vm372, %v2268
      %2336 = vst.msk [vmem:[%s231 + $0x78] sm:$0xff] %vm372, %v2271
      %2337 = vst.msk [vmem:[%s231 + $0x80] sm:$0xff] %vm372, %v2274
      %2338 = vst.msk [vmem:[%s231 + $0x88] sm:$0xff] %vm372, %v2277
      %2339 = vst.msk [vmem:[%s231 + $0x90] sm:$0xff] %vm372, %v2280
      %2340 = vst.msk [vmem:[%s231 + $0x98] sm:$0xff] %vm372, %v2283
      %2341 = vst.msk [vmem:[%s231 + $0xa0] sm:$0xff] %vm372, %v2286
      %2342 = vst.msk [vmem:[%s231 + $0xa8] sm:$0xff] %vm372, %v2289
      %2343 = vst.msk [vmem:[%s231 + $0xb0] sm:$0xff] %vm372, %v2292
      %2344 = vst.msk [vmem:[%s231 + $0xb8] sm:$0xff] %vm372, %v2295
      %2345 = vst.msk [vmem:[%s231 + $0xc0] sm:$0xff] %vm372, %v2298
      %2346 = vst.msk [vmem:[%s231 + $0xc8] sm:$0xff] %vm372, %v2301
      %2347 = vst.msk [vmem:[%s231 + $0xd0] sm:$0xff] %vm372, %v2304
      %2348 = vst.msk [vmem:[%s231 + $0xd8] sm:$0xff] %vm372, %v2307
      %2349 = vst.msk [vmem:[%s231 + $0xe0] sm:$0xff] %vm372, %v2310
      %2350 = vst.msk [vmem:[%s231 + $0xe8] sm:$0xff] %vm372, %v2313
      %2351 = vst.msk [vmem:[%s231 + $0xf0] sm:$0xff] %vm372, %v2316
      %2352 = vst.msk [vmem:[%s231 + $0xf8] sm:$0xff] %vm372, %v2319
      %v2353 = vsel %vm372, %v2226, 0.0
      %v2354 = vsel %vm372, %v2229, 0.0
      %v2355 = vadd.f32 %v2353, %v2354
      %v2356 = vsel %vm372, %v2232, 0.0
      %v2357 = vadd.f32 %v2355, %v2356
      %v2358 = vsel %vm372, %v2235, 0.0
      %v2359 = vadd.f32 %v2357, %v2358
      %v2360 = vsel %vm372, %v2238, 0.0
      %v2361 = vadd.f32 %v2359, %v2360
      %v2362 = vsel %vm372, %v2241, 0.0
      %v2363 = vadd.f32 %v2361, %v2362
      %v2364 = vsel %vm372, %v2244, 0.0
      %v2365 = vadd.f32 %v2363, %v2364
      %v2366 = vsel %vm372, %v2247, 0.0
      %v2367 = vadd.f32 %v2365, %v2366
      %v2368 = vsel %vm372, %v2250, 0.0
      %v2369 = vadd.f32 %v2367, %v2368
      %v2370 = vsel %vm372, %v2253, 0.0
      %v2371 = vadd.f32 %v2369, %v2370
      %v2372 = vsel %vm372, %v2256, 0.0
      %v2373 = vadd.f32 %v2371, %v2372
      %v2374 = vsel %vm372, %v2259, 0.0
      %v2375 = vadd.f32 %v2373, %v2374
      %v2376 = vsel %vm372, %v2262, 0.0
      %v2377 = vadd.f32 %v2375, %v2376
      %v2378 = vsel %vm372, %v2265, 0.0
      %v2379 = vadd.f32 %v2377, %v2378
      %v2380 = vsel %vm372, %v2268, 0.0
      %v2381 = vadd.f32 %v2379, %v2380
      %v2382 = vsel %vm372, %v2271, 0.0
      %v2383 = vadd.f32 %v2381, %v2382
      %v2384 = vsel %vm372, %v2274, 0.0
      %v2385 = vadd.f32 %v2383, %v2384
      %v2386 = vsel %vm372, %v2277, 0.0
      %v2387 = vadd.f32 %v2385, %v2386
      %v2388 = vsel %vm372, %v2280, 0.0
      %v2389 = vadd.f32 %v2387, %v2388
      %v2390 = vsel %vm372, %v2283, 0.0
      %v2391 = vadd.f32 %v2389, %v2390
      %v2392 = vsel %vm372, %v2286, 0.0
      %v2393 = vadd.f32 %v2391, %v2392
      %v2394 = vsel %vm372, %v2289, 0.0
      %v2395 = vadd.f32 %v2393, %v2394
      %v2396 = vsel %vm372, %v2292, 0.0
      %v2397 = vadd.f32 %v2395, %v2396
      %v2398 = vsel %vm372, %v2295, 0.0
      %v2399 = vadd.f32 %v2397, %v2398
      %v2400 = vsel %vm372, %v2298, 0.0
      %v2401 = vadd.f32 %v2399, %v2400
      %v2402 = vsel %vm372, %v2301, 0.0
      %v2403 = vadd.f32 %v2401, %v2402
      %v2404 = vsel %vm372, %v2304, 0.0
      %v2405 = vadd.f32 %v2403, %v2404
      %v2406 = vsel %vm372, %v2307, 0.0
      %v2407 = vadd.f32 %v2405, %v2406
      %v2408 = vsel %vm372, %v2310, 0.0
      %v2409 = vadd.f32 %v2407, %v2408
      %v2410 = vsel %vm372, %v2313, 0.0
      %v2411 = vadd.f32 %v2409, %v2410
      %v2412 = vsel %vm372, %v2316, 0.0
      %v2413 = vadd.f32 %v2411, %v2412
      %v2414 = vsel %vm372, %v2319, 0.0
      %v2415 = vadd.f32 %v2413, %v2414
      %v2416 = vrot.slane %v2415, 4
      %v2417 = vadd.f32 %v2415, %v2416
      %v2418 = vrot.slane %v2417, 2
      %v2419 = vadd.f32 %v2417, %v2418
      %v2420 = vrot.slane %v2419, 1
      %v2421 = vadd.f32 %v2419, %v2420
      %v2422 = vmul.f32 %v2226, %v2226
      %v2423 = vmul.f32 %v2229, %v2229
      %v2424 = vmul.f32 %v2232, %v2232
      %v2425 = vmul.f32 %v2235, %v2235
      %v2426 = vmul.f32 %v2238, %v2238
      %v2427 = vmul.f32 %v2241, %v2241
      %v2428 = vmul.f32 %v2244, %v2244
      %v2429 = vmul.f32 %v2247, %v2247
      %v2430 = vmul.f32 %v2250, %v2250
      %v2431 = vmul.f32 %v2253, %v2253
      %v2432 = vmul.f32 %v2256, %v2256
      %v2433 = vmul.f32 %v2259, %v2259
      %v2434 = vmul.f32 %v2262, %v2262
      %v2435 = vmul.f32 %v2265, %v2265
      %v2436 = vmul.f32 %v2268, %v2268
      %v2437 = vmul.f32 %v2271, %v2271
      %v2438 = vmul.f32 %v2274, %v2274
      %v2439 = vmul.f32 %v2277, %v2277
      %v2440 = vmul.f32 %v2280, %v2280
      %v2441 = vmul.f32 %v2283, %v2283
      %v2442 = vmul.f32 %v2286, %v2286
      %v2443 = vmul.f32 %v2289, %v2289
      %v2444 = vmul.f32 %v2292, %v2292
      %v2445 = vmul.f32 %v2295, %v2295
      %v2446 = vmul.f32 %v2298, %v2298
      %v2447 = vmul.f32 %v2301, %v2301
      %v2448 = vmul.f32 %v2304, %v2304
      %v2449 = vmul.f32 %v2307, %v2307
      %v2450 = vmul.f32 %v2310, %v2310
      %v2451 = vmul.f32 %v2313, %v2313
      %v2452 = vmul.f32 %v2316, %v2316
      %v2453 = vmul.f32 %v2319, %v2319
      %v2454 = vsel %vm372, %v2422, 0.0
      %v2455 = vsel %vm372, %v2423, 0.0
      %v2456 = vadd.f32 %v2454, %v2455
      %v2457 = vsel %vm372, %v2424, 0.0
      %v2458 = vadd.f32 %v2456, %v2457
      %v2459 = vsel %vm372, %v2425, 0.0
      %v2460 = vadd.f32 %v2458, %v2459
      %v2461 = vsel %vm372, %v2426, 0.0
      %v2462 = vadd.f32 %v2460, %v2461
      %v2463 = vsel %vm372, %v2427, 0.0
      %v2464 = vadd.f32 %v2462, %v2463
      %v2465 = vsel %vm372, %v2428, 0.0
      %v2466 = vadd.f32 %v2464, %v2465
      %v2467 = vsel %vm372, %v2429, 0.0
      %v2468 = vadd.f32 %v2466, %v2467
      %v2469 = vsel %vm372, %v2430, 0.0
      %v2470 = vadd.f32 %v2468, %v2469
      %v2471 = vsel %vm372, %v2431, 0.0
      %v2472 = vadd.f32 %v2470, %v2471
      %v2473 = vsel %vm372, %v2432, 0.0
      %v2474 = vadd.f32 %v2472, %v2473
      %v2475 = vsel %vm372, %v2433, 0.0
      %v2476 = vadd.f32 %v2474, %v2475
      %v2477 = vsel %vm372, %v2434, 0.0
      %v2478 = vadd.f32 %v2476, %v2477
      %v2479 = vsel %vm372, %v2435, 0.0
      %v2480 = vadd.f32 %v2478, %v2479
      %v2481 = vsel %vm372, %v2436, 0.0
      %v2482 = vadd.f32 %v2480, %v2481
      %v2483 = vsel %vm372, %v2437, 0.0
      %v2484 = vadd.f32 %v2482, %v2483
      %v2485 = vsel %vm372, %v2438, 0.0
      %v2486 = vadd.f32 %v2484, %v2485
      %v2487 = vsel %vm372, %v2439, 0.0
      %v2488 = vadd.f32 %v2486, %v2487
      %v2489 = vsel %vm372, %v2440, 0.0
      %v2490 = vadd.f32 %v2488, %v2489
      %v2491 = vsel %vm372, %v2441, 0.0
      %v2492 = vadd.f32 %v2490, %v2491
      %v2493 = vsel %vm372, %v2442, 0.0
      %v2494 = vadd.f32 %v2492, %v2493
      %v2495 = vsel %vm372, %v2443, 0.0
      %v2496 = vadd.f32 %v2494, %v2495
      %v2497 = vsel %vm372, %v2444, 0.0
      %v2498 = vadd.f32 %v2496, %v2497
      %v2499 = vsel %vm372, %v2445, 0.0
      %v2500 = vadd.f32 %v2498, %v2499
      %v2501 = vsel %vm372, %v2446, 0.0
      %v2502 = vadd.f32 %v2500, %v2501
      %v2503 = vsel %vm372, %v2447, 0.0
      %v2504 = vadd.f32 %v2502, %v2503
      %v2505 = vsel %vm372, %v2448, 0.0
      %v2506 = vadd.f32 %v2504, %v2505
      %v2507 = vsel %vm372, %v2449, 0.0
      %v2508 = vadd.f32 %v2506, %v2507
      %v2509 = vsel %vm372, %v2450, 0.0
      %v2510 = vadd.f32 %v2508, %v2509
      %v2511 = vsel %vm372, %v2451, 0.0
      %v2512 = vadd.f32 %v2510, %v2511
      %v2513 = vsel %vm372, %v2452, 0.0
      %v2514 = vadd.f32 %v2512, %v2513
      %v2515 = vsel %vm372, %v2453, 0.0
      %v2516 = vadd.f32 %v2514, %v2515
      %v2517 = vrot.slane %v2516, 4
      %v2518 = vadd.f32 %v2516, %v2517
      %v2519 = vrot.slane %v2518, 2
      %v2520 = vadd.f32 %v2518, %v2519
      %v2521 = vrot.slane %v2520, 1
      %v2522 = vadd.f32 %v2520, %v2521
      %vm2523 = vcmask 1040384
      %v2524 = vsel %vm2523, %v2421, %v2522
      %2525 = vst.msk [vmem:[%s235] sm:$0x3] %vm375, %v2524
      %p2526 = scmp.lt.s32.totalorder %s17, 1
      %s2527 = scalar_select %p2526, %s17, 1
      %s2528 = smul.addr %s2527, 32
      %s2529 = smul.addr %s2528, 8
      %s2530 = scalar_lea.vmem %s4, %s2529
      %p2531 = scmp.lt.s32.totalorder %s17, 1
      %s2532 = scalar_select %p2531, %s17, 1
      %s2533 = smul.addr %s2532, 2
      %s2534 = scalar_lea.vmem %s5, %s2533
      // Predicated region
      $region37: #{conv_block_forward.4} parent=35 // pred_check
        %p2535 = pneg %p124
      $region38: #{conv_block_forward.4} parent=35 // pred_check_branch
        %2537 = sbr.rel (%p2535) target = $region40
      $region39: #{conv_block_forward.4} parent=35 // pred_region
        _
      $region40: #{conv_block_forward.4} parent=35 // pred_fallthru
        _
      // Predicated region
      $region41: #{conv_block_forward.4} parent=35 // pred_check
        %p2538 = pneg %p150
      $region42: #{conv_block_forward.4} parent=35 // pred_check_branch
        %2540 = sbr.rel (%p2538) target = $region44
      $region43: #{conv_block_forward.4} parent=35 // pred_region
        _
      $region44: #{conv_block_forward.4} parent=35 // pred_fallthru
        _
    $region36: #{conv_block_forward.4} parent=5 // pred_fallthru
      _
    %p2541 = scmp.le.s32.totalorder 2, %s12
    // Predicated region
    $region45: #{conv_block_forward.4} parent=5 // pred_check
      %p2542 = pneg %p2541
    $region46: #{conv_block_forward.4} parent=5 // pred_check_branch
      %2544 = sbr.rel (%p2542) target = $region48
    $region47: #{conv_block_forward.4} parent=5 // pred_region
      %s2545 = ssub.s32 %s12, 2
      // Predicated region
      $region49: #{conv_block_forward.4} parent=47 // pred_check
        %p2546 = pneg %p130
      $region50: #{conv_block_forward.4} parent=47 // pred_check_branch
        %2548 = sbr.rel (%p2546) target = $region52
      $region51: #{conv_block_forward.4} parent=47 // pred_region
        %p2549 = scmp.lt.s32.totalorder %s18, 1
        %s2550 = scalar_select %p2549, %s18, 1
        %s2551 = smul.addr %s2550, 32
        %s2552 = smul.addr %s2551, 8
        %s2553 = scalar_lea.vmem %s4, %s2552
      $region52: #{conv_block_forward.4} parent=47 // pred_fallthru
        _
      // Predicated region
      $region53: #{conv_block_forward.4} parent=47 // pred_check
        %p2554 = pneg %p156
      $region54: #{conv_block_forward.4} parent=47 // pred_check_branch
        %2556 = sbr.rel (%p2554) target = $region56
      $region55: #{conv_block_forward.4} parent=47 // pred_region
        %p2557 = scmp.lt.s32.totalorder %s18, 1
        %s2558 = scalar_select %p2557, %s18, 1
        %s2559 = smul.addr %s2558, 2
        %s2560 = scalar_lea.vmem %s5, %s2559
      $region56: #{conv_block_forward.4} parent=47 // pred_fallthru
        _
    $region48: #{conv_block_forward.4} parent=5 // pred_fallthru
      _
  $region6: #{conv_block_forward.4} parent=0 // loop_footer
    %s16 = sadd.s32 1, %s12
  $region7: #{conv_block_forward.4} parent=0 // loop_footer_branch
    %11 = sbr.rel target = $region3
  $region8: #{conv_block_forward.4} parent=0 // loop_exit
    _

</llo_original>
